<compile_context>
chip_gen: v6e
topology: v6e:2x2x1
jax: 0.10.0
libtpu: 0.0.40
codegen_flags: <defaults>
</compile_context>

<pallas_src>
import functools

import jax
import jax.numpy as jnp
from jax.experimental import pallas as pl
from jax.experimental.pallas import tpu as pltpu  # noqa: F401  (TPU backend)

EPS = 1e-3


def _round_up(v, m):
    return (v + m - 1) // m * m


def conv_bn_kernel(x_ref, w_ref, gb_ref, o_ref, *, m_true):
    # NCHW-native: x is (Cin, Mp) with M = N*H*W along lanes; w is (Cout, Cin).
    # 1x1 conv == one MXU matmul; bf16 cast happens in-kernel (input is f32).
    x = x_ref[...].astype(jnp.bfloat16)                         # (Cin, Mp)
    w = w_ref[...]                                              # (Cout, Cin) bf16
    y = jnp.dot(w, x, preferred_element_type=jnp.float32)       # (Cout, Mp) f32

    inv_m = jnp.float32(1.0 / m_true)

    # Per-channel batch stats: lane-axis reductions (XLU slot). Padded lanes are
    # zero so they contribute 0 to both sums; divide by the *true* M.
    sum_y = jnp.sum(y, axis=-1, keepdims=True)                  # (Cout, 1)
    sum_y2 = jnp.sum(y * y, axis=-1, keepdims=True)             # (Cout, 1)

    mean = sum_y * inv_m
    # Biased variance (PyTorch training-mode normalization); guard tiny negatives.
    var = jnp.maximum(sum_y2 * inv_m - mean * mean, 0.0)
    inv_std = jax.lax.rsqrt(var + EPS)

    # Fold BN affine into one per-channel scale/shift -> single fused epilogue.
    gb = gb_ref[...]                                            # (Cout, 2): [gamma, beta]
    scale = gb[:, 0:1] * inv_std                                # (Cout, 1)
    shift = gb[:, 1:2] - mean * scale                           # (Cout, 1)
    o_ref[...] = (y * scale + shift).astype(o_ref.dtype)


@jax.jit
def conv2d_1x1_batchnorm(x_nchw, conv_w, gamma, beta):
    """x_nchw: (N, Cin, H, W); conv_w: (Cout, Cin, 1, 1); gamma/beta: (Cout,)."""
    N, Cin, H, W = x_nchw.shape
    Cout = conv_w.shape[0]
    M = N * H * W
    Mp = _round_up(M, 128)  # lane-dense tiles -> unmasked loads/stores

    # (N, Cin, H, W) -> (Cin, M); for N == 1 this transpose is a free reshape.
    x2 = jnp.transpose(x_nchw, (1, 0, 2, 3)).reshape(Cin, M)
    x2 = jnp.pad(x2, ((0, 0), (0, Mp - M)))                     # zero lanes, stays f32

    # (Cout, Cin, 1, 1) -> (Cout, Cin): used directly as the matmul LHS.
    w_mat = conv_w.reshape(Cout, Cin).astype(jnp.bfloat16)
    gb = jnp.stack(
        [gamma.astype(jnp.float32), beta.astype(jnp.float32)], axis=1)  # (Cout, 2)

    kernel = functools.partial(conv_bn_kernel, m_true=float(M))
    cost = pl.CostEstimate(
        flops=2 * M * Cin * Cout,
        transcendentals=Cout,
        bytes_accessed=(Cin * Mp + Cout * Mp) * 4 + Cout * Cin * 2 + Cout * 2 * 4,
    )

    out_pad = pl.pallas_call(
        kernel,
        out_shape=jax.ShapeDtypeStruct((Cout, Mp), x_nchw.dtype),
        in_specs=[
            pl.BlockSpec((Cin, Mp), lambda: (0, 0)),
            pl.BlockSpec((Cout, Cin), lambda: (0, 0)),
            pl.BlockSpec((Cout, 2), lambda: (0, 0)),
        ],
        out_specs=pl.BlockSpec((Cout, Mp), lambda: (0, 0)),
        cost_estimate=cost,
    )(x2, w_mat, gb)

    # (Cout, M) -> NCHW; for N == 1 the transpose back is again free.
    out = out_pad[:, :M].reshape(Cout, N, H, W)
    return jnp.transpose(out, (1, 0, 2, 3))


if __name__ == "__main__":
    key = jax.random.PRNGKey(0)
    k_x, k_w = jax.random.split(key)

    # Shapes implied by the module: batch 1, Cin=128, Cout=768, spatial 14x14.
    N, Cin, H, W, Cout = 1, 128, 14, 14, 768

    x = jax.random.normal(k_x, (N, Cin, H, W), dtype=jnp.float32)
    # Deterministic conv weight (kaiming-like scale), no bias.
    conv_w = jax.random.normal(k_w, (Cout, Cin, 1, 1), dtype=jnp.float32) * (1.0 / jnp.sqrt(Cin))
    # BatchNorm2d affine params at their PyTorch init values.
    gamma = jnp.ones((Cout,), dtype=jnp.float32)
    beta = jnp.zeros((Cout,), dtype=jnp.float32)

    out = conv2d_1x1_batchnorm(x, conv_w, gamma, beta)
    out = jax.block_until_ready(out)

    # Pure-JAX f32 reference of the same module math (1x1 conv + training-mode BN).
    x_flat = jnp.transpose(x, (0, 2, 3, 1)).reshape(N * H * W, Cin)
    y_ref = x_flat @ jnp.transpose(conv_w.reshape(Cout, Cin))
    mu = jnp.mean(y_ref, axis=0, keepdims=True)
    va = jnp.mean((y_ref - mu) ** 2, axis=0, keepdims=True)
    ref = (y_ref - mu) / jnp.sqrt(va + EPS) * gamma + beta
    ref = jnp.transpose(ref.reshape(N, H, W, Cout), (0, 3, 1, 2))

    assert out.shape == (N, Cout, H, W)
    err = float(jnp.max(jnp.abs(out - ref)))
    # bf16 MXU inputs -> loosened tolerance (still far below BN's eps-scale noise).
    assert err < 5e-2, f"max abs err {err}"

    print("KERNEL_OK")
</pallas_src>

<mosaic_0001>
module attributes {stable_mosaic.version = 11 : i64} {
  func.func @conv_bn_kernel(%arg0: memref<128x256xf32, #tpu.memory_space<vmem>>, %arg1: memref<768x128xbf16, #tpu.memory_space<vmem>>, %arg2: memref<768x2xf32, #tpu.memory_space<vmem>>, %arg3: memref<768x256xf32, #tpu.memory_space<vmem>>) attributes {dimension_semantics = [], scalar_prefetch = 0 : i64, scratch_operands = 0 : i64, tpu.core_type = #tpu.core_type<tc>} {
    %c0 = arith.constant 0 : index
    %c0_0 = arith.constant 0 : index
    %0 = vector.load %arg0[%c0, %c0_0] : memref<128x256xf32, #tpu.memory_space<vmem>>, vector<128x256xf32>
    %1 = arith.truncf %0 : vector<128x256xf32> to vector<128x256xbf16>
    %c0_1 = arith.constant 0 : index
    %c0_2 = arith.constant 0 : index
    %2 = vector.load %arg1[%c0_1, %c0_2] : memref<768x128xbf16, #tpu.memory_space<vmem>>, vector<768x128xbf16>
    %cst = arith.constant dense<0.000000e+00> : vector<768x256xf32>
    %3 = tpu.matmul %2, %1, %cst {dimension_numbers = #tpu.dot_dimension_numbers<[1], [0], [0], [1], [0, 0, 1, 1], [], []>} : vector<768x128xbf16>, vector<128x256xbf16>, vector<768x256xf32> -> vector<768x256xf32>
    %cst_3 = arith.constant dense<0.000000e+00> : vector<768xf32>
    %4 = vector.multi_reduction <add>, %3, %cst_3 [1] : vector<768x256xf32> to vector<768xf32>
    %5 = vector.shape_cast %4 : vector<768xf32> to vector<768x1xf32>
    %6 = arith.mulf %3, %3 : vector<768x256xf32>
    %cst_4 = arith.constant dense<0.000000e+00> : vector<768xf32>
    %7 = vector.multi_reduction <add>, %6, %cst_4 [1] : vector<768x256xf32> to vector<768xf32>
    %8 = vector.shape_cast %7 : vector<768xf32> to vector<768x1xf32>
    %cst_5 = arith.constant 0.00510204071 : f32
    %9 = vector.broadcast %cst_5 : f32 to vector<768x1xf32>
    %10 = arith.mulf %5, %9 : vector<768x1xf32>
    %cst_6 = arith.constant 0.00510204071 : f32
    %11 = vector.broadcast %cst_6 : f32 to vector<768x1xf32>
    %12 = arith.mulf %8, %11 : vector<768x1xf32>
    %13 = arith.mulf %10, %10 : vector<768x1xf32>
    %14 = arith.subf %12, %13 : vector<768x1xf32>
    %cst_7 = arith.constant 0.000000e+00 : f32
    %15 = vector.broadcast %cst_7 : f32 to vector<768x1xf32>
    %16 = arith.maximumf %14, %15 : vector<768x1xf32>
    %cst_8 = arith.constant 1.000000e-03 : f32
    %17 = vector.broadcast %cst_8 : f32 to vector<768x1xf32>
    %18 = arith.addf %16, %17 : vector<768x1xf32>
    %19 = math.rsqrt %18 : vector<768x1xf32>
    %c0_9 = arith.constant 0 : index
    %c0_10 = arith.constant 0 : index
    %20 = vector.load %arg2[%c0_9, %c0_10] : memref<768x2xf32, #tpu.memory_space<vmem>>, vector<768x2xf32>
    %21 = vector.extract_strided_slice %20 {offsets = [0, 0], sizes = [768, 1], strides = [1, 1]} : vector<768x2xf32> to vector<768x1xf32>
    %22 = arith.mulf %21, %19 : vector<768x1xf32>
    %23 = vector.extract_strided_slice %20 {offsets = [0, 1], sizes = [768, 1], strides = [1, 1]} : vector<768x2xf32> to vector<768x1xf32>
    %24 = arith.mulf %10, %22 : vector<768x1xf32>
    %25 = arith.subf %23, %24 : vector<768x1xf32>
    %26 = vector.broadcast %22 : vector<768x1xf32> to vector<768x256xf32>
    %27 = arith.mulf %3, %26 : vector<768x256xf32>
    %28 = vector.broadcast %25 : vector<768x1xf32> to vector<768x256xf32>
    %29 = arith.addf %27, %28 : vector<768x256xf32>
    %c0_11 = arith.constant 0 : index
    %c0_12 = arith.constant 0 : index
    %30 = vector.load %arg3[%c0_11, %c0_12] : memref<768x256xf32, #tpu.memory_space<vmem>>, vector<768x256xf32>
    tpu.vector_store %arg3[%c0_11, %c0_12], %29 {strides = array<i32>} : memref<768x256xf32, #tpu.memory_space<vmem>>, vector<768x256xf32>,
    return
  }
}

</mosaic_0001>

<llo_original>
// kernel: conv2d_1x1_batchnorm.1
$region0: #{conv2d_1x1_batchnorm.1}
  #allocation0 [shape = 'u32[]', space=smem, size = 0x4, offset = 0x4, fixed_abs, tag = 'smem constant byte address 0x4 - core index']
  #allocation1 [shape = 'u32[144,128]{1,0:T(1,128)}', space=vmem, size = 0x12000, scoped, tag = 'internal scratch']
  %s0 = inlined_call_operand.vmem [shape: f32[128,256], index: 0, kind: input, shape index: {}]
  %s1 = inlined_call_operand.vmem [shape: bf16[768,128], index: 1, kind: input, shape index: {}]
  %s2 = inlined_call_operand.vmem [shape: f32[768,2], index: 2, kind: input, shape index: {}]
  %s3 = inlined_call_operand.vmem [shape: f32[768,256], index: 3, kind: output, shape index: {}]
  %s4 = sld [smem:[#allocation0]]
  $region22: #{conv2d_1x1_batchnorm.1} parent=0
    _
  %s6 = ssub.s32 1, %s4
  %s7 = scalar_select 0, %s6, %s4
  // Predicated region
  $region2: #{conv2d_1x1_batchnorm.1} parent=0 // pred_check
    _
  $region3: #{conv2d_1x1_batchnorm.1} parent=0 // pred_check_branch
    %9 = sbr.rel (0) target = $region5
  $region4: #{conv2d_1x1_batchnorm.1} parent=0 // pred_region
    _
  $region5: #{conv2d_1x1_batchnorm.1} parent=0 // pred_fallthru
    _
  // Predicated region
  $region6: #{conv2d_1x1_batchnorm.1} parent=0 // pred_check
    _
  $region7: #{conv2d_1x1_batchnorm.1} parent=0 // pred_check_branch
    %11 = sbr.rel (0) target = $region9
  $region8: #{conv2d_1x1_batchnorm.1} parent=0 // pred_region
    _
  $region9: #{conv2d_1x1_batchnorm.1} parent=0 // pred_fallthru
    _
  // Predicated region
  $region10: #{conv2d_1x1_batchnorm.1} parent=0 // pred_check
    _
  $region11: #{conv2d_1x1_batchnorm.1} parent=0 // pred_check_branch
    %13 = sbr.rel (0) target = $region13
  $region12: #{conv2d_1x1_batchnorm.1} parent=0 // pred_region
    _
  $region13: #{conv2d_1x1_batchnorm.1} parent=0 // pred_fallthru
    _
  %v15 = vld [vmem:[%s0] sm:$0xff]
  %v16 = vld [vmem:[%s0 + $0x8] sm:$0xff]
  %v17 = vld [vmem:[%s0 + $0x10] sm:$0xff]
  %v18 = vld [vmem:[%s0 + $0x18] sm:$0xff]
  %v19 = vld [vmem:[%s0 + $0x20] sm:$0xff]
  %v20 = vld [vmem:[%s0 + $0x28] sm:$0xff]
  %v21 = vld [vmem:[%s0 + $0x30] sm:$0xff]
  %v22 = vld [vmem:[%s0 + $0x38] sm:$0xff]
  %v23 = vld [vmem:[%s0 + $0x40] sm:$0xff]
  %v24 = vld [vmem:[%s0 + $0x48] sm:$0xff]
  %v25 = vld [vmem:[%s0 + $0x50] sm:$0xff]
  %v26 = vld [vmem:[%s0 + $0x58] sm:$0xff]
  %v27 = vld [vmem:[%s0 + $0x60] sm:$0xff]
  %v28 = vld [vmem:[%s0 + $0x68] sm:$0xff]
  %v29 = vld [vmem:[%s0 + $0x70] sm:$0xff]
  %v30 = vld [vmem:[%s0 + $0x78] sm:$0xff]
  %v31 = vld [vmem:[%s0 + $0x80] sm:$0xff]
  %v32 = vld [vmem:[%s0 + $0x88] sm:$0xff]
  %v33 = vld [vmem:[%s0 + $0x90] sm:$0xff]
  %v34 = vld [vmem:[%s0 + $0x98] sm:$0xff]
  %v35 = vld [vmem:[%s0 + $0xa0] sm:$0xff]
  %v36 = vld [vmem:[%s0 + $0xa8] sm:$0xff]
  %v37 = vld [vmem:[%s0 + $0xb0] sm:$0xff]
  %v38 = vld [vmem:[%s0 + $0xb8] sm:$0xff]
  %v39 = vld [vmem:[%s0 + $0xc0] sm:$0xff]
  %v40 = vld [vmem:[%s0 + $0xc8] sm:$0xff]
  %v41 = vld [vmem:[%s0 + $0xd0] sm:$0xff]
  %v42 = vld [vmem:[%s0 + $0xd8] sm:$0xff]
  %v43 = vld [vmem:[%s0 + $0xe0] sm:$0xff]
  %v44 = vld [vmem:[%s0 + $0xe8] sm:$0xff]
  %v45 = vld [vmem:[%s0 + $0xf0] sm:$0xff]
  %v46 = vld [vmem:[%s0 + $0xf8] sm:$0xff]
  %v47 = vpack.c.bf16 %v17, %v15
  %v48 = vpack.c.bf16 %v18, %v16
  %v49 = vpack.c.bf16 %v21, %v19
  %v50 = vpack.c.bf16 %v22, %v20
  %v51 = vpack.c.bf16 %v25, %v23
  %v52 = vpack.c.bf16 %v26, %v24
  %v53 = vpack.c.bf16 %v29, %v27
  %v54 = vpack.c.bf16 %v30, %v28
  %v55 = vpack.c.bf16 %v33, %v31
  %v56 = vpack.c.bf16 %v34, %v32
  %v57 = vpack.c.bf16 %v37, %v35
  %v58 = vpack.c.bf16 %v38, %v36
  %v59 = vpack.c.bf16 %v41, %v39
  %v60 = vpack.c.bf16 %v42, %v40
  %v61 = vpack.c.bf16 %v45, %v43
  %v62 = vpack.c.bf16 %v46, %v44
  %v63 = vld [vmem:[%s1] sm:$0xf]
  %v64 = vld [vmem:[%s1 + $0x4] sm:$0xf]
  %v65 = vld [vmem:[%s1 + $0x8] sm:$0xf]
  %v66 = vld [vmem:[%s1 + $0xc] sm:$0xf]
  %v67 = vld [vmem:[%s1 + $0x10] sm:$0xf]
  %v68 = vld [vmem:[%s1 + $0x14] sm:$0xf]
  %v69 = vld [vmem:[%s1 + $0x18] sm:$0xf]
  %v70 = vld [vmem:[%s1 + $0x1c] sm:$0xf]
  %v71 = vld [vmem:[%s1 + $0x20] sm:$0xf]
  %v72 = vld [vmem:[%s1 + $0x24] sm:$0xf]
  %v73 = vld [vmem:[%s1 + $0x28] sm:$0xf]
  %v74 = vld [vmem:[%s1 + $0x2c] sm:$0xf]
  %v75 = vld [vmem:[%s1 + $0x30] sm:$0xf]
  %v76 = vld [vmem:[%s1 + $0x34] sm:$0xf]
  %v77 = vld [vmem:[%s1 + $0x38] sm:$0xf]
  %v78 = vld [vmem:[%s1 + $0x3c] sm:$0xf]
  %v79 = vld [vmem:[%s1 + $0x40] sm:$0xf]
  %v80 = vld [vmem:[%s1 + $0x44] sm:$0xf]
  %v81 = vld [vmem:[%s1 + $0x48] sm:$0xf]
  %v82 = vld [vmem:[%s1 + $0x4c] sm:$0xf]
  %v83 = vld [vmem:[%s1 + $0x50] sm:$0xf]
  %v84 = vld [vmem:[%s1 + $0x54] sm:$0xf]
  %v85 = vld [vmem:[%s1 + $0x58] sm:$0xf]
  %v86 = vld [vmem:[%s1 + $0x5c] sm:$0xf]
  %v87 = vld [vmem:[%s1 + $0x60] sm:$0xf]
  %v88 = vld [vmem:[%s1 + $0x64] sm:$0xf]
  %v89 = vld [vmem:[%s1 + $0x68] sm:$0xf]
  %v90 = vld [vmem:[%s1 + $0x6c] sm:$0xf]
  %v91 = vld [vmem:[%s1 + $0x70] sm:$0xf]
  %v92 = vld [vmem:[%s1 + $0x74] sm:$0xf]
  %v93 = vld [vmem:[%s1 + $0x78] sm:$0xf]
  %v94 = vld [vmem:[%s1 + $0x7c] sm:$0xf]
  %v95 = vld [vmem:[%s1 + $0x80] sm:$0xf]
  %v96 = vld [vmem:[%s1 + $0x84] sm:$0xf]
  %v97 = vld [vmem:[%s1 + $0x88] sm:$0xf]
  %v98 = vld [vmem:[%s1 + $0x8c] sm:$0xf]
  %v99 = vld [vmem:[%s1 + $0x90] sm:$0xf]
  %v100 = vld [vmem:[%s1 + $0x94] sm:$0xf]
  %v101 = vld [vmem:[%s1 + $0x98] sm:$0xf]
  %v102 = vld [vmem:[%s1 + $0x9c] sm:$0xf]
  %v103 = vld [vmem:[%s1 + $0xa0] sm:$0xf]
  %v104 = vld [vmem:[%s1 + $0xa4] sm:$0xf]
  %v105 = vld [vmem:[%s1 + $0xa8] sm:$0xf]
  %v106 = vld [vmem:[%s1 + $0xac] sm:$0xf]
  %v107 = vld [vmem:[%s1 + $0xb0] sm:$0xf]
  %v108 = vld [vmem:[%s1 + $0xb4] sm:$0xf]
  %v109 = vld [vmem:[%s1 + $0xb8] sm:$0xf]
  %v110 = vld [vmem:[%s1 + $0xbc] sm:$0xf]
  %v111 = vld [vmem:[%s1 + $0xc0] sm:$0xf]
  %v112 = vld [vmem:[%s1 + $0xc4] sm:$0xf]
  %v113 = vld [vmem:[%s1 + $0xc8] sm:$0xf]
  %v114 = vld [vmem:[%s1 + $0xcc] sm:$0xf]
  %v115 = vld [vmem:[%s1 + $0xd0] sm:$0xf]
  %v116 = vld [vmem:[%s1 + $0xd4] sm:$0xf]
  %v117 = vld [vmem:[%s1 + $0xd8] sm:$0xf]
  %v118 = vld [vmem:[%s1 + $0xdc] sm:$0xf]
  %v119 = vld [vmem:[%s1 + $0xe0] sm:$0xf]
  %v120 = vld [vmem:[%s1 + $0xe4] sm:$0xf]
  %v121 = vld [vmem:[%s1 + $0xe8] sm:$0xf]
  %v122 = vld [vmem:[%s1 + $0xec] sm:$0xf]
  %v123 = vld [vmem:[%s1 + $0xf0] sm:$0xf]
  %v124 = vld [vmem:[%s1 + $0xf4] sm:$0xf]
  %v125 = vld [vmem:[%s1 + $0xf8] sm:$0xf]
  %v126 = vld [vmem:[%s1 + $0xfc] sm:$0xf]
  %v127 = vld [vmem:[%s1 + $0x100] sm:$0xf]
  %v128 = vld [vmem:[%s1 + $0x104] sm:$0xf]
  %v129 = vld [vmem:[%s1 + $0x108] sm:$0xf]
  %v130 = vld [vmem:[%s1 + $0x10c] sm:$0xf]
  %v131 = vld [vmem:[%s1 + $0x110] sm:$0xf]
  %v132 = vld [vmem:[%s1 + $0x114] sm:$0xf]
  %v133 = vld [vmem:[%s1 + $0x118] sm:$0xf]
  %v134 = vld [vmem:[%s1 + $0x11c] sm:$0xf]
  %v135 = vld [vmem:[%s1 + $0x120] sm:$0xf]
  %v136 = vld [vmem:[%s1 + $0x124] sm:$0xf]
  %v137 = vld [vmem:[%s1 + $0x128] sm:$0xf]
  %v138 = vld [vmem:[%s1 + $0x12c] sm:$0xf]
  %v139 = vld [vmem:[%s1 + $0x130] sm:$0xf]
  %v140 = vld [vmem:[%s1 + $0x134] sm:$0xf]
  %v141 = vld [vmem:[%s1 + $0x138] sm:$0xf]
  %v142 = vld [vmem:[%s1 + $0x13c] sm:$0xf]
  %v143 = vld [vmem:[%s1 + $0x140] sm:$0xf]
  %v144 = vld [vmem:[%s1 + $0x144] sm:$0xf]
  %v145 = vld [vmem:[%s1 + $0x148] sm:$0xf]
  %v146 = vld [vmem:[%s1 + $0x14c] sm:$0xf]
  %v147 = vld [vmem:[%s1 + $0x150] sm:$0xf]
  %v148 = vld [vmem:[%s1 + $0x154] sm:$0xf]
  %v149 = vld [vmem:[%s1 + $0x158] sm:$0xf]
  %v150 = vld [vmem:[%s1 + $0x15c] sm:$0xf]
  %v151 = vld [vmem:[%s1 + $0x160] sm:$0xf]
  %v152 = vld [vmem:[%s1 + $0x164] sm:$0xf]
  %v153 = vld [vmem:[%s1 + $0x168] sm:$0xf]
  %v154 = vld [vmem:[%s1 + $0x16c] sm:$0xf]
  %v155 = vld [vmem:[%s1 + $0x170] sm:$0xf]
  %v156 = vld [vmem:[%s1 + $0x174] sm:$0xf]
  %v157 = vld [vmem:[%s1 + $0x178] sm:$0xf]
  %v158 = vld [vmem:[%s1 + $0x17c] sm:$0xf]
  %v255 = vunpack.c.l.b16 %v63
  %v256 = vunpack.c.l.b16 %v64
  %v257 = vunpack.c.l.b16 %v65
  %v258 = vunpack.c.l.b16 %v66
  %v259 = vunpack.c.l.b16 %v67
  %v260 = vunpack.c.l.b16 %v68
  %v261 = vunpack.c.l.b16 %v69
  %v262 = vunpack.c.l.b16 %v70
  %v263 = vunpack.c.l.b16 %v71
  %v264 = vunpack.c.l.b16 %v72
  %v265 = vunpack.c.l.b16 %v73
  %v266 = vunpack.c.l.b16 %v74
  %v267 = vunpack.c.l.b16 %v75
  %v268 = vunpack.c.l.b16 %v76
  %v269 = vunpack.c.l.b16 %v77
  %v270 = vunpack.c.l.b16 %v78
  %v271 = vunpack.c.l.b16 %v79
  %v272 = vunpack.c.l.b16 %v80
  %v273 = vunpack.c.l.b16 %v81
  %v274 = vunpack.c.l.b16 %v82
  %v275 = vunpack.c.l.b16 %v83
  %v276 = vunpack.c.l.b16 %v84
  %v277 = vunpack.c.l.b16 %v85
  %v278 = vunpack.c.l.b16 %v86
  %v279 = vunpack.c.l.b16 %v87
  %v280 = vunpack.c.l.b16 %v88
  %v281 = vunpack.c.l.b16 %v89
  %v282 = vunpack.c.l.b16 %v90
  %v283 = vunpack.c.l.b16 %v91
  %v284 = vunpack.c.l.b16 %v92
  %v285 = vunpack.c.l.b16 %v93
  %v286 = vunpack.c.l.b16 %v94
  %v287 = vunpack.c.l.b16 %v95
  %v288 = vunpack.c.l.b16 %v96
  %v289 = vunpack.c.l.b16 %v97
  %v290 = vunpack.c.l.b16 %v98
  %v291 = vunpack.c.l.b16 %v99
  %v292 = vunpack.c.l.b16 %v100
  %v293 = vunpack.c.l.b16 %v101
  %v294 = vunpack.c.l.b16 %v102
  %v295 = vunpack.c.l.b16 %v103
  %v296 = vunpack.c.l.b16 %v104
  %v297 = vunpack.c.l.b16 %v105
  %v298 = vunpack.c.l.b16 %v106
  %v299 = vunpack.c.l.b16 %v107
  %v300 = vunpack.c.l.b16 %v108
  %v301 = vunpack.c.l.b16 %v109
  %v302 = vunpack.c.l.b16 %v110
  %v303 = vunpack.c.l.b16 %v111
  %v304 = vunpack.c.l.b16 %v112
  %v305 = vunpack.c.l.b16 %v113
  %v306 = vunpack.c.l.b16 %v114
  %v307 = vunpack.c.l.b16 %v115
  %v308 = vunpack.c.l.b16 %v116
  %v309 = vunpack.c.l.b16 %v117
  %v310 = vunpack.c.l.b16 %v118
  %v311 = vunpack.c.l.b16 %v119
  %v312 = vunpack.c.l.b16 %v120
  %v313 = vunpack.c.l.b16 %v121
  %v314 = vunpack.c.l.b16 %v122
  %v315 = vunpack.c.l.b16 %v123
  %v316 = vunpack.c.l.b16 %v124
  %v317 = vunpack.c.l.b16 %v125
  %v318 = vunpack.c.l.b16 %v126
  %v319 = vunpack.c.l.b16 %v127
  %v320 = vunpack.c.l.b16 %v128
  %v321 = vunpack.c.l.b16 %v129
  %v322 = vunpack.c.l.b16 %v130
  %v323 = vunpack.c.l.b16 %v131
  %v324 = vunpack.c.l.b16 %v132
  %v325 = vunpack.c.l.b16 %v133
  %v326 = vunpack.c.l.b16 %v134
  %v327 = vunpack.c.l.b16 %v135
  %v328 = vunpack.c.l.b16 %v136
  %v329 = vunpack.c.l.b16 %v137
  %v330 = vunpack.c.l.b16 %v138
  %v331 = vunpack.c.l.b16 %v139
  %v332 = vunpack.c.l.b16 %v140
  %v333 = vunpack.c.l.b16 %v141
  %v334 = vunpack.c.l.b16 %v142
  %v335 = vunpack.c.l.b16 %v143
  %v336 = vunpack.c.l.b16 %v144
  %v337 = vunpack.c.l.b16 %v145
  %v338 = vunpack.c.l.b16 %v146
  %v339 = vunpack.c.l.b16 %v147
  %v340 = vunpack.c.l.b16 %v148
  %v341 = vunpack.c.l.b16 %v149
  %v342 = vunpack.c.l.b16 %v150
  %v343 = vunpack.c.l.b16 %v151
  %v344 = vunpack.c.l.b16 %v152
  %v345 = vunpack.c.l.b16 %v153
  %v346 = vunpack.c.l.b16 %v154
  %v347 = vunpack.c.l.b16 %v155
  %v348 = vunpack.c.l.b16 %v156
  %v349 = vunpack.c.l.b16 %v157
  %v350 = vunpack.c.l.b16 %v158
  %v351 = vpack.c.b16 %v256, %v255
  %v352 = vpack.c.b16 %v258, %v257
  %v353 = vpack.c.b16 %v260, %v259
  %v354 = vpack.c.b16 %v262, %v261
  %v355 = vpack.c.b16 %v264, %v263
  %v356 = vpack.c.b16 %v266, %v265
  %v357 = vpack.c.b16 %v268, %v267
  %v358 = vpack.c.b16 %v270, %v269
  %v359 = vpack.c.b16 %v272, %v271
  %v360 = vpack.c.b16 %v274, %v273
  %v361 = vpack.c.b16 %v276, %v275
  %v362 = vpack.c.b16 %v278, %v277
  %v363 = vpack.c.b16 %v280, %v279
  %v364 = vpack.c.b16 %v282, %v281
  %v365 = vpack.c.b16 %v284, %v283
  %v366 = vpack.c.b16 %v286, %v285
  %v367 = vpack.c.b16 %v288, %v287
  %v368 = vpack.c.b16 %v290, %v289
  %v369 = vpack.c.b16 %v292, %v291
  %v370 = vpack.c.b16 %v294, %v293
  %v371 = vpack.c.b16 %v296, %v295
  %v372 = vpack.c.b16 %v298, %v297
  %v373 = vpack.c.b16 %v300, %v299
  %v374 = vpack.c.b16 %v302, %v301
  %v375 = vpack.c.b16 %v304, %v303
  %v376 = vpack.c.b16 %v306, %v305
  %v377 = vpack.c.b16 %v308, %v307
  %v378 = vpack.c.b16 %v310, %v309
  %v379 = vpack.c.b16 %v312, %v311
  %v380 = vpack.c.b16 %v314, %v313
  %v381 = vpack.c.b16 %v316, %v315
  %v382 = vpack.c.b16 %v318, %v317
  %v383 = vpack.c.b16 %v320, %v319
  %v384 = vpack.c.b16 %v322, %v321
  %v385 = vpack.c.b16 %v324, %v323
  %v386 = vpack.c.b16 %v326, %v325
  %v387 = vpack.c.b16 %v328, %v327
  %v388 = vpack.c.b16 %v330, %v329
  %v389 = vpack.c.b16 %v332, %v331
  %v390 = vpack.c.b16 %v334, %v333
  %v391 = vpack.c.b16 %v336, %v335
  %v392 = vpack.c.b16 %v338, %v337
  %v393 = vpack.c.b16 %v340, %v339
  %v394 = vpack.c.b16 %v342, %v341
  %v395 = vpack.c.b16 %v344, %v343
  %v396 = vpack.c.b16 %v346, %v345
  %v397 = vpack.c.b16 %v348, %v347
  %v398 = vpack.c.b16 %v350, %v349
  %447 = vmatprep.subr.bf16.mxu0 %v62
  %448 = vmatpush1.bf16.msra.mxu0 %v61
  %449 = vmatprep.subr.bf16.mxu0 %v60
  %450 = vmatpush1.bf16.msra.mxu0 %v59
  %451 = vmatprep.subr.bf16.mxu0 %v58
  %452 = vmatpush1.bf16.msra.mxu0 %v57
  %453 = vmatprep.subr.bf16.mxu0 %v56
  %454 = vmatpush1.bf16.msra.mxu0 %v55
  %455 = vmatprep.subr.bf16.mxu0 %v54
  %456 = vmatpush1.bf16.msra.mxu0 %v53
  %457 = vmatprep.subr.bf16.mxu0 %v52
  %458 = vmatpush1.bf16.msra.mxu0 %v51
  %459 = vmatprep.subr.bf16.mxu0 %v50
  %460 = vmatpush1.bf16.msra.mxu0 %v49
  %461 = vmatprep.subr.bf16.mxu0 %v48
  %462 = vmatpush1.bf16.msra.mxu0 %v47
  %463 = vmatprep.subr.bf16.mxu0 0
  %464 = vmatpush2.bf16.msra.mxu0 0
  %465 = vmatprep.subr.bf16.mxu0 0
  %466 = vmatpush2.bf16.msra.mxu0 0
  %467 = vmatprep.subr.bf16.mxu0 0
  %468 = vmatpush2.bf16.msra.mxu0 0
  %469 = vmatprep.subr.bf16.mxu0 0
  %470 = vmatpush2.bf16.msra.mxu0 0
  %471 = vmatprep.subr.bf16.mxu0 0
  %472 = vmatpush2.bf16.msra.mxu0 0
  %473 = vmatprep.subr.bf16.mxu0 0
  %474 = vmatpush2.bf16.msra.mxu0 0
  %475 = vmatprep.subr.bf16.mxu0 0
  %476 = vmatpush2.bf16.msra.mxu0 0
  %477 = vmatprep.subr.bf16.mxu0 0
  %478 = vmatpush2.bf16.msra.mxu0 0
  %479 = vmatprep.mubr.bf16.mxu0 0
  %480 = vmatmul.mubr.bf16.gmra.mxu0 %v351
  %v481 = vpop.f32.mrf.mxu0
  %v482 = vadd.f32 0.0, %v481
  %v483 = vpop.f32.mrf.mxu0
  %v484 = vadd.f32 0.0, %v483
  %v485 = vpop.f32.mrf.mxu0
  %v486 = vadd.f32 0.0, %v485
  %v487 = vpop.f32.mrf.mxu0
  %v488 = vadd.f32 0.0, %v487
  %489 = vmatprep.mubr.bf16.mxu0 0
  %490 = vmatmul.mubr.bf16.gmra.mxu0 %v352
  %v491 = vpop.f32.mrf.mxu0
  %v492 = vadd.f32 0.0, %v491
  %v493 = vpop.f32.mrf.mxu0
  %v494 = vadd.f32 0.0, %v493
  %v495 = vpop.f32.mrf.mxu0
  %v496 = vadd.f32 0.0, %v495
  %v497 = vpop.f32.mrf.mxu0
  %v498 = vadd.f32 0.0, %v497
  %499 = vmatprep.mubr.bf16.mxu0 0
  %500 = vmatmul.mubr.bf16.gmra.mxu0 %v353
  %v501 = vpop.f32.mrf.mxu0
  %v502 = vadd.f32 0.0, %v501
  %v503 = vpop.f32.mrf.mxu0
  %v504 = vadd.f32 0.0, %v503
  %v505 = vpop.f32.mrf.mxu0
  %v506 = vadd.f32 0.0, %v505
  %v507 = vpop.f32.mrf.mxu0
  %v508 = vadd.f32 0.0, %v507
  %509 = vmatprep.mubr.bf16.mxu0 0
  %510 = vmatmul.mubr.bf16.gmra.mxu0 %v354
  %v511 = vpop.f32.mrf.mxu0
  %v512 = vadd.f32 0.0, %v511
  %v513 = vpop.f32.mrf.mxu0
  %v514 = vadd.f32 0.0, %v513
  %v515 = vpop.f32.mrf.mxu0
  %v516 = vadd.f32 0.0, %v515
  %v517 = vpop.f32.mrf.mxu0
  %v518 = vadd.f32 0.0, %v517
  %519 = vmatprep.mubr.bf16.mxu0 0
  %520 = vmatmul.mubr.bf16.gmra.mxu0 %v355
  %v521 = vpop.f32.mrf.mxu0
  %v522 = vadd.f32 0.0, %v521
  %v523 = vpop.f32.mrf.mxu0
  %v524 = vadd.f32 0.0, %v523
  %v525 = vpop.f32.mrf.mxu0
  %v526 = vadd.f32 0.0, %v525
  %v527 = vpop.f32.mrf.mxu0
  %v528 = vadd.f32 0.0, %v527
  %529 = vmatprep.mubr.bf16.mxu0 0
  %530 = vmatmul.mubr.bf16.gmra.mxu0 %v356
  %v531 = vpop.f32.mrf.mxu0
  %v532 = vadd.f32 0.0, %v531
  %v533 = vpop.f32.mrf.mxu0
  %v534 = vadd.f32 0.0, %v533
  %v535 = vpop.f32.mrf.mxu0
  %v536 = vadd.f32 0.0, %v535
  %v537 = vpop.f32.mrf.mxu0
  %v538 = vadd.f32 0.0, %v537
  %539 = vmatprep.mubr.bf16.mxu0 0
  %540 = vmatmul.mubr.bf16.gmra.mxu0 %v357
  %v541 = vpop.f32.mrf.mxu0
  %v542 = vadd.f32 0.0, %v541
  %v543 = vpop.f32.mrf.mxu0
  %v544 = vadd.f32 0.0, %v543
  %v545 = vpop.f32.mrf.mxu0
  %v546 = vadd.f32 0.0, %v545
  %v547 = vpop.f32.mrf.mxu0
  %v548 = vadd.f32 0.0, %v547
  %549 = vmatprep.mubr.bf16.mxu0 0
  %550 = vmatmul.mubr.bf16.gmra.mxu0 %v358
  %v551 = vpop.f32.mrf.mxu0
  %v552 = vadd.f32 0.0, %v551
  %v553 = vpop.f32.mrf.mxu0
  %v554 = vadd.f32 0.0, %v553
  %v555 = vpop.f32.mrf.mxu0
  %v556 = vadd.f32 0.0, %v555
  %v557 = vpop.f32.mrf.mxu0
  %v558 = vadd.f32 0.0, %v557
  %559 = vmatprep.mubr.bf16.mxu0 0
  %560 = vmatmul.mubr.bf16.gmra.mxu0 %v359
  %v561 = vpop.f32.mrf.mxu0
  %v562 = vadd.f32 0.0, %v561
  %v563 = vpop.f32.mrf.mxu0
  %v564 = vadd.f32 0.0, %v563
  %v565 = vpop.f32.mrf.mxu0
  %v566 = vadd.f32 0.0, %v565
  %v567 = vpop.f32.mrf.mxu0
  %v568 = vadd.f32 0.0, %v567
  %569 = vmatprep.mubr.bf16.mxu0 0
  %570 = vmatmul.mubr.bf16.gmra.mxu0 %v360
  %v571 = vpop.f32.mrf.mxu0
  %v572 = vadd.f32 0.0, %v571
  %v573 = vpop.f32.mrf.mxu0
  %v574 = vadd.f32 0.0, %v573
  %v575 = vpop.f32.mrf.mxu0
  %v576 = vadd.f32 0.0, %v575
  %v577 = vpop.f32.mrf.mxu0
  %v578 = vadd.f32 0.0, %v577
  %579 = vmatprep.mubr.bf16.mxu0 0
  %580 = vmatmul.mubr.bf16.gmra.mxu0 %v361
  %v581 = vpop.f32.mrf.mxu0
  %v582 = vadd.f32 0.0, %v581
  %v583 = vpop.f32.mrf.mxu0
  %v584 = vadd.f32 0.0, %v583
  %v585 = vpop.f32.mrf.mxu0
  %v586 = vadd.f32 0.0, %v585
  %v587 = vpop.f32.mrf.mxu0
  %v588 = vadd.f32 0.0, %v587
  %589 = vmatprep.mubr.bf16.mxu0 0
  %590 = vmatmul.mubr.bf16.gmra.mxu0 %v362
  %v591 = vpop.f32.mrf.mxu0
  %v592 = vadd.f32 0.0, %v591
  %v593 = vpop.f32.mrf.mxu0
  %v594 = vadd.f32 0.0, %v593
  %v595 = vpop.f32.mrf.mxu0
  %v596 = vadd.f32 0.0, %v595
  %v597 = vpop.f32.mrf.mxu0
  %v598 = vadd.f32 0.0, %v597
  %599 = vmatprep.mubr.bf16.mxu0 0
  %600 = vmatmul.mubr.bf16.gmra.mxu0 %v363
  %v601 = vpop.f32.mrf.mxu0
  %v602 = vadd.f32 0.0, %v601
  %v603 = vpop.f32.mrf.mxu0
  %v604 = vadd.f32 0.0, %v603
  %v605 = vpop.f32.mrf.mxu0
  %v606 = vadd.f32 0.0, %v605
  %v607 = vpop.f32.mrf.mxu0
  %v608 = vadd.f32 0.0, %v607
  %609 = vmatprep.mubr.bf16.mxu0 0
  %610 = vmatmul.mubr.bf16.gmra.mxu0 %v364
  %v611 = vpop.f32.mrf.mxu0
  %v612 = vadd.f32 0.0, %v611
  %v613 = vpop.f32.mrf.mxu0
  %v614 = vadd.f32 0.0, %v613
  %v615 = vpop.f32.mrf.mxu0
  %v616 = vadd.f32 0.0, %v615
  %v617 = vpop.f32.mrf.mxu0
  %v618 = vadd.f32 0.0, %v617
  %619 = vmatprep.mubr.bf16.mxu0 0
  %620 = vmatmul.mubr.bf16.gmra.mxu0 %v365
  %v621 = vpop.f32.mrf.mxu0
  %v622 = vadd.f32 0.0, %v621
  %v623 = vpop.f32.mrf.mxu0
  %v624 = vadd.f32 0.0, %v623
  %v625 = vpop.f32.mrf.mxu0
  %v626 = vadd.f32 0.0, %v625
  %v627 = vpop.f32.mrf.mxu0
  %v628 = vadd.f32 0.0, %v627
  %629 = vmatprep.mubr.bf16.mxu0 0
  %630 = vmatmul.mubr.bf16.gmra.mxu0 %v366
  %v631 = vpop.f32.mrf.mxu0
  %v632 = vadd.f32 0.0, %v631
  %v633 = vpop.f32.mrf.mxu0
  %v634 = vadd.f32 0.0, %v633
  %v635 = vpop.f32.mrf.mxu0
  %v636 = vadd.f32 0.0, %v635
  %v637 = vpop.f32.mrf.mxu0
  %v638 = vadd.f32 0.0, %v637
  %639 = vmatprep.mubr.bf16.mxu0 0
  %640 = vmatmul.mubr.bf16.gmra.mxu0 %v367
  %v641 = vpop.f32.mrf.mxu0
  %v642 = vadd.f32 0.0, %v641
  %v643 = vpop.f32.mrf.mxu0
  %v644 = vadd.f32 0.0, %v643
  %v645 = vpop.f32.mrf.mxu0
  %v646 = vadd.f32 0.0, %v645
  %v647 = vpop.f32.mrf.mxu0
  %v648 = vadd.f32 0.0, %v647
  %649 = vmatprep.mubr.bf16.mxu0 0
  %650 = vmatmul.mubr.bf16.gmra.mxu0 %v368
  %v651 = vpop.f32.mrf.mxu0
  %v652 = vadd.f32 0.0, %v651
  %v653 = vpop.f32.mrf.mxu0
  %v654 = vadd.f32 0.0, %v653
  %v655 = vpop.f32.mrf.mxu0
  %v656 = vadd.f32 0.0, %v655
  %v657 = vpop.f32.mrf.mxu0
  %v658 = vadd.f32 0.0, %v657
  %659 = vmatprep.mubr.bf16.mxu0 0
  %660 = vmatmul.mubr.bf16.gmra.mxu0 %v369
  %v661 = vpop.f32.mrf.mxu0
  %v662 = vadd.f32 0.0, %v661
  %v663 = vpop.f32.mrf.mxu0
  %v664 = vadd.f32 0.0, %v663
  %v665 = vpop.f32.mrf.mxu0
  %v666 = vadd.f32 0.0, %v665
  %v667 = vpop.f32.mrf.mxu0
  %v668 = vadd.f32 0.0, %v667
  %669 = vmatprep.mubr.bf16.mxu0 0
  %670 = vmatmul.mubr.bf16.gmra.mxu0 %v370
  %v671 = vpop.f32.mrf.mxu0
  %v672 = vadd.f32 0.0, %v671
  %v673 = vpop.f32.mrf.mxu0
  %v674 = vadd.f32 0.0, %v673
  %v675 = vpop.f32.mrf.mxu0
  %v676 = vadd.f32 0.0, %v675
  %v677 = vpop.f32.mrf.mxu0
  %v678 = vadd.f32 0.0, %v677
  %679 = vmatprep.mubr.bf16.mxu0 0
  %680 = vmatmul.mubr.bf16.gmra.mxu0 %v371
  %v681 = vpop.f32.mrf.mxu0
  %v682 = vadd.f32 0.0, %v681
  %v683 = vpop.f32.mrf.mxu0
  %v684 = vadd.f32 0.0, %v683
  %v685 = vpop.f32.mrf.mxu0
  %v686 = vadd.f32 0.0, %v685
  %v687 = vpop.f32.mrf.mxu0
  %v688 = vadd.f32 0.0, %v687
  %689 = vmatprep.mubr.bf16.mxu0 0
  %690 = vmatmul.mubr.bf16.gmra.mxu0 %v372
  %v691 = vpop.f32.mrf.mxu0
  %v692 = vadd.f32 0.0, %v691
  %v693 = vpop.f32.mrf.mxu0
  %v694 = vadd.f32 0.0, %v693
  %v695 = vpop.f32.mrf.mxu0
  %v696 = vadd.f32 0.0, %v695
  %v697 = vpop.f32.mrf.mxu0
  %v698 = vadd.f32 0.0, %v697
  %699 = vmatprep.mubr.bf16.mxu0 0
  %700 = vmatmul.mubr.bf16.gmra.mxu0 %v373
  %v701 = vpop.f32.mrf.mxu0
  %v702 = vadd.f32 0.0, %v701
  %v703 = vpop.f32.mrf.mxu0
  %v704 = vadd.f32 0.0, %v703
  %v705 = vpop.f32.mrf.mxu0
  %v706 = vadd.f32 0.0, %v705
  %v707 = vpop.f32.mrf.mxu0
  %v708 = vadd.f32 0.0, %v707
  %709 = vmatprep.mubr.bf16.mxu0 0
  %710 = vmatmul.mubr.bf16.gmra.mxu0 %v374
  %v711 = vpop.f32.mrf.mxu0
  %v712 = vadd.f32 0.0, %v711
  %v713 = vpop.f32.mrf.mxu0
  %v714 = vadd.f32 0.0, %v713
  %v715 = vpop.f32.mrf.mxu0
  %v716 = vadd.f32 0.0, %v715
  %v717 = vpop.f32.mrf.mxu0
  %v718 = vadd.f32 0.0, %v717
  %719 = vmatprep.mubr.bf16.mxu0 0
  %720 = vmatmul.mubr.bf16.gmra.mxu0 %v375
  %v721 = vpop.f32.mrf.mxu0
  %v722 = vadd.f32 0.0, %v721
  %v723 = vpop.f32.mrf.mxu0
  %v724 = vadd.f32 0.0, %v723
  %v725 = vpop.f32.mrf.mxu0
  %v726 = vadd.f32 0.0, %v725
  %v727 = vpop.f32.mrf.mxu0
  %v728 = vadd.f32 0.0, %v727
  %729 = vmatprep.mubr.bf16.mxu0 0
  %730 = vmatmul.mubr.bf16.gmra.mxu0 %v376
  %v731 = vpop.f32.mrf.mxu0
  %v732 = vadd.f32 0.0, %v731
  %v733 = vpop.f32.mrf.mxu0
  %v734 = vadd.f32 0.0, %v733
  %v735 = vpop.f32.mrf.mxu0
  %v736 = vadd.f32 0.0, %v735
  %v737 = vpop.f32.mrf.mxu0
  %v738 = vadd.f32 0.0, %v737
  %739 = vmatprep.mubr.bf16.mxu0 0
  %740 = vmatmul.mubr.bf16.gmra.mxu0 %v377
  %v741 = vpop.f32.mrf.mxu0
  %v742 = vadd.f32 0.0, %v741
  %v743 = vpop.f32.mrf.mxu0
  %v744 = vadd.f32 0.0, %v743
  %v745 = vpop.f32.mrf.mxu0
  %v746 = vadd.f32 0.0, %v745
  %v747 = vpop.f32.mrf.mxu0
  %v748 = vadd.f32 0.0, %v747
  %749 = vmatprep.mubr.bf16.mxu0 0
  %750 = vmatmul.mubr.bf16.gmra.mxu0 %v378
  %v751 = vpop.f32.mrf.mxu0
  %v752 = vadd.f32 0.0, %v751
  %v753 = vpop.f32.mrf.mxu0
  %v754 = vadd.f32 0.0, %v753
  %v755 = vpop.f32.mrf.mxu0
  %v756 = vadd.f32 0.0, %v755
  %v757 = vpop.f32.mrf.mxu0
  %v758 = vadd.f32 0.0, %v757
  %759 = vmatprep.mubr.bf16.mxu0 0
  %760 = vmatmul.mubr.bf16.gmra.mxu0 %v379
  %v761 = vpop.f32.mrf.mxu0
  %v762 = vadd.f32 0.0, %v761
  %v763 = vpop.f32.mrf.mxu0
  %v764 = vadd.f32 0.0, %v763
  %v765 = vpop.f32.mrf.mxu0
  %v766 = vadd.f32 0.0, %v765
  %v767 = vpop.f32.mrf.mxu0
  %v768 = vadd.f32 0.0, %v767
  %769 = vmatprep.mubr.bf16.mxu0 0
  %770 = vmatmul.mubr.bf16.gmra.mxu0 %v380
  %v771 = vpop.f32.mrf.mxu0
  %v772 = vadd.f32 0.0, %v771
  %v773 = vpop.f32.mrf.mxu0
  %v774 = vadd.f32 0.0, %v773
  %v775 = vpop.f32.mrf.mxu0
  %v776 = vadd.f32 0.0, %v775
  %v777 = vpop.f32.mrf.mxu0
  %v778 = vadd.f32 0.0, %v777
  %779 = vmatprep.mubr.bf16.mxu0 0
  %780 = vmatmul.mubr.bf16.gmra.mxu0 %v381
  %v781 = vpop.f32.mrf.mxu0
  %v782 = vadd.f32 0.0, %v781
  %v783 = vpop.f32.mrf.mxu0
  %v784 = vadd.f32 0.0, %v783
  %v785 = vpop.f32.mrf.mxu0
  %v786 = vadd.f32 0.0, %v785
  %v787 = vpop.f32.mrf.mxu0
  %v788 = vadd.f32 0.0, %v787
  %789 = vmatprep.mubr.bf16.mxu0 0
  %790 = vmatmul.mubr.bf16.gmra.mxu0 %v382
  %v791 = vpop.f32.mrf.mxu0
  %v792 = vadd.f32 0.0, %v791
  %v793 = vpop.f32.mrf.mxu0
  %v794 = vadd.f32 0.0, %v793
  %v795 = vpop.f32.mrf.mxu0
  %v796 = vadd.f32 0.0, %v795
  %v797 = vpop.f32.mrf.mxu0
  %v798 = vadd.f32 0.0, %v797
  %799 = vmatprep.mubr.bf16.mxu0 0
  %800 = vmatmul.mubr.bf16.gmra.mxu0 %v383
  %v801 = vpop.f32.mrf.mxu0
  %v802 = vadd.f32 0.0, %v801
  %v803 = vpop.f32.mrf.mxu0
  %v804 = vadd.f32 0.0, %v803
  %v805 = vpop.f32.mrf.mxu0
  %v806 = vadd.f32 0.0, %v805
  %v807 = vpop.f32.mrf.mxu0
  %v808 = vadd.f32 0.0, %v807
  %809 = vmatprep.mubr.bf16.mxu0 0
  %810 = vmatmul.mubr.bf16.gmra.mxu0 %v384
  %v811 = vpop.f32.mrf.mxu0
  %v812 = vadd.f32 0.0, %v811
  %v813 = vpop.f32.mrf.mxu0
  %v814 = vadd.f32 0.0, %v813
  %v815 = vpop.f32.mrf.mxu0
  %v816 = vadd.f32 0.0, %v815
  %v817 = vpop.f32.mrf.mxu0
  %v818 = vadd.f32 0.0, %v817
  %819 = vmatprep.mubr.bf16.mxu0 0
  %820 = vmatmul.mubr.bf16.gmra.mxu0 %v385
  %v821 = vpop.f32.mrf.mxu0
  %v822 = vadd.f32 0.0, %v821
  %v823 = vpop.f32.mrf.mxu0
  %v824 = vadd.f32 0.0, %v823
  %v825 = vpop.f32.mrf.mxu0
  %v826 = vadd.f32 0.0, %v825
  %v827 = vpop.f32.mrf.mxu0
  %v828 = vadd.f32 0.0, %v827
  %829 = vmatprep.mubr.bf16.mxu0 0
  %830 = vmatmul.mubr.bf16.gmra.mxu0 %v386
  %v831 = vpop.f32.mrf.mxu0
  %v832 = vadd.f32 0.0, %v831
  %v833 = vpop.f32.mrf.mxu0
  %v834 = vadd.f32 0.0, %v833
  %v835 = vpop.f32.mrf.mxu0
  %v836 = vadd.f32 0.0, %v835
  %v837 = vpop.f32.mrf.mxu0
  %v838 = vadd.f32 0.0, %v837
  %839 = vmatprep.mubr.bf16.mxu0 0
  %840 = vmatmul.mubr.bf16.gmra.mxu0 %v387
  %v841 = vpop.f32.mrf.mxu0
  %v842 = vadd.f32 0.0, %v841
  %v843 = vpop.f32.mrf.mxu0
  %v844 = vadd.f32 0.0, %v843
  %v845 = vpop.f32.mrf.mxu0
  %v846 = vadd.f32 0.0, %v845
  %v847 = vpop.f32.mrf.mxu0
  %v848 = vadd.f32 0.0, %v847
  %849 = vmatprep.mubr.bf16.mxu0 0
  %850 = vmatmul.mubr.bf16.gmra.mxu0 %v388
  %v851 = vpop.f32.mrf.mxu0
  %v852 = vadd.f32 0.0, %v851
  %v853 = vpop.f32.mrf.mxu0
  %v854 = vadd.f32 0.0, %v853
  %v855 = vpop.f32.mrf.mxu0
  %v856 = vadd.f32 0.0, %v855
  %v857 = vpop.f32.mrf.mxu0
  %v858 = vadd.f32 0.0, %v857
  %859 = vmatprep.mubr.bf16.mxu0 0
  %860 = vmatmul.mubr.bf16.gmra.mxu0 %v389
  %v861 = vpop.f32.mrf.mxu0
  %v862 = vadd.f32 0.0, %v861
  %v863 = vpop.f32.mrf.mxu0
  %v864 = vadd.f32 0.0, %v863
  %v865 = vpop.f32.mrf.mxu0
  %v866 = vadd.f32 0.0, %v865
  %v867 = vpop.f32.mrf.mxu0
  %v868 = vadd.f32 0.0, %v867
  %869 = vmatprep.mubr.bf16.mxu0 0
  %870 = vmatmul.mubr.bf16.gmra.mxu0 %v390
  %v871 = vpop.f32.mrf.mxu0
  %v872 = vadd.f32 0.0, %v871
  %v873 = vpop.f32.mrf.mxu0
  %v874 = vadd.f32 0.0, %v873
  %v875 = vpop.f32.mrf.mxu0
  %v876 = vadd.f32 0.0, %v875
  %v877 = vpop.f32.mrf.mxu0
  %v878 = vadd.f32 0.0, %v877
  %879 = vmatprep.mubr.bf16.mxu0 0
  %880 = vmatmul.mubr.bf16.gmra.mxu0 %v391
  %v881 = vpop.f32.mrf.mxu0
  %v882 = vadd.f32 0.0, %v881
  %v883 = vpop.f32.mrf.mxu0
  %v884 = vadd.f32 0.0, %v883
  %v885 = vpop.f32.mrf.mxu0
  %v886 = vadd.f32 0.0, %v885
  %v887 = vpop.f32.mrf.mxu0
  %v888 = vadd.f32 0.0, %v887
  %889 = vmatprep.mubr.bf16.mxu0 0
  %890 = vmatmul.mubr.bf16.gmra.mxu0 %v392
  %v891 = vpop.f32.mrf.mxu0
  %v892 = vadd.f32 0.0, %v891
  %v893 = vpop.f32.mrf.mxu0
  %v894 = vadd.f32 0.0, %v893
  %v895 = vpop.f32.mrf.mxu0
  %v896 = vadd.f32 0.0, %v895
  %v897 = vpop.f32.mrf.mxu0
  %v898 = vadd.f32 0.0, %v897
  %899 = vmatprep.mubr.bf16.mxu0 0
  %900 = vmatmul.mubr.bf16.gmra.mxu0 %v393
  %v901 = vpop.f32.mrf.mxu0
  %v902 = vadd.f32 0.0, %v901
  %v903 = vpop.f32.mrf.mxu0
  %v904 = vadd.f32 0.0, %v903
  %v905 = vpop.f32.mrf.mxu0
  %v906 = vadd.f32 0.0, %v905
  %v907 = vpop.f32.mrf.mxu0
  %v908 = vadd.f32 0.0, %v907
  %909 = vmatprep.mubr.bf16.mxu0 0
  %910 = vmatmul.mubr.bf16.gmra.mxu0 %v394
  %v911 = vpop.f32.mrf.mxu0
  %v912 = vadd.f32 0.0, %v911
  %v913 = vpop.f32.mrf.mxu0
  %v914 = vadd.f32 0.0, %v913
  %v915 = vpop.f32.mrf.mxu0
  %v916 = vadd.f32 0.0, %v915
  %v917 = vpop.f32.mrf.mxu0
  %v918 = vadd.f32 0.0, %v917
  %919 = vmatprep.mubr.bf16.mxu0 0
  %920 = vmatmul.mubr.bf16.gmra.mxu0 %v395
  %v921 = vpop.f32.mrf.mxu0
  %v922 = vadd.f32 0.0, %v921
  %v923 = vpop.f32.mrf.mxu0
  %v924 = vadd.f32 0.0, %v923
  %v925 = vpop.f32.mrf.mxu0
  %v926 = vadd.f32 0.0, %v925
  %v927 = vpop.f32.mrf.mxu0
  %v928 = vadd.f32 0.0, %v927
  %929 = vmatprep.mubr.bf16.mxu0 0
  %930 = vmatmul.mubr.bf16.gmra.mxu0 %v396
  %v931 = vpop.f32.mrf.mxu0
  %v932 = vadd.f32 0.0, %v931
  %v933 = vpop.f32.mrf.mxu0
  %v934 = vadd.f32 0.0, %v933
  %v935 = vpop.f32.mrf.mxu0
  %v936 = vadd.f32 0.0, %v935
  %v937 = vpop.f32.mrf.mxu0
  %v938 = vadd.f32 0.0, %v937
  %939 = vmatprep.mubr.bf16.mxu0 0
  %940 = vmatmul.mubr.bf16.gmra.mxu0 %v397
  %v941 = vpop.f32.mrf.mxu0
  %v942 = vadd.f32 0.0, %v941
  %v943 = vpop.f32.mrf.mxu0
  %v944 = vadd.f32 0.0, %v943
  %v945 = vpop.f32.mrf.mxu0
  %v946 = vadd.f32 0.0, %v945
  %v947 = vpop.f32.mrf.mxu0
  %v948 = vadd.f32 0.0, %v947
  %949 = vmatprep.mubr.bf16.mxu0 0
  %950 = vmatmul.mubr.bf16.gmra.mxu0 %v398
  %v951 = vpop.f32.mrf.mxu0
  %v952 = vadd.f32 0.0, %v951
  %v953 = vpop.f32.mrf.mxu0
  %v954 = vadd.f32 0.0, %v953
  %v955 = vpop.f32.mrf.mxu0
  %v956 = vadd.f32 0.0, %v955
  %v957 = vpop.f32.mrf.mxu0
  %v958 = vadd.f32 0.0, %v957
  %959 = vdwg.mxu0
  %v960 = vadd.f32 %v482, %v484
  %961 = vadd.xlane.f32.xlu0 %v960
  %v962 = vpop.xlane.xlu0 %961
  %v963 = vadd.f32 %v486, %v488
  %964 = vadd.xlane.f32.xlu0 %v963
  %v965 = vpop.xlane.xlu0 %964
  %v966 = vadd.f32 %v492, %v494
  %967 = vadd.xlane.f32.xlu0 %v966
  %v968 = vpop.xlane.xlu0 %967
  %v969 = vadd.f32 %v496, %v498
  %970 = vadd.xlane.f32.xlu0 %v969
  %v971 = vpop.xlane.xlu0 %970
  %v972 = vadd.f32 %v502, %v504
  %973 = vadd.xlane.f32.xlu0 %v972
  %v974 = vpop.xlane.xlu0 %973
  %v975 = vadd.f32 %v506, %v508
  %976 = vadd.xlane.f32.xlu0 %v975
  %v977 = vpop.xlane.xlu0 %976
  %v978 = vadd.f32 %v512, %v514
  %979 = vadd.xlane.f32.xlu0 %v978
  %v980 = vpop.xlane.xlu0 %979
  %v981 = vadd.f32 %v516, %v518
  %982 = vadd.xlane.f32.xlu0 %v981
  %v983 = vpop.xlane.xlu0 %982
  %v984 = vadd.f32 %v522, %v524
  %985 = vadd.xlane.f32.xlu0 %v984
  %v986 = vpop.xlane.xlu0 %985
  %v987 = vadd.f32 %v526, %v528
  %988 = vadd.xlane.f32.xlu0 %v987
  %v989 = vpop.xlane.xlu0 %988
  %v990 = vadd.f32 %v532, %v534
  %991 = vadd.xlane.f32.xlu0 %v990
  %v992 = vpop.xlane.xlu0 %991
  %v993 = vadd.f32 %v536, %v538
  %994 = vadd.xlane.f32.xlu0 %v993
  %v995 = vpop.xlane.xlu0 %994
  %v996 = vadd.f32 %v542, %v544
  %997 = vadd.xlane.f32.xlu0 %v996
  %v998 = vpop.xlane.xlu0 %997
  %v999 = vadd.f32 %v546, %v548
  %1000 = vadd.xlane.f32.xlu0 %v999
  %v1001 = vpop.xlane.xlu0 %1000
  %v1002 = vadd.f32 %v552, %v554
  %1003 = vadd.xlane.f32.xlu0 %v1002
  %v1004 = vpop.xlane.xlu0 %1003
  %v1005 = vadd.f32 %v556, %v558
  %1006 = vadd.xlane.f32.xlu0 %v1005
  %v1007 = vpop.xlane.xlu0 %1006
  %v1008 = vadd.f32 %v562, %v564
  %1009 = vadd.xlane.f32.xlu0 %v1008
  %v1010 = vpop.xlane.xlu0 %1009
  %v1011 = vadd.f32 %v566, %v568
  %1012 = vadd.xlane.f32.xlu0 %v1011
  %v1013 = vpop.xlane.xlu0 %1012
  %v1014 = vadd.f32 %v572, %v574
  %1015 = vadd.xlane.f32.xlu0 %v1014
  %v1016 = vpop.xlane.xlu0 %1015
  %v1017 = vadd.f32 %v576, %v578
  %1018 = vadd.xlane.f32.xlu0 %v1017
  %v1019 = vpop.xlane.xlu0 %1018
  %v1020 = vadd.f32 %v582, %v584
  %1021 = vadd.xlane.f32.xlu0 %v1020
  %v1022 = vpop.xlane.xlu0 %1021
  %v1023 = vadd.f32 %v586, %v588
  %1024 = vadd.xlane.f32.xlu0 %v1023
  %v1025 = vpop.xlane.xlu0 %1024
  %v1026 = vadd.f32 %v592, %v594
  %1027 = vadd.xlane.f32.xlu0 %v1026
  %v1028 = vpop.xlane.xlu0 %1027
  %v1029 = vadd.f32 %v596, %v598
  %1030 = vadd.xlane.f32.xlu0 %v1029
  %v1031 = vpop.xlane.xlu0 %1030
  %v1032 = vadd.f32 %v602, %v604
  %1033 = vadd.xlane.f32.xlu0 %v1032
  %v1034 = vpop.xlane.xlu0 %1033
  %v1035 = vadd.f32 %v606, %v608
  %1036 = vadd.xlane.f32.xlu0 %v1035
  %v1037 = vpop.xlane.xlu0 %1036
  %v1038 = vadd.f32 %v612, %v614
  %1039 = vadd.xlane.f32.xlu0 %v1038
  %v1040 = vpop.xlane.xlu0 %1039
  %v1041 = vadd.f32 %v616, %v618
  %1042 = vadd.xlane.f32.xlu0 %v1041
  %v1043 = vpop.xlane.xlu0 %1042
  %v1044 = vadd.f32 %v622, %v624
  %1045 = vadd.xlane.f32.xlu0 %v1044
  %v1046 = vpop.xlane.xlu0 %1045
  %v1047 = vadd.f32 %v626, %v628
  %1048 = vadd.xlane.f32.xlu0 %v1047
  %v1049 = vpop.xlane.xlu0 %1048
  %v1050 = vadd.f32 %v632, %v634
  %1051 = vadd.xlane.f32.xlu0 %v1050
  %v1052 = vpop.xlane.xlu0 %1051
  %v1053 = vadd.f32 %v636, %v638
  %1054 = vadd.xlane.f32.xlu0 %v1053
  %v1055 = vpop.xlane.xlu0 %1054
  %v1056 = vadd.f32 %v642, %v644
  %1057 = vadd.xlane.f32.xlu0 %v1056
  %v1058 = vpop.xlane.xlu0 %1057
  %v1059 = vadd.f32 %v646, %v648
  %1060 = vadd.xlane.f32.xlu0 %v1059
  %v1061 = vpop.xlane.xlu0 %1060
  %v1062 = vadd.f32 %v652, %v654
  %1063 = vadd.xlane.f32.xlu0 %v1062
  %v1064 = vpop.xlane.xlu0 %1063
  %v1065 = vadd.f32 %v656, %v658
  %1066 = vadd.xlane.f32.xlu0 %v1065
  %v1067 = vpop.xlane.xlu0 %1066
  %v1068 = vadd.f32 %v662, %v664
  %1069 = vadd.xlane.f32.xlu0 %v1068
  %v1070 = vpop.xlane.xlu0 %1069
  %v1071 = vadd.f32 %v666, %v668
  %1072 = vadd.xlane.f32.xlu0 %v1071
  %v1073 = vpop.xlane.xlu0 %1072
  %v1074 = vadd.f32 %v672, %v674
  %1075 = vadd.xlane.f32.xlu0 %v1074
  %v1076 = vpop.xlane.xlu0 %1075
  %v1077 = vadd.f32 %v676, %v678
  %1078 = vadd.xlane.f32.xlu0 %v1077
  %v1079 = vpop.xlane.xlu0 %1078
  %v1080 = vadd.f32 %v682, %v684
  %1081 = vadd.xlane.f32.xlu0 %v1080
  %v1082 = vpop.xlane.xlu0 %1081
  %v1083 = vadd.f32 %v686, %v688
  %1084 = vadd.xlane.f32.xlu0 %v1083
  %v1085 = vpop.xlane.xlu0 %1084
  %v1086 = vadd.f32 %v692, %v694
  %1087 = vadd.xlane.f32.xlu0 %v1086
  %v1088 = vpop.xlane.xlu0 %1087
  %v1089 = vadd.f32 %v696, %v698
  %1090 = vadd.xlane.f32.xlu0 %v1089
  %v1091 = vpop.xlane.xlu0 %1090
  %v1092 = vadd.f32 %v702, %v704
  %1093 = vadd.xlane.f32.xlu0 %v1092
  %v1094 = vpop.xlane.xlu0 %1093
  %v1095 = vadd.f32 %v706, %v708
  %1096 = vadd.xlane.f32.xlu0 %v1095
  %v1097 = vpop.xlane.xlu0 %1096
  %v1098 = vadd.f32 %v712, %v714
  %1099 = vadd.xlane.f32.xlu0 %v1098
  %v1100 = vpop.xlane.xlu0 %1099
  %v1101 = vadd.f32 %v716, %v718
  %1102 = vadd.xlane.f32.xlu0 %v1101
  %v1103 = vpop.xlane.xlu0 %1102
  %v1104 = vadd.f32 %v722, %v724
  %1105 = vadd.xlane.f32.xlu0 %v1104
  %v1106 = vpop.xlane.xlu0 %1105
  %v1107 = vadd.f32 %v726, %v728
  %1108 = vadd.xlane.f32.xlu0 %v1107
  %v1109 = vpop.xlane.xlu0 %1108
  %v1110 = vadd.f32 %v732, %v734
  %1111 = vadd.xlane.f32.xlu0 %v1110
  %v1112 = vpop.xlane.xlu0 %1111
  %v1113 = vadd.f32 %v736, %v738
  %1114 = vadd.xlane.f32.xlu0 %v1113
  %v1115 = vpop.xlane.xlu0 %1114
  %v1116 = vadd.f32 %v742, %v744
  %1117 = vadd.xlane.f32.xlu0 %v1116
  %v1118 = vpop.xlane.xlu0 %1117
  %v1119 = vadd.f32 %v746, %v748
  %1120 = vadd.xlane.f32.xlu0 %v1119
  %v1121 = vpop.xlane.xlu0 %1120
  %v1122 = vadd.f32 %v752, %v754
  %1123 = vadd.xlane.f32.xlu0 %v1122
  %v1124 = vpop.xlane.xlu0 %1123
  %v1125 = vadd.f32 %v756, %v758
  %1126 = vadd.xlane.f32.xlu0 %v1125
  %v1127 = vpop.xlane.xlu0 %1126
  %v1128 = vadd.f32 %v762, %v764
  %1129 = vadd.xlane.f32.xlu0 %v1128
  %v1130 = vpop.xlane.xlu0 %1129
  %v1131 = vadd.f32 %v766, %v768
  %1132 = vadd.xlane.f32.xlu0 %v1131
  %v1133 = vpop.xlane.xlu0 %1132
  %v1134 = vadd.f32 %v772, %v774
  %1135 = vadd.xlane.f32.xlu0 %v1134
  %v1136 = vpop.xlane.xlu0 %1135
  %v1137 = vadd.f32 %v776, %v778
  %1138 = vadd.xlane.f32.xlu0 %v1137
  %v1139 = vpop.xlane.xlu0 %1138
  %v1140 = vadd.f32 %v782, %v784
  %1141 = vadd.xlane.f32.xlu0 %v1140
  %v1142 = vpop.xlane.xlu0 %1141
  %v1143 = vadd.f32 %v786, %v788
  %1144 = vadd.xlane.f32.xlu0 %v1143
  %v1145 = vpop.xlane.xlu0 %1144
  %v1146 = vadd.f32 %v792, %v794
  %1147 = vadd.xlane.f32.xlu0 %v1146
  %v1148 = vpop.xlane.xlu0 %1147
  %v1149 = vadd.f32 %v796, %v798
  %1150 = vadd.xlane.f32.xlu0 %v1149
  %v1151 = vpop.xlane.xlu0 %1150
  %v1152 = vadd.f32 %v802, %v804
  %1153 = vadd.xlane.f32.xlu0 %v1152
  %v1154 = vpop.xlane.xlu0 %1153
  %v1155 = vadd.f32 %v806, %v808
  %1156 = vadd.xlane.f32.xlu0 %v1155
  %v1157 = vpop.xlane.xlu0 %1156
  %v1158 = vadd.f32 %v812, %v814
  %1159 = vadd.xlane.f32.xlu0 %v1158
  %v1160 = vpop.xlane.xlu0 %1159
  %v1161 = vadd.f32 %v816, %v818
  %1162 = vadd.xlane.f32.xlu0 %v1161
  %v1163 = vpop.xlane.xlu0 %1162
  %v1164 = vadd.f32 %v822, %v824
  %1165 = vadd.xlane.f32.xlu0 %v1164
  %v1166 = vpop.xlane.xlu0 %1165
  %v1167 = vadd.f32 %v826, %v828
  %1168 = vadd.xlane.f32.xlu0 %v1167
  %v1169 = vpop.xlane.xlu0 %1168
  %v1170 = vadd.f32 %v832, %v834
  %1171 = vadd.xlane.f32.xlu0 %v1170
  %v1172 = vpop.xlane.xlu0 %1171
  %v1173 = vadd.f32 %v836, %v838
  %1174 = vadd.xlane.f32.xlu0 %v1173
  %v1175 = vpop.xlane.xlu0 %1174
  %v1176 = vadd.f32 %v842, %v844
  %1177 = vadd.xlane.f32.xlu0 %v1176
  %v1178 = vpop.xlane.xlu0 %1177
  %v1179 = vadd.f32 %v846, %v848
  %1180 = vadd.xlane.f32.xlu0 %v1179
  %v1181 = vpop.xlane.xlu0 %1180
  %v1182 = vadd.f32 %v852, %v854
  %1183 = vadd.xlane.f32.xlu0 %v1182
  %v1184 = vpop.xlane.xlu0 %1183
  %v1185 = vadd.f32 %v856, %v858
  %1186 = vadd.xlane.f32.xlu0 %v1185
  %v1187 = vpop.xlane.xlu0 %1186
  %v1188 = vadd.f32 %v862, %v864
  %1189 = vadd.xlane.f32.xlu0 %v1188
  %v1190 = vpop.xlane.xlu0 %1189
  %v1191 = vadd.f32 %v866, %v868
  %1192 = vadd.xlane.f32.xlu0 %v1191
  %v1193 = vpop.xlane.xlu0 %1192
  %v1194 = vadd.f32 %v872, %v874
  %1195 = vadd.xlane.f32.xlu0 %v1194
  %v1196 = vpop.xlane.xlu0 %1195
  %v1197 = vadd.f32 %v876, %v878
  %1198 = vadd.xlane.f32.xlu0 %v1197
  %v1199 = vpop.xlane.xlu0 %1198
  %v1200 = vadd.f32 %v882, %v884
  %1201 = vadd.xlane.f32.xlu0 %v1200
  %v1202 = vpop.xlane.xlu0 %1201
  %v1203 = vadd.f32 %v886, %v888
  %1204 = vadd.xlane.f32.xlu0 %v1203
  %v1205 = vpop.xlane.xlu0 %1204
  %v1206 = vadd.f32 %v892, %v894
  %1207 = vadd.xlane.f32.xlu0 %v1206
  %v1208 = vpop.xlane.xlu0 %1207
  %v1209 = vadd.f32 %v896, %v898
  %1210 = vadd.xlane.f32.xlu0 %v1209
  %v1211 = vpop.xlane.xlu0 %1210
  %v1212 = vadd.f32 %v902, %v904
  %1213 = vadd.xlane.f32.xlu0 %v1212
  %v1214 = vpop.xlane.xlu0 %1213
  %v1215 = vadd.f32 %v906, %v908
  %1216 = vadd.xlane.f32.xlu0 %v1215
  %v1217 = vpop.xlane.xlu0 %1216
  %v1218 = vadd.f32 %v912, %v914
  %1219 = vadd.xlane.f32.xlu0 %v1218
  %v1220 = vpop.xlane.xlu0 %1219
  %v1221 = vadd.f32 %v916, %v918
  %1222 = vadd.xlane.f32.xlu0 %v1221
  %v1223 = vpop.xlane.xlu0 %1222
  %v1224 = vadd.f32 %v922, %v924
  %1225 = vadd.xlane.f32.xlu0 %v1224
  %v1226 = vpop.xlane.xlu0 %1225
  %v1227 = vadd.f32 %v926, %v928
  %1228 = vadd.xlane.f32.xlu0 %v1227
  %v1229 = vpop.xlane.xlu0 %1228
  %v1230 = vadd.f32 %v932, %v934
  %1231 = vadd.xlane.f32.xlu0 %v1230
  %v1232 = vpop.xlane.xlu0 %1231
  %v1233 = vadd.f32 %v936, %v938
  %1234 = vadd.xlane.f32.xlu0 %v1233
  %v1235 = vpop.xlane.xlu0 %1234
  %v1236 = vadd.f32 %v942, %v944
  %1237 = vadd.xlane.f32.xlu0 %v1236
  %v1238 = vpop.xlane.xlu0 %1237
  %v1239 = vadd.f32 %v946, %v948
  %1240 = vadd.xlane.f32.xlu0 %v1239
  %v1241 = vpop.xlane.xlu0 %1240
  %v1242 = vadd.f32 %v952, %v954
  %1243 = vadd.xlane.f32.xlu0 %v1242
  %v1244 = vpop.xlane.xlu0 %1243
  %v1245 = vadd.f32 %v956, %v958
  %1246 = vadd.xlane.f32.xlu0 %v1245
  %v1247 = vpop.xlane.xlu0 %1246
  %v1248 = vmul.f32 %v482, %v482
  %v1249 = vmul.f32 %v484, %v484
  %v1250 = vmul.f32 %v486, %v486
  %v1251 = vmul.f32 %v488, %v488
  %v1252 = vmul.f32 %v492, %v492
  %v1253 = vmul.f32 %v494, %v494
  %v1254 = vmul.f32 %v496, %v496
  %v1255 = vmul.f32 %v498, %v498
  %v1256 = vmul.f32 %v502, %v502
  %v1257 = vmul.f32 %v504, %v504
  %v1258 = vmul.f32 %v506, %v506
  %v1259 = vmul.f32 %v508, %v508
  %v1260 = vmul.f32 %v512, %v512
  %v1261 = vmul.f32 %v514, %v514
  %v1262 = vmul.f32 %v516, %v516
  %v1263 = vmul.f32 %v518, %v518
  %v1264 = vmul.f32 %v522, %v522
  %v1265 = vmul.f32 %v524, %v524
  %v1266 = vmul.f32 %v526, %v526
  %v1267 = vmul.f32 %v528, %v528
  %v1268 = vmul.f32 %v532, %v532
  %v1269 = vmul.f32 %v534, %v534
  %v1270 = vmul.f32 %v536, %v536
  %v1271 = vmul.f32 %v538, %v538
  %v1272 = vmul.f32 %v542, %v542
  %v1273 = vmul.f32 %v544, %v544
  %v1274 = vmul.f32 %v546, %v546
  %v1275 = vmul.f32 %v548, %v548
  %v1276 = vmul.f32 %v552, %v552
  %v1277 = vmul.f32 %v554, %v554
  %v1278 = vmul.f32 %v556, %v556
  %v1279 = vmul.f32 %v558, %v558
  %v1280 = vmul.f32 %v562, %v562
  %v1281 = vmul.f32 %v564, %v564
  %v1282 = vmul.f32 %v566, %v566
  %v1283 = vmul.f32 %v568, %v568
  %v1284 = vmul.f32 %v572, %v572
  %v1285 = vmul.f32 %v574, %v574
  %v1286 = vmul.f32 %v576, %v576
  %v1287 = vmul.f32 %v578, %v578
  %v1288 = vmul.f32 %v582, %v582
  %v1289 = vmul.f32 %v584, %v584
  %v1290 = vmul.f32 %v586, %v586
  %v1291 = vmul.f32 %v588, %v588
  %v1292 = vmul.f32 %v592, %v592
  %v1293 = vmul.f32 %v594, %v594
  %v1294 = vmul.f32 %v596, %v596
  %v1295 = vmul.f32 %v598, %v598
  %v1296 = vmul.f32 %v602, %v602
  %v1297 = vmul.f32 %v604, %v604
  %v1298 = vmul.f32 %v606, %v606
  %v1299 = vmul.f32 %v608, %v608
  %v1300 = vmul.f32 %v612, %v612
  %v1301 = vmul.f32 %v614, %v614
  %v1302 = vmul.f32 %v616, %v616
  %v1303 = vmul.f32 %v618, %v618
  %v1304 = vmul.f32 %v622, %v622
  %v1305 = vmul.f32 %v624, %v624
  %v1306 = vmul.f32 %v626, %v626
  %v1307 = vmul.f32 %v628, %v628
  %v1308 = vmul.f32 %v632, %v632
  %v1309 = vmul.f32 %v634, %v634
  %v1310 = vmul.f32 %v636, %v636
  %v1311 = vmul.f32 %v638, %v638
  %v1312 = vmul.f32 %v642, %v642
  %v1313 = vmul.f32 %v644, %v644
  %v1314 = vmul.f32 %v646, %v646
  %v1315 = vmul.f32 %v648, %v648
  %v1316 = vmul.f32 %v652, %v652
  %v1317 = vmul.f32 %v654, %v654
  %v1318 = vmul.f32 %v656, %v656
  %v1319 = vmul.f32 %v658, %v658
  %v1320 = vmul.f32 %v662, %v662
  %v1321 = vmul.f32 %v664, %v664
  %v1322 = vmul.f32 %v666, %v666
  %v1323 = vmul.f32 %v668, %v668
  %v1324 = vmul.f32 %v672, %v672
  %v1325 = vmul.f32 %v674, %v674
  %v1326 = vmul.f32 %v676, %v676
  %v1327 = vmul.f32 %v678, %v678
  %v1328 = vmul.f32 %v682, %v682
  %v1329 = vmul.f32 %v684, %v684
  %v1330 = vmul.f32 %v686, %v686
  %v1331 = vmul.f32 %v688, %v688
  %v1332 = vmul.f32 %v692, %v692
  %v1333 = vmul.f32 %v694, %v694
  %v1334 = vmul.f32 %v696, %v696
  %v1335 = vmul.f32 %v698, %v698
  %v1336 = vmul.f32 %v702, %v702
  %v1337 = vmul.f32 %v704, %v704
  %v1338 = vmul.f32 %v706, %v706
  %v1339 = vmul.f32 %v708, %v708
  %v1340 = vmul.f32 %v712, %v712
  %v1341 = vmul.f32 %v714, %v714
  %v1342 = vmul.f32 %v716, %v716
  %v1343 = vmul.f32 %v718, %v718
  %v1344 = vmul.f32 %v722, %v722
  %v1345 = vmul.f32 %v724, %v724
  %v1346 = vmul.f32 %v726, %v726
  %v1347 = vmul.f32 %v728, %v728
  %v1348 = vmul.f32 %v732, %v732
  %v1349 = vmul.f32 %v734, %v734
  %v1350 = vmul.f32 %v736, %v736
  %v1351 = vmul.f32 %v738, %v738
  %v1352 = vmul.f32 %v742, %v742
  %v1353 = vmul.f32 %v744, %v744
  %v1354 = vmul.f32 %v746, %v746
  %v1355 = vmul.f32 %v748, %v748
  %v1356 = vmul.f32 %v752, %v752
  %v1357 = vmul.f32 %v754, %v754
  %v1358 = vmul.f32 %v756, %v756
  %v1359 = vmul.f32 %v758, %v758
  %v1360 = vmul.f32 %v762, %v762
  %v1361 = vmul.f32 %v764, %v764
  %v1362 = vmul.f32 %v766, %v766
  %v1363 = vmul.f32 %v768, %v768
  %v1364 = vmul.f32 %v772, %v772
  %v1365 = vmul.f32 %v774, %v774
  %v1366 = vmul.f32 %v776, %v776
  %v1367 = vmul.f32 %v778, %v778
  %v1368 = vmul.f32 %v782, %v782
  %v1369 = vmul.f32 %v784, %v784
  %v1370 = vmul.f32 %v786, %v786
  %v1371 = vmul.f32 %v788, %v788
  %v1372 = vmul.f32 %v792, %v792
  %v1373 = vmul.f32 %v794, %v794
  %v1374 = vmul.f32 %v796, %v796
  %v1375 = vmul.f32 %v798, %v798
  %v1376 = vmul.f32 %v802, %v802
  %v1377 = vmul.f32 %v804, %v804
  %v1378 = vmul.f32 %v806, %v806
  %v1379 = vmul.f32 %v808, %v808
  %v1380 = vmul.f32 %v812, %v812
  %v1381 = vmul.f32 %v814, %v814
  %v1382 = vmul.f32 %v816, %v816
  %v1383 = vmul.f32 %v818, %v818
  %v1384 = vmul.f32 %v822, %v822
  %v1385 = vmul.f32 %v824, %v824
  %v1386 = vmul.f32 %v826, %v826
  %v1387 = vmul.f32 %v828, %v828
  %v1388 = vmul.f32 %v832, %v832
  %v1389 = vmul.f32 %v834, %v834
  %v1390 = vmul.f32 %v836, %v836
  %v1391 = vmul.f32 %v838, %v838
  %v1392 = vmul.f32 %v842, %v842
  %v1393 = vmul.f32 %v844, %v844
  %v1394 = vmul.f32 %v846, %v846
  %v1395 = vmul.f32 %v848, %v848
  %v1396 = vmul.f32 %v852, %v852
  %v1397 = vmul.f32 %v854, %v854
  %v1398 = vmul.f32 %v856, %v856
  %v1399 = vmul.f32 %v858, %v858
  %v1400 = vmul.f32 %v862, %v862
  %v1401 = vmul.f32 %v864, %v864
  %v1402 = vmul.f32 %v866, %v866
  %v1403 = vmul.f32 %v868, %v868
  %v1404 = vmul.f32 %v872, %v872
  %v1405 = vmul.f32 %v874, %v874
  %v1406 = vmul.f32 %v876, %v876
  %v1407 = vmul.f32 %v878, %v878
  %v1408 = vmul.f32 %v882, %v882
  %v1409 = vmul.f32 %v884, %v884
  %v1410 = vmul.f32 %v886, %v886
  %v1411 = vmul.f32 %v888, %v888
  %v1412 = vmul.f32 %v892, %v892
  %v1413 = vmul.f32 %v894, %v894
  %v1414 = vmul.f32 %v896, %v896
  %v1415 = vmul.f32 %v898, %v898
  %v1416 = vmul.f32 %v902, %v902
  %v1417 = vmul.f32 %v904, %v904
  %v1418 = vmul.f32 %v906, %v906
  %v1419 = vmul.f32 %v908, %v908
  %v1420 = vmul.f32 %v912, %v912
  %v1421 = vmul.f32 %v914, %v914
  %v1422 = vmul.f32 %v916, %v916
  %v1423 = vmul.f32 %v918, %v918
  %v1424 = vmul.f32 %v922, %v922
  %v1425 = vmul.f32 %v924, %v924
  %v1426 = vmul.f32 %v926, %v926
  %v1427 = vmul.f32 %v928, %v928
  %v1428 = vmul.f32 %v932, %v932
  %v1429 = vmul.f32 %v934, %v934
  %v1430 = vmul.f32 %v936, %v936
  %v1431 = vmul.f32 %v938, %v938
  %v1432 = vmul.f32 %v942, %v942
  %v1433 = vmul.f32 %v944, %v944
  %v1434 = vmul.f32 %v946, %v946
  %v1435 = vmul.f32 %v948, %v948
  %v1436 = vmul.f32 %v952, %v952
  %v1437 = vmul.f32 %v954, %v954
  %v1438 = vmul.f32 %v956, %v956
  %v1439 = vmul.f32 %v958, %v958
  %v1440 = vadd.f32 %v1248, %v1249
  %1441 = vadd.xlane.f32.xlu0 %v1440
  %v1442 = vpop.xlane.xlu0 %1441
  %v1443 = vadd.f32 %v1250, %v1251
  %1444 = vadd.xlane.f32.xlu0 %v1443
  %v1445 = vpop.xlane.xlu0 %1444
  %v1446 = vadd.f32 %v1252, %v1253
  %1447 = vadd.xlane.f32.xlu0 %v1446
  %v1448 = vpop.xlane.xlu0 %1447
  %v1449 = vadd.f32 %v1254, %v1255
  %1450 = vadd.xlane.f32.xlu0 %v1449
  %v1451 = vpop.xlane.xlu0 %1450
  %v1452 = vadd.f32 %v1256, %v1257
  %1453 = vadd.xlane.f32.xlu0 %v1452
  %v1454 = vpop.xlane.xlu0 %1453
  %v1455 = vadd.f32 %v1258, %v1259
  %1456 = vadd.xlane.f32.xlu0 %v1455
  %v1457 = vpop.xlane.xlu0 %1456
  %v1458 = vadd.f32 %v1260, %v1261
  %1459 = vadd.xlane.f32.xlu0 %v1458
  %v1460 = vpop.xlane.xlu0 %1459
  %v1461 = vadd.f32 %v1262, %v1263
  %1462 = vadd.xlane.f32.xlu0 %v1461
  %v1463 = vpop.xlane.xlu0 %1462
  %v1464 = vadd.f32 %v1264, %v1265
  %1465 = vadd.xlane.f32.xlu0 %v1464
  %v1466 = vpop.xlane.xlu0 %1465
  %v1467 = vadd.f32 %v1266, %v1267
  %1468 = vadd.xlane.f32.xlu0 %v1467
  %v1469 = vpop.xlane.xlu0 %1468
  %v1470 = vadd.f32 %v1268, %v1269
  %1471 = vadd.xlane.f32.xlu0 %v1470
  %v1472 = vpop.xlane.xlu0 %1471
  %v1473 = vadd.f32 %v1270, %v1271
  %1474 = vadd.xlane.f32.xlu0 %v1473
  %v1475 = vpop.xlane.xlu0 %1474
  %v1476 = vadd.f32 %v1272, %v1273
  %1477 = vadd.xlane.f32.xlu0 %v1476
  %v1478 = vpop.xlane.xlu0 %1477
  %v1479 = vadd.f32 %v1274, %v1275
  %1480 = vadd.xlane.f32.xlu0 %v1479
  %v1481 = vpop.xlane.xlu0 %1480
  %v1482 = vadd.f32 %v1276, %v1277
  %1483 = vadd.xlane.f32.xlu0 %v1482
  %v1484 = vpop.xlane.xlu0 %1483
  %v1485 = vadd.f32 %v1278, %v1279
  %1486 = vadd.xlane.f32.xlu0 %v1485
  %v1487 = vpop.xlane.xlu0 %1486
  %v1488 = vadd.f32 %v1280, %v1281
  %1489 = vadd.xlane.f32.xlu0 %v1488
  %v1490 = vpop.xlane.xlu0 %1489
  %v1491 = vadd.f32 %v1282, %v1283
  %1492 = vadd.xlane.f32.xlu0 %v1491
  %v1493 = vpop.xlane.xlu0 %1492
  %v1494 = vadd.f32 %v1284, %v1285
  %1495 = vadd.xlane.f32.xlu0 %v1494
  %v1496 = vpop.xlane.xlu0 %1495
  %v1497 = vadd.f32 %v1286, %v1287
  %1498 = vadd.xlane.f32.xlu0 %v1497
  %v1499 = vpop.xlane.xlu0 %1498
  %v1500 = vadd.f32 %v1288, %v1289
  %1501 = vadd.xlane.f32.xlu0 %v1500
  %v1502 = vpop.xlane.xlu0 %1501
  %v1503 = vadd.f32 %v1290, %v1291
  %1504 = vadd.xlane.f32.xlu0 %v1503
  %v1505 = vpop.xlane.xlu0 %1504
  %v1506 = vadd.f32 %v1292, %v1293
  %1507 = vadd.xlane.f32.xlu0 %v1506
  %v1508 = vpop.xlane.xlu0 %1507
  %v1509 = vadd.f32 %v1294, %v1295
  %1510 = vadd.xlane.f32.xlu0 %v1509
  %v1511 = vpop.xlane.xlu0 %1510
  %v1512 = vadd.f32 %v1296, %v1297
  %1513 = vadd.xlane.f32.xlu0 %v1512
  %v1514 = vpop.xlane.xlu0 %1513
  %v1515 = vadd.f32 %v1298, %v1299
  %1516 = vadd.xlane.f32.xlu0 %v1515
  %v1517 = vpop.xlane.xlu0 %1516
  %v1518 = vadd.f32 %v1300, %v1301
  %1519 = vadd.xlane.f32.xlu0 %v1518
  %v1520 = vpop.xlane.xlu0 %1519
  %v1521 = vadd.f32 %v1302, %v1303
  %1522 = vadd.xlane.f32.xlu0 %v1521
  %v1523 = vpop.xlane.xlu0 %1522
  %v1524 = vadd.f32 %v1304, %v1305
  %1525 = vadd.xlane.f32.xlu0 %v1524
  %v1526 = vpop.xlane.xlu0 %1525
  %v1527 = vadd.f32 %v1306, %v1307
  %1528 = vadd.xlane.f32.xlu0 %v1527
  %v1529 = vpop.xlane.xlu0 %1528
  %v1530 = vadd.f32 %v1308, %v1309
  %1531 = vadd.xlane.f32.xlu0 %v1530
  %v1532 = vpop.xlane.xlu0 %1531
  %v1533 = vadd.f32 %v1310, %v1311
  %1534 = vadd.xlane.f32.xlu0 %v1533
  %v1535 = vpop.xlane.xlu0 %1534
  %v1536 = vadd.f32 %v1312, %v1313
  %1537 = vadd.xlane.f32.xlu0 %v1536
  %v1538 = vpop.xlane.xlu0 %1537
  %v1539 = vadd.f32 %v1314, %v1315
  %1540 = vadd.xlane.f32.xlu0 %v1539
  %v1541 = vpop.xlane.xlu0 %1540
  %v1542 = vadd.f32 %v1316, %v1317
  %1543 = vadd.xlane.f32.xlu0 %v1542
  %v1544 = vpop.xlane.xlu0 %1543
  %v1545 = vadd.f32 %v1318, %v1319
  %1546 = vadd.xlane.f32.xlu0 %v1545
  %v1547 = vpop.xlane.xlu0 %1546
  %v1548 = vadd.f32 %v1320, %v1321
  %1549 = vadd.xlane.f32.xlu0 %v1548
  %v1550 = vpop.xlane.xlu0 %1549
  %v1551 = vadd.f32 %v1322, %v1323
  %1552 = vadd.xlane.f32.xlu0 %v1551
  %v1553 = vpop.xlane.xlu0 %1552
  %v1554 = vadd.f32 %v1324, %v1325
  %1555 = vadd.xlane.f32.xlu0 %v1554
  %v1556 = vpop.xlane.xlu0 %1555
  %v1557 = vadd.f32 %v1326, %v1327
  %1558 = vadd.xlane.f32.xlu0 %v1557
  %v1559 = vpop.xlane.xlu0 %1558
  %v1560 = vadd.f32 %v1328, %v1329
  %1561 = vadd.xlane.f32.xlu0 %v1560
  %v1562 = vpop.xlane.xlu0 %1561
  %v1563 = vadd.f32 %v1330, %v1331
  %1564 = vadd.xlane.f32.xlu0 %v1563
  %v1565 = vpop.xlane.xlu0 %1564
  %v1566 = vadd.f32 %v1332, %v1333
  %1567 = vadd.xlane.f32.xlu0 %v1566
  %v1568 = vpop.xlane.xlu0 %1567
  %v1569 = vadd.f32 %v1334, %v1335
  %1570 = vadd.xlane.f32.xlu0 %v1569
  %v1571 = vpop.xlane.xlu0 %1570
  %v1572 = vadd.f32 %v1336, %v1337
  %1573 = vadd.xlane.f32.xlu0 %v1572
  %v1574 = vpop.xlane.xlu0 %1573
  %v1575 = vadd.f32 %v1338, %v1339
  %1576 = vadd.xlane.f32.xlu0 %v1575
  %v1577 = vpop.xlane.xlu0 %1576
  %v1578 = vadd.f32 %v1340, %v1341
  %1579 = vadd.xlane.f32.xlu0 %v1578
  %v1580 = vpop.xlane.xlu0 %1579
  %v1581 = vadd.f32 %v1342, %v1343
  %1582 = vadd.xlane.f32.xlu0 %v1581
  %v1583 = vpop.xlane.xlu0 %1582
  %v1584 = vadd.f32 %v1344, %v1345
  %1585 = vadd.xlane.f32.xlu0 %v1584
  %v1586 = vpop.xlane.xlu0 %1585
  %v1587 = vadd.f32 %v1346, %v1347
  %1588 = vadd.xlane.f32.xlu0 %v1587
  %v1589 = vpop.xlane.xlu0 %1588
  %v1590 = vadd.f32 %v1348, %v1349
  %1591 = vadd.xlane.f32.xlu0 %v1590
  %v1592 = vpop.xlane.xlu0 %1591
  %v1593 = vadd.f32 %v1350, %v1351
  %1594 = vadd.xlane.f32.xlu0 %v1593
  %v1595 = vpop.xlane.xlu0 %1594
  %v1596 = vadd.f32 %v1352, %v1353
  %1597 = vadd.xlane.f32.xlu0 %v1596
  %v1598 = vpop.xlane.xlu0 %1597
  %v1599 = vadd.f32 %v1354, %v1355
  %1600 = vadd.xlane.f32.xlu0 %v1599
  %v1601 = vpop.xlane.xlu0 %1600
  %v1602 = vadd.f32 %v1356, %v1357
  %1603 = vadd.xlane.f32.xlu0 %v1602
  %v1604 = vpop.xlane.xlu0 %1603
  %v1605 = vadd.f32 %v1358, %v1359
  %1606 = vadd.xlane.f32.xlu0 %v1605
  %v1607 = vpop.xlane.xlu0 %1606
  %v1608 = vadd.f32 %v1360, %v1361
  %1609 = vadd.xlane.f32.xlu0 %v1608
  %v1610 = vpop.xlane.xlu0 %1609
  %v1611 = vadd.f32 %v1362, %v1363
  %1612 = vadd.xlane.f32.xlu0 %v1611
  %v1613 = vpop.xlane.xlu0 %1612
  %v1614 = vadd.f32 %v1364, %v1365
  %1615 = vadd.xlane.f32.xlu0 %v1614
  %v1616 = vpop.xlane.xlu0 %1615
  %v1617 = vadd.f32 %v1366, %v1367
  %1618 = vadd.xlane.f32.xlu0 %v1617
  %v1619 = vpop.xlane.xlu0 %1618
  %v1620 = vadd.f32 %v1368, %v1369
  %1621 = vadd.xlane.f32.xlu0 %v1620
  %v1622 = vpop.xlane.xlu0 %1621
  %v1623 = vadd.f32 %v1370, %v1371
  %1624 = vadd.xlane.f32.xlu0 %v1623
  %v1625 = vpop.xlane.xlu0 %1624
  %v1626 = vadd.f32 %v1372, %v1373
  %1627 = vadd.xlane.f32.xlu0 %v1626
  %v1628 = vpop.xlane.xlu0 %1627
  %v1629 = vadd.f32 %v1374, %v1375
  %1630 = vadd.xlane.f32.xlu0 %v1629
  %v1631 = vpop.xlane.xlu0 %1630
  %v1632 = vadd.f32 %v1376, %v1377
  %1633 = vadd.xlane.f32.xlu0 %v1632
  %v1634 = vpop.xlane.xlu0 %1633
  %v1635 = vadd.f32 %v1378, %v1379
  %1636 = vadd.xlane.f32.xlu0 %v1635
  %v1637 = vpop.xlane.xlu0 %1636
  %v1638 = vadd.f32 %v1380, %v1381
  %1639 = vadd.xlane.f32.xlu0 %v1638
  %v1640 = vpop.xlane.xlu0 %1639
  %v1641 = vadd.f32 %v1382, %v1383
  %1642 = vadd.xlane.f32.xlu0 %v1641
  %v1643 = vpop.xlane.xlu0 %1642
  %v1644 = vadd.f32 %v1384, %v1385
  %1645 = vadd.xlane.f32.xlu0 %v1644
  %v1646 = vpop.xlane.xlu0 %1645
  %v1647 = vadd.f32 %v1386, %v1387
  %1648 = vadd.xlane.f32.xlu0 %v1647
  %v1649 = vpop.xlane.xlu0 %1648
  %v1650 = vadd.f32 %v1388, %v1389
  %1651 = vadd.xlane.f32.xlu0 %v1650
  %v1652 = vpop.xlane.xlu0 %1651
  %v1653 = vadd.f32 %v1390, %v1391
  %1654 = vadd.xlane.f32.xlu0 %v1653
  %v1655 = vpop.xlane.xlu0 %1654
  %v1656 = vadd.f32 %v1392, %v1393
  %1657 = vadd.xlane.f32.xlu0 %v1656
  %v1658 = vpop.xlane.xlu0 %1657
  %v1659 = vadd.f32 %v1394, %v1395
  %1660 = vadd.xlane.f32.xlu0 %v1659
  %v1661 = vpop.xlane.xlu0 %1660
  %v1662 = vadd.f32 %v1396, %v1397
  %1663 = vadd.xlane.f32.xlu0 %v1662
  %v1664 = vpop.xlane.xlu0 %1663
  %v1665 = vadd.f32 %v1398, %v1399
  %1666 = vadd.xlane.f32.xlu0 %v1665
  %v1667 = vpop.xlane.xlu0 %1666
  %v1668 = vadd.f32 %v1400, %v1401
  %1669 = vadd.xlane.f32.xlu0 %v1668
  %v1670 = vpop.xlane.xlu0 %1669
  %v1671 = vadd.f32 %v1402, %v1403
  %1672 = vadd.xlane.f32.xlu0 %v1671
  %v1673 = vpop.xlane.xlu0 %1672
  %v1674 = vadd.f32 %v1404, %v1405
  %1675 = vadd.xlane.f32.xlu0 %v1674
  %v1676 = vpop.xlane.xlu0 %1675
  %v1677 = vadd.f32 %v1406, %v1407
  %1678 = vadd.xlane.f32.xlu0 %v1677
  %v1679 = vpop.xlane.xlu0 %1678
  %v1680 = vadd.f32 %v1408, %v1409
  %1681 = vadd.xlane.f32.xlu0 %v1680
  %v1682 = vpop.xlane.xlu0 %1681
  %v1683 = vadd.f32 %v1410, %v1411
  %1684 = vadd.xlane.f32.xlu0 %v1683
  %v1685 = vpop.xlane.xlu0 %1684
  %v1686 = vadd.f32 %v1412, %v1413
  %1687 = vadd.xlane.f32.xlu0 %v1686
  %v1688 = vpop.xlane.xlu0 %1687
  %v1689 = vadd.f32 %v1414, %v1415
  %1690 = vadd.xlane.f32.xlu0 %v1689
  %v1691 = vpop.xlane.xlu0 %1690
  %v1692 = vadd.f32 %v1416, %v1417
  %1693 = vadd.xlane.f32.xlu0 %v1692
  %v1694 = vpop.xlane.xlu0 %1693
  %v1695 = vadd.f32 %v1418, %v1419
  %1696 = vadd.xlane.f32.xlu0 %v1695
  %v1697 = vpop.xlane.xlu0 %1696
  %v1698 = vadd.f32 %v1420, %v1421
  %1699 = vadd.xlane.f32.xlu0 %v1698
  %v1700 = vpop.xlane.xlu0 %1699
  %v1701 = vadd.f32 %v1422, %v1423
  %1702 = vadd.xlane.f32.xlu0 %v1701
  %v1703 = vpop.xlane.xlu0 %1702
  %v1704 = vadd.f32 %v1424, %v1425
  %1705 = vadd.xlane.f32.xlu0 %v1704
  %v1706 = vpop.xlane.xlu0 %1705
  %v1707 = vadd.f32 %v1426, %v1427
  %1708 = vadd.xlane.f32.xlu0 %v1707
  %v1709 = vpop.xlane.xlu0 %1708
  %v1710 = vadd.f32 %v1428, %v1429
  %1711 = vadd.xlane.f32.xlu0 %v1710
  %v1712 = vpop.xlane.xlu0 %1711
  %v1713 = vadd.f32 %v1430, %v1431
  %1714 = vadd.xlane.f32.xlu0 %v1713
  %v1715 = vpop.xlane.xlu0 %1714
  %v1716 = vadd.f32 %v1432, %v1433
  %1717 = vadd.xlane.f32.xlu0 %v1716
  %v1718 = vpop.xlane.xlu0 %1717
  %v1719 = vadd.f32 %v1434, %v1435
  %1720 = vadd.xlane.f32.xlu0 %v1719
  %v1721 = vpop.xlane.xlu0 %1720
  %v1722 = vadd.f32 %v1436, %v1437
  %1723 = vadd.xlane.f32.xlu0 %v1722
  %v1724 = vpop.xlane.xlu0 %1723
  %v1725 = vadd.f32 %v1438, %v1439
  %1726 = vadd.xlane.f32.xlu0 %v1725
  %v1727 = vpop.xlane.xlu0 %1726
  %v1728 = vmul.f32 %v962, 0.0051020407
  %v1729 = vmul.f32 %v965, 0.0051020407
  %v1730 = vmul.f32 %v968, 0.0051020407
  %v1731 = vmul.f32 %v971, 0.0051020407
  %v1732 = vmul.f32 %v974, 0.0051020407
  %v1733 = vmul.f32 %v977, 0.0051020407
  %v1734 = vmul.f32 %v980, 0.0051020407
  %v1735 = vmul.f32 %v983, 0.0051020407
  %v1736 = vmul.f32 %v986, 0.0051020407
  %v1737 = vmul.f32 %v989, 0.0051020407
  %v1738 = vmul.f32 %v992, 0.0051020407
  %v1739 = vmul.f32 %v995, 0.0051020407
  %v1740 = vmul.f32 %v998, 0.0051020407
  %v1741 = vmul.f32 %v1001, 0.0051020407
  %v1742 = vmul.f32 %v1004, 0.0051020407
  %v1743 = vmul.f32 %v1007, 0.0051020407
  %v1744 = vmul.f32 %v1010, 0.0051020407
  %v1745 = vmul.f32 %v1013, 0.0051020407
  %v1746 = vmul.f32 %v1016, 0.0051020407
  %v1747 = vmul.f32 %v1019, 0.0051020407
  %v1748 = vmul.f32 %v1022, 0.0051020407
  %v1749 = vmul.f32 %v1025, 0.0051020407
  %v1750 = vmul.f32 %v1028, 0.0051020407
  %v1751 = vmul.f32 %v1031, 0.0051020407
  %v1752 = vmul.f32 %v1034, 0.0051020407
  %v1753 = vmul.f32 %v1037, 0.0051020407
  %v1754 = vmul.f32 %v1040, 0.0051020407
  %v1755 = vmul.f32 %v1043, 0.0051020407
  %v1756 = vmul.f32 %v1046, 0.0051020407
  %v1757 = vmul.f32 %v1049, 0.0051020407
  %v1758 = vmul.f32 %v1052, 0.0051020407
  %v1759 = vmul.f32 %v1055, 0.0051020407
  %v1760 = vmul.f32 %v1058, 0.0051020407
  %v1761 = vmul.f32 %v1061, 0.0051020407
  %v1762 = vmul.f32 %v1064, 0.0051020407
  %v1763 = vmul.f32 %v1067, 0.0051020407
  %v1764 = vmul.f32 %v1070, 0.0051020407
  %v1765 = vmul.f32 %v1073, 0.0051020407
  %v1766 = vmul.f32 %v1076, 0.0051020407
  %v1767 = vmul.f32 %v1079, 0.0051020407
  %v1768 = vmul.f32 %v1082, 0.0051020407
  %v1769 = vmul.f32 %v1085, 0.0051020407
  %v1770 = vmul.f32 %v1088, 0.0051020407
  %v1771 = vmul.f32 %v1091, 0.0051020407
  %v1772 = vmul.f32 %v1094, 0.0051020407
  %v1773 = vmul.f32 %v1097, 0.0051020407
  %v1774 = vmul.f32 %v1100, 0.0051020407
  %v1775 = vmul.f32 %v1103, 0.0051020407
  %v1776 = vmul.f32 %v1106, 0.0051020407
  %v1777 = vmul.f32 %v1109, 0.0051020407
  %v1778 = vmul.f32 %v1112, 0.0051020407
  %v1779 = vmul.f32 %v1115, 0.0051020407
  %v1780 = vmul.f32 %v1118, 0.0051020407
  %v1781 = vmul.f32 %v1121, 0.0051020407
  %v1782 = vmul.f32 %v1124, 0.0051020407
  %v1783 = vmul.f32 %v1127, 0.0051020407
  %v1784 = vmul.f32 %v1130, 0.0051020407
  %v1785 = vmul.f32 %v1133, 0.0051020407
  %v1786 = vmul.f32 %v1136, 0.0051020407
  %v1787 = vmul.f32 %v1139, 0.0051020407
  %v1788 = vmul.f32 %v1142, 0.0051020407
  %v1789 = vmul.f32 %v1145, 0.0051020407
  %v1790 = vmul.f32 %v1148, 0.0051020407
  %v1791 = vmul.f32 %v1151, 0.0051020407
  %v1792 = vmul.f32 %v1154, 0.0051020407
  %v1793 = vmul.f32 %v1157, 0.0051020407
  %v1794 = vmul.f32 %v1160, 0.0051020407
  %v1795 = vmul.f32 %v1163, 0.0051020407
  %v1796 = vmul.f32 %v1166, 0.0051020407
  %v1797 = vmul.f32 %v1169, 0.0051020407
  %v1798 = vmul.f32 %v1172, 0.0051020407
  %v1799 = vmul.f32 %v1175, 0.0051020407
  %v1800 = vmul.f32 %v1178, 0.0051020407
  %v1801 = vmul.f32 %v1181, 0.0051020407
  %v1802 = vmul.f32 %v1184, 0.0051020407
  %v1803 = vmul.f32 %v1187, 0.0051020407
  %v1804 = vmul.f32 %v1190, 0.0051020407
  %v1805 = vmul.f32 %v1193, 0.0051020407
  %v1806 = vmul.f32 %v1196, 0.0051020407
  %v1807 = vmul.f32 %v1199, 0.0051020407
  %v1808 = vmul.f32 %v1202, 0.0051020407
  %v1809 = vmul.f32 %v1205, 0.0051020407
  %v1810 = vmul.f32 %v1208, 0.0051020407
  %v1811 = vmul.f32 %v1211, 0.0051020407
  %v1812 = vmul.f32 %v1214, 0.0051020407
  %v1813 = vmul.f32 %v1217, 0.0051020407
  %v1814 = vmul.f32 %v1220, 0.0051020407
  %v1815 = vmul.f32 %v1223, 0.0051020407
  %v1816 = vmul.f32 %v1226, 0.0051020407
  %v1817 = vmul.f32 %v1229, 0.0051020407
  %v1818 = vmul.f32 %v1232, 0.0051020407
  %v1819 = vmul.f32 %v1235, 0.0051020407
  %v1820 = vmul.f32 %v1238, 0.0051020407
  %v1821 = vmul.f32 %v1241, 0.0051020407
  %v1822 = vmul.f32 %v1244, 0.0051020407
  %v1823 = vmul.f32 %v1247, 0.0051020407
  %v1824 = vmul.f32 %v1442, 0.0051020407
  %v1825 = vmul.f32 %v1445, 0.0051020407
  %v1826 = vmul.f32 %v1448, 0.0051020407
  %v1827 = vmul.f32 %v1451, 0.0051020407
  %v1828 = vmul.f32 %v1454, 0.0051020407
  %v1829 = vmul.f32 %v1457, 0.0051020407
  %v1830 = vmul.f32 %v1460, 0.0051020407
  %v1831 = vmul.f32 %v1463, 0.0051020407
  %v1832 = vmul.f32 %v1466, 0.0051020407
  %v1833 = vmul.f32 %v1469, 0.0051020407
  %v1834 = vmul.f32 %v1472, 0.0051020407
  %v1835 = vmul.f32 %v1475, 0.0051020407
  %v1836 = vmul.f32 %v1478, 0.0051020407
  %v1837 = vmul.f32 %v1481, 0.0051020407
  %v1838 = vmul.f32 %v1484, 0.0051020407
  %v1839 = vmul.f32 %v1487, 0.0051020407
  %v1840 = vmul.f32 %v1490, 0.0051020407
  %v1841 = vmul.f32 %v1493, 0.0051020407
  %v1842 = vmul.f32 %v1496, 0.0051020407
  %v1843 = vmul.f32 %v1499, 0.0051020407
  %v1844 = vmul.f32 %v1502, 0.0051020407
  %v1845 = vmul.f32 %v1505, 0.0051020407
  %v1846 = vmul.f32 %v1508, 0.0051020407
  %v1847 = vmul.f32 %v1511, 0.0051020407
  %v1848 = vmul.f32 %v1514, 0.0051020407
  %v1849 = vmul.f32 %v1517, 0.0051020407
  %v1850 = vmul.f32 %v1520, 0.0051020407
  %v1851 = vmul.f32 %v1523, 0.0051020407
  %v1852 = vmul.f32 %v1526, 0.0051020407
  %v1853 = vmul.f32 %v1529, 0.0051020407
  %v1854 = vmul.f32 %v1532, 0.0051020407
  %v1855 = vmul.f32 %v1535, 0.0051020407
  %v1856 = vmul.f32 %v1538, 0.0051020407
  %v1857 = vmul.f32 %v1541, 0.0051020407
  %v1858 = vmul.f32 %v1544, 0.0051020407
  %v1859 = vmul.f32 %v1547, 0.0051020407
  %v1860 = vmul.f32 %v1550, 0.0051020407
  %v1861 = vmul.f32 %v1553, 0.0051020407
  %v1862 = vmul.f32 %v1556, 0.0051020407
  %v1863 = vmul.f32 %v1559, 0.0051020407
  %v1864 = vmul.f32 %v1562, 0.0051020407
  %v1865 = vmul.f32 %v1565, 0.0051020407
  %v1866 = vmul.f32 %v1568, 0.0051020407
  %v1867 = vmul.f32 %v1571, 0.0051020407
  %v1868 = vmul.f32 %v1574, 0.0051020407
  %v1869 = vmul.f32 %v1577, 0.0051020407
  %v1870 = vmul.f32 %v1580, 0.0051020407
  %v1871 = vmul.f32 %v1583, 0.0051020407
  %v1872 = vmul.f32 %v1586, 0.0051020407
  %v1873 = vmul.f32 %v1589, 0.0051020407
  %v1874 = vmul.f32 %v1592, 0.0051020407
  %v1875 = vmul.f32 %v1595, 0.0051020407
  %v1876 = vmul.f32 %v1598, 0.0051020407
  %v1877 = vmul.f32 %v1601, 0.0051020407
  %v1878 = vmul.f32 %v1604, 0.0051020407
  %v1879 = vmul.f32 %v1607, 0.0051020407
  %v1880 = vmul.f32 %v1610, 0.0051020407
  %v1881 = vmul.f32 %v1613, 0.0051020407
  %v1882 = vmul.f32 %v1616, 0.0051020407
  %v1883 = vmul.f32 %v1619, 0.0051020407
  %v1884 = vmul.f32 %v1622, 0.0051020407
  %v1885 = vmul.f32 %v1625, 0.0051020407
  %v1886 = vmul.f32 %v1628, 0.0051020407
  %v1887 = vmul.f32 %v1631, 0.0051020407
  %v1888 = vmul.f32 %v1634, 0.0051020407
  %v1889 = vmul.f32 %v1637, 0.0051020407
  %v1890 = vmul.f32 %v1640, 0.0051020407
  %v1891 = vmul.f32 %v1643, 0.0051020407
  %v1892 = vmul.f32 %v1646, 0.0051020407
  %v1893 = vmul.f32 %v1649, 0.0051020407
  %v1894 = vmul.f32 %v1652, 0.0051020407
  %v1895 = vmul.f32 %v1655, 0.0051020407
  %v1896 = vmul.f32 %v1658, 0.0051020407
  %v1897 = vmul.f32 %v1661, 0.0051020407
  %v1898 = vmul.f32 %v1664, 0.0051020407
  %v1899 = vmul.f32 %v1667, 0.0051020407
  %v1900 = vmul.f32 %v1670, 0.0051020407
  %v1901 = vmul.f32 %v1673, 0.0051020407
  %v1902 = vmul.f32 %v1676, 0.0051020407
  %v1903 = vmul.f32 %v1679, 0.0051020407
  %v1904 = vmul.f32 %v1682, 0.0051020407
  %v1905 = vmul.f32 %v1685, 0.0051020407
  %v1906 = vmul.f32 %v1688, 0.0051020407
  %v1907 = vmul.f32 %v1691, 0.0051020407
  %v1908 = vmul.f32 %v1694, 0.0051020407
  %v1909 = vmul.f32 %v1697, 0.0051020407
  %v1910 = vmul.f32 %v1700, 0.0051020407
  %v1911 = vmul.f32 %v1703, 0.0051020407
  %v1912 = vmul.f32 %v1706, 0.0051020407
  %v1913 = vmul.f32 %v1709, 0.0051020407
  %v1914 = vmul.f32 %v1712, 0.0051020407
  %v1915 = vmul.f32 %v1715, 0.0051020407
  %v1916 = vmul.f32 %v1718, 0.0051020407
  %v1917 = vmul.f32 %v1721, 0.0051020407
  %v1918 = vmul.f32 %v1724, 0.0051020407
  %v1919 = vmul.f32 %v1727, 0.0051020407
  %v1920 = vmul.f32 %v1728, %v1728
  %v1921 = vmul.f32 %v1729, %v1729
  %v1922 = vmul.f32 %v1730, %v1730
  %v1923 = vmul.f32 %v1731, %v1731
  %v1924 = vmul.f32 %v1732, %v1732
  %v1925 = vmul.f32 %v1733, %v1733
  %v1926 = vmul.f32 %v1734, %v1734
  %v1927 = vmul.f32 %v1735, %v1735
  %v1928 = vmul.f32 %v1736, %v1736
  %v1929 = vmul.f32 %v1737, %v1737
  %v1930 = vmul.f32 %v1738, %v1738
  %v1931 = vmul.f32 %v1739, %v1739
  %v1932 = vmul.f32 %v1740, %v1740
  %v1933 = vmul.f32 %v1741, %v1741
  %v1934 = vmul.f32 %v1742, %v1742
  %v1935 = vmul.f32 %v1743, %v1743
  %v1936 = vmul.f32 %v1744, %v1744
  %v1937 = vmul.f32 %v1745, %v1745
  %v1938 = vmul.f32 %v1746, %v1746
  %v1939 = vmul.f32 %v1747, %v1747
  %v1940 = vmul.f32 %v1748, %v1748
  %v1941 = vmul.f32 %v1749, %v1749
  %v1942 = vmul.f32 %v1750, %v1750
  %v1943 = vmul.f32 %v1751, %v1751
  %v1944 = vmul.f32 %v1752, %v1752
  %v1945 = vmul.f32 %v1753, %v1753
  %v1946 = vmul.f32 %v1754, %v1754
  %v1947 = vmul.f32 %v1755, %v1755
  %v1948 = vmul.f32 %v1756, %v1756
  %v1949 = vmul.f32 %v1757, %v1757
  %v1950 = vmul.f32 %v1758, %v1758
  %v1951 = vmul.f32 %v1759, %v1759
  %v1952 = vmul.f32 %v1760, %v1760
  %v1953 = vmul.f32 %v1761, %v1761
  %v1954 = vmul.f32 %v1762, %v1762
  %v1955 = vmul.f32 %v1763, %v1763
  %v1956 = vmul.f32 %v1764, %v1764
  %v1957 = vmul.f32 %v1765, %v1765
  %v1958 = vmul.f32 %v1766, %v1766
  %v1959 = vmul.f32 %v1767, %v1767
  %v1960 = vmul.f32 %v1768, %v1768
  %v1961 = vmul.f32 %v1769, %v1769
  %v1962 = vmul.f32 %v1770, %v1770
  %v1963 = vmul.f32 %v1771, %v1771
  %v1964 = vmul.f32 %v1772, %v1772
  %v1965 = vmul.f32 %v1773, %v1773
  %v1966 = vmul.f32 %v1774, %v1774
  %v1967 = vmul.f32 %v1775, %v1775
  %v1968 = vmul.f32 %v1776, %v1776
  %v1969 = vmul.f32 %v1777, %v1777
  %v1970 = vmul.f32 %v1778, %v1778
  %v1971 = vmul.f32 %v1779, %v1779
  %v1972 = vmul.f32 %v1780, %v1780
  %v1973 = vmul.f32 %v1781, %v1781
  %v1974 = vmul.f32 %v1782, %v1782
  %v1975 = vmul.f32 %v1783, %v1783
  %v1976 = vmul.f32 %v1784, %v1784
  %v1977 = vmul.f32 %v1785, %v1785
  %v1978 = vmul.f32 %v1786, %v1786
  %v1979 = vmul.f32 %v1787, %v1787
  %v1980 = vmul.f32 %v1788, %v1788
  %v1981 = vmul.f32 %v1789, %v1789
  %v1982 = vmul.f32 %v1790, %v1790
  %v1983 = vmul.f32 %v1791, %v1791
  %v1984 = vmul.f32 %v1792, %v1792
  %v1985 = vmul.f32 %v1793, %v1793
  %v1986 = vmul.f32 %v1794, %v1794
  %v1987 = vmul.f32 %v1795, %v1795
  %v1988 = vmul.f32 %v1796, %v1796
  %v1989 = vmul.f32 %v1797, %v1797
  %v1990 = vmul.f32 %v1798, %v1798
  %v1991 = vmul.f32 %v1799, %v1799
  %v1992 = vmul.f32 %v1800, %v1800
  %v1993 = vmul.f32 %v1801, %v1801
  %v1994 = vmul.f32 %v1802, %v1802
  %v1995 = vmul.f32 %v1803, %v1803
  %v1996 = vmul.f32 %v1804, %v1804
  %v1997 = vmul.f32 %v1805, %v1805
  %v1998 = vmul.f32 %v1806, %v1806
  %v1999 = vmul.f32 %v1807, %v1807
  %v2000 = vmul.f32 %v1808, %v1808
  %v2001 = vmul.f32 %v1809, %v1809
  %v2002 = vmul.f32 %v1810, %v1810
  %v2003 = vmul.f32 %v1811, %v1811
  %v2004 = vmul.f32 %v1812, %v1812
  %v2005 = vmul.f32 %v1813, %v1813
  %v2006 = vmul.f32 %v1814, %v1814
  %v2007 = vmul.f32 %v1815, %v1815
  %v2008 = vmul.f32 %v1816, %v1816
  %v2009 = vmul.f32 %v1817, %v1817
  %v2010 = vmul.f32 %v1818, %v1818
  %v2011 = vmul.f32 %v1819, %v1819
  %v2012 = vmul.f32 %v1820, %v1820
  %v2013 = vmul.f32 %v1821, %v1821
  %v2014 = vmul.f32 %v1822, %v1822
  %v2015 = vmul.f32 %v1823, %v1823
  %v2016 = vsub.f32 %v1824, %v1920
  %v2017 = vsub.f32 %v1825, %v1921
  %v2018 = vsub.f32 %v1826, %v1922
  %v2019 = vsub.f32 %v1827, %v1923
  %v2020 = vsub.f32 %v1828, %v1924
  %v2021 = vsub.f32 %v1829, %v1925
  %v2022 = vsub.f32 %v1830, %v1926
  %v2023 = vsub.f32 %v1831, %v1927
  %v2024 = vsub.f32 %v1832, %v1928
  %v2025 = vsub.f32 %v1833, %v1929
  %v2026 = vsub.f32 %v1834, %v1930
  %v2027 = vsub.f32 %v1835, %v1931
  %v2028 = vsub.f32 %v1836, %v1932
  %v2029 = vsub.f32 %v1837, %v1933
  %v2030 = vsub.f32 %v1838, %v1934
  %v2031 = vsub.f32 %v1839, %v1935
  %v2032 = vsub.f32 %v1840, %v1936
  %v2033 = vsub.f32 %v1841, %v1937
  %v2034 = vsub.f32 %v1842, %v1938
  %v2035 = vsub.f32 %v1843, %v1939
  %v2036 = vsub.f32 %v1844, %v1940
  %v2037 = vsub.f32 %v1845, %v1941
  %v2038 = vsub.f32 %v1846, %v1942
  %v2039 = vsub.f32 %v1847, %v1943
  %v2040 = vsub.f32 %v1848, %v1944
  %v2041 = vsub.f32 %v1849, %v1945
  %v2042 = vsub.f32 %v1850, %v1946
  %v2043 = vsub.f32 %v1851, %v1947
  %v2044 = vsub.f32 %v1852, %v1948
  %v2045 = vsub.f32 %v1853, %v1949
  %v2046 = vsub.f32 %v1854, %v1950
  %v2047 = vsub.f32 %v1855, %v1951
  %v2048 = vsub.f32 %v1856, %v1952
  %v2049 = vsub.f32 %v1857, %v1953
  %v2050 = vsub.f32 %v1858, %v1954
  %v2051 = vsub.f32 %v1859, %v1955
  %v2052 = vsub.f32 %v1860, %v1956
  %v2053 = vsub.f32 %v1861, %v1957
  %v2054 = vsub.f32 %v1862, %v1958
  %v2055 = vsub.f32 %v1863, %v1959
  %v2056 = vsub.f32 %v1864, %v1960
  %v2057 = vsub.f32 %v1865, %v1961
  %v2058 = vsub.f32 %v1866, %v1962
  %v2059 = vsub.f32 %v1867, %v1963
  %v2060 = vsub.f32 %v1868, %v1964
  %v2061 = vsub.f32 %v1869, %v1965
  %v2062 = vsub.f32 %v1870, %v1966
  %v2063 = vsub.f32 %v1871, %v1967
  %v2064 = vsub.f32 %v1872, %v1968
  %v2065 = vsub.f32 %v1873, %v1969
  %v2066 = vsub.f32 %v1874, %v1970
  %v2067 = vsub.f32 %v1875, %v1971
  %v2068 = vsub.f32 %v1876, %v1972
  %v2069 = vsub.f32 %v1877, %v1973
  %v2070 = vsub.f32 %v1878, %v1974
  %v2071 = vsub.f32 %v1879, %v1975
  %v2072 = vsub.f32 %v1880, %v1976
  %v2073 = vsub.f32 %v1881, %v1977
  %v2074 = vsub.f32 %v1882, %v1978
  %v2075 = vsub.f32 %v1883, %v1979
  %v2076 = vsub.f32 %v1884, %v1980
  %v2077 = vsub.f32 %v1885, %v1981
  %v2078 = vsub.f32 %v1886, %v1982
  %v2079 = vsub.f32 %v1887, %v1983
  %v2080 = vsub.f32 %v1888, %v1984
  %v2081 = vsub.f32 %v1889, %v1985
  %v2082 = vsub.f32 %v1890, %v1986
  %v2083 = vsub.f32 %v1891, %v1987
  %v2084 = vsub.f32 %v1892, %v1988
  %v2085 = vsub.f32 %v1893, %v1989
  %v2086 = vsub.f32 %v1894, %v1990
  %v2087 = vsub.f32 %v1895, %v1991
  %v2088 = vsub.f32 %v1896, %v1992
  %v2089 = vsub.f32 %v1897, %v1993
  %v2090 = vsub.f32 %v1898, %v1994
  %v2091 = vsub.f32 %v1899, %v1995
  %v2092 = vsub.f32 %v1900, %v1996
  %v2093 = vsub.f32 %v1901, %v1997
  %v2094 = vsub.f32 %v1902, %v1998
  %v2095 = vsub.f32 %v1903, %v1999
  %v2096 = vsub.f32 %v1904, %v2000
  %v2097 = vsub.f32 %v1905, %v2001
  %v2098 = vsub.f32 %v1906, %v2002
  %v2099 = vsub.f32 %v1907, %v2003
  %v2100 = vsub.f32 %v1908, %v2004
  %v2101 = vsub.f32 %v1909, %v2005
  %v2102 = vsub.f32 %v1910, %v2006
  %v2103 = vsub.f32 %v1911, %v2007
  %v2104 = vsub.f32 %v1912, %v2008
  %v2105 = vsub.f32 %v1913, %v2009
  %v2106 = vsub.f32 %v1914, %v2010
  %v2107 = vsub.f32 %v1915, %v2011
  %v2108 = vsub.f32 %v1916, %v2012
  %v2109 = vsub.f32 %v1917, %v2013
  %v2110 = vsub.f32 %v1918, %v2014
  %v2111 = vsub.f32 %v1919, %v2015
  %v2112 = vmax.f32 %v2016, 0.0
  %v2113 = vmax.f32 %v2017, 0.0
  %v2114 = vmax.f32 %v2018, 0.0
  %v2115 = vmax.f32 %v2019, 0.0
  %v2116 = vmax.f32 %v2020, 0.0
  %v2117 = vmax.f32 %v2021, 0.0
  %v2118 = vmax.f32 %v2022, 0.0
  %v2119 = vmax.f32 %v2023, 0.0
  %v2120 = vmax.f32 %v2024, 0.0
  %v2121 = vmax.f32 %v2025, 0.0
  %v2122 = vmax.f32 %v2026, 0.0
  %v2123 = vmax.f32 %v2027, 0.0
  %v2124 = vmax.f32 %v2028, 0.0
  %v2125 = vmax.f32 %v2029, 0.0
  %v2126 = vmax.f32 %v2030, 0.0
  %v2127 = vmax.f32 %v2031, 0.0
  %v2128 = vmax.f32 %v2032, 0.0
  %v2129 = vmax.f32 %v2033, 0.0
  %v2130 = vmax.f32 %v2034, 0.0
  %v2131 = vmax.f32 %v2035, 0.0
  %v2132 = vmax.f32 %v2036, 0.0
  %v2133 = vmax.f32 %v2037, 0.0
  %v2134 = vmax.f32 %v2038, 0.0
  %v2135 = vmax.f32 %v2039, 0.0
  %v2136 = vmax.f32 %v2040, 0.0
  %v2137 = vmax.f32 %v2041, 0.0
  %v2138 = vmax.f32 %v2042, 0.0
  %v2139 = vmax.f32 %v2043, 0.0
  %v2140 = vmax.f32 %v2044, 0.0
  %v2141 = vmax.f32 %v2045, 0.0
  %v2142 = vmax.f32 %v2046, 0.0
  %v2143 = vmax.f32 %v2047, 0.0
  %v2144 = vmax.f32 %v2048, 0.0
  %v2145 = vmax.f32 %v2049, 0.0
  %v2146 = vmax.f32 %v2050, 0.0
  %v2147 = vmax.f32 %v2051, 0.0
  %v2148 = vmax.f32 %v2052, 0.0
  %v2149 = vmax.f32 %v2053, 0.0
  %v2150 = vmax.f32 %v2054, 0.0
  %v2151 = vmax.f32 %v2055, 0.0
  %v2152 = vmax.f32 %v2056, 0.0
  %v2153 = vmax.f32 %v2057, 0.0
  %v2154 = vmax.f32 %v2058, 0.0
  %v2155 = vmax.f32 %v2059, 0.0
  %v2156 = vmax.f32 %v2060, 0.0
  %v2157 = vmax.f32 %v2061, 0.0
  %v2158 = vmax.f32 %v2062, 0.0
  %v2159 = vmax.f32 %v2063, 0.0
  %v2160 = vmax.f32 %v2064, 0.0
  %v2161 = vmax.f32 %v2065, 0.0
  %v2162 = vmax.f32 %v2066, 0.0
  %v2163 = vmax.f32 %v2067, 0.0
  %v2164 = vmax.f32 %v2068, 0.0
  %v2165 = vmax.f32 %v2069, 0.0
  %v2166 = vmax.f32 %v2070, 0.0
  %v2167 = vmax.f32 %v2071, 0.0
  %v2168 = vmax.f32 %v2072, 0.0
  %v2169 = vmax.f32 %v2073, 0.0
  %v2170 = vmax.f32 %v2074, 0.0
  %v2171 = vmax.f32 %v2075, 0.0
  %v2172 = vmax.f32 %v2076, 0.0
  %v2173 = vmax.f32 %v2077, 0.0
  %v2174 = vmax.f32 %v2078, 0.0
  %v2175 = vmax.f32 %v2079, 0.0
  %v2176 = vmax.f32 %v2080, 0.0
  %v2177 = vmax.f32 %v2081, 0.0
  %v2178 = vmax.f32 %v2082, 0.0
  %v2179 = vmax.f32 %v2083, 0.0
  %v2180 = vmax.f32 %v2084, 0.0
  %v2181 = vmax.f32 %v2085, 0.0
  %v2182 = vmax.f32 %v2086, 0.0
  %v2183 = vmax.f32 %v2087, 0.0
  %v2184 = vmax.f32 %v2088, 0.0
  %v2185 = vmax.f32 %v2089, 0.0
  %v2186 = vmax.f32 %v2090, 0.0
  %v2187 = vmax.f32 %v2091, 0.0
  %v2188 = vmax.f32 %v2092, 0.0
  %v2189 = vmax.f32 %v2093, 0.0
  %v2190 = vmax.f32 %v2094, 0.0
  %v2191 = vmax.f32 %v2095, 0.0
  %v2192 = vmax.f32 %v2096, 0.0
  %v2193 = vmax.f32 %v2097, 0.0
  %v2194 = vmax.f32 %v2098, 0.0
  %v2195 = vmax.f32 %v2099, 0.0
  %v2196 = vmax.f32 %v2100, 0.0
  %v2197 = vmax.f32 %v2101, 0.0
  %v2198 = vmax.f32 %v2102, 0.0
  %v2199 = vmax.f32 %v2103, 0.0
  %v2200 = vmax.f32 %v2104, 0.0
  %v2201 = vmax.f32 %v2105, 0.0
  %v2202 = vmax.f32 %v2106, 0.0
  %v2203 = vmax.f32 %v2107, 0.0
  %v2204 = vmax.f32 %v2108, 0.0
  %v2205 = vmax.f32 %v2109, 0.0
  %v2206 = vmax.f32 %v2110, 0.0
  %v2207 = vmax.f32 %v2111, 0.0
  %v2208 = vadd.f32 %v2112, 0.001
  %v2209 = vadd.f32 %v2113, 0.001
  %v2210 = vadd.f32 %v2114, 0.001
  %v2211 = vadd.f32 %v2115, 0.001
  %v2212 = vadd.f32 %v2116, 0.001
  %v2213 = vadd.f32 %v2117, 0.001
  %v2214 = vadd.f32 %v2118, 0.001
  %v2215 = vadd.f32 %v2119, 0.001
  %v2216 = vadd.f32 %v2120, 0.001
  %v2217 = vadd.f32 %v2121, 0.001
  %v2218 = vadd.f32 %v2122, 0.001
  %v2219 = vadd.f32 %v2123, 0.001
  %v2220 = vadd.f32 %v2124, 0.001
  %v2221 = vadd.f32 %v2125, 0.001
  %v2222 = vadd.f32 %v2126, 0.001
  %v2223 = vadd.f32 %v2127, 0.001
  %v2224 = vadd.f32 %v2128, 0.001
  %v2225 = vadd.f32 %v2129, 0.001
  %v2226 = vadd.f32 %v2130, 0.001
  %v2227 = vadd.f32 %v2131, 0.001
  %v2228 = vadd.f32 %v2132, 0.001
  %v2229 = vadd.f32 %v2133, 0.001
  %v2230 = vadd.f32 %v2134, 0.001
  %v2231 = vadd.f32 %v2135, 0.001
  %v2232 = vadd.f32 %v2136, 0.001
  %v2233 = vadd.f32 %v2137, 0.001
  %v2234 = vadd.f32 %v2138, 0.001
  %v2235 = vadd.f32 %v2139, 0.001
  %v2236 = vadd.f32 %v2140, 0.001
  %v2237 = vadd.f32 %v2141, 0.001
  %v2238 = vadd.f32 %v2142, 0.001
  %v2239 = vadd.f32 %v2143, 0.001
  %v2240 = vadd.f32 %v2144, 0.001
  %v2241 = vadd.f32 %v2145, 0.001
  %v2242 = vadd.f32 %v2146, 0.001
  %v2243 = vadd.f32 %v2147, 0.001
  %v2244 = vadd.f32 %v2148, 0.001
  %v2245 = vadd.f32 %v2149, 0.001
  %v2246 = vadd.f32 %v2150, 0.001
  %v2247 = vadd.f32 %v2151, 0.001
  %v2248 = vadd.f32 %v2152, 0.001
  %v2249 = vadd.f32 %v2153, 0.001
  %v2250 = vadd.f32 %v2154, 0.001
  %v2251 = vadd.f32 %v2155, 0.001
  %v2252 = vadd.f32 %v2156, 0.001
  %v2253 = vadd.f32 %v2157, 0.001
  %v2254 = vadd.f32 %v2158, 0.001
  %v2255 = vadd.f32 %v2159, 0.001
  %v2256 = vadd.f32 %v2160, 0.001
  %v2257 = vadd.f32 %v2161, 0.001
  %v2258 = vadd.f32 %v2162, 0.001
  %v2259 = vadd.f32 %v2163, 0.001
  %v2260 = vadd.f32 %v2164, 0.001
  %v2261 = vadd.f32 %v2165, 0.001
  %v2262 = vadd.f32 %v2166, 0.001
  %v2263 = vadd.f32 %v2167, 0.001
  %v2264 = vadd.f32 %v2168, 0.001
  %v2265 = vadd.f32 %v2169, 0.001
  %v2266 = vadd.f32 %v2170, 0.001
  %v2267 = vadd.f32 %v2171, 0.001
  %v2268 = vadd.f32 %v2172, 0.001
  %v2269 = vadd.f32 %v2173, 0.001
  %v2270 = vadd.f32 %v2174, 0.001
  %v2271 = vadd.f32 %v2175, 0.001
  %v2272 = vadd.f32 %v2176, 0.001
  %v2273 = vadd.f32 %v2177, 0.001
  %v2274 = vadd.f32 %v2178, 0.001
  %v2275 = vadd.f32 %v2179, 0.001
  %v2276 = vadd.f32 %v2180, 0.001
  %v2277 = vadd.f32 %v2181, 0.001
  %v2278 = vadd.f32 %v2182, 0.001
  %v2279 = vadd.f32 %v2183, 0.001
  %v2280 = vadd.f32 %v2184, 0.001
  %v2281 = vadd.f32 %v2185, 0.001
  %v2282 = vadd.f32 %v2186, 0.001
  %v2283 = vadd.f32 %v2187, 0.001
  %v2284 = vadd.f32 %v2188, 0.001
  %v2285 = vadd.f32 %v2189, 0.001
  %v2286 = vadd.f32 %v2190, 0.001
  %v2287 = vadd.f32 %v2191, 0.001
  %v2288 = vadd.f32 %v2192, 0.001
  %v2289 = vadd.f32 %v2193, 0.001
  %v2290 = vadd.f32 %v2194, 0.001
  %v2291 = vadd.f32 %v2195, 0.001
  %v2292 = vadd.f32 %v2196, 0.001
  %v2293 = vadd.f32 %v2197, 0.001
  %v2294 = vadd.f32 %v2198, 0.001
  %v2295 = vadd.f32 %v2199, 0.001
  %v2296 = vadd.f32 %v2200, 0.001
  %v2297 = vadd.f32 %v2201, 0.001
  %v2298 = vadd.f32 %v2202, 0.001
  %v2299 = vadd.f32 %v2203, 0.001
  %v2300 = vadd.f32 %v2204, 0.001
  %v2301 = vadd.f32 %v2205, 0.001
  %v2302 = vadd.f32 %v2206, 0.001
  %v2303 = vadd.f32 %v2207, 0.001
  %v2304 = vrsqrt.pop %v2208
  %v2305 = vrsqrt.pop %v2209
  %v2306 = vrsqrt.pop %v2210
  %v2307 = vrsqrt.pop %v2211
  %v2308 = vrsqrt.pop %v2212
  %v2309 = vrsqrt.pop %v2213
  %v2310 = vrsqrt.pop %v2214
  %v2311 = vrsqrt.pop %v2215
  %v2312 = vrsqrt.pop %v2216
  %v2313 = vrsqrt.pop %v2217
  %v2314 = vrsqrt.pop %v2218
  %v2315 = vrsqrt.pop %v2219
  %v2316 = vrsqrt.pop %v2220
  %v2317 = vrsqrt.pop %v2221
  %v2318 = vrsqrt.pop %v2222
  %v2319 = vrsqrt.pop %v2223
  %v2320 = vrsqrt.pop %v2224
  %v2321 = vrsqrt.pop %v2225
  %v2322 = vrsqrt.pop %v2226
  %v2323 = vrsqrt.pop %v2227
  %v2324 = vrsqrt.pop %v2228
  %v2325 = vrsqrt.pop %v2229
  %v2326 = vrsqrt.pop %v2230
  %v2327 = vrsqrt.pop %v2231
  %v2328 = vrsqrt.pop %v2232
  %v2329 = vrsqrt.pop %v2233
  %v2330 = vrsqrt.pop %v2234
  %v2331 = vrsqrt.pop %v2235
  %v2332 = vrsqrt.pop %v2236
  %v2333 = vrsqrt.pop %v2237
  %v2334 = vrsqrt.pop %v2238
  %v2335 = vrsqrt.pop %v2239
  %v2336 = vrsqrt.pop %v2240
  %v2337 = vrsqrt.pop %v2241
  %v2338 = vrsqrt.pop %v2242
  %v2339 = vrsqrt.pop %v2243
  %v2340 = vrsqrt.pop %v2244
  %v2341 = vrsqrt.pop %v2245
  %v2342 = vrsqrt.pop %v2246
  %v2343 = vrsqrt.pop %v2247
  %v2344 = vrsqrt.pop %v2248
  %v2345 = vrsqrt.pop %v2249
  %v2346 = vrsqrt.pop %v2250
  %v2347 = vrsqrt.pop %v2251
  %v2348 = vrsqrt.pop %v2252
  %v2349 = vrsqrt.pop %v2253
  %v2350 = vrsqrt.pop %v2254
  %v2351 = vrsqrt.pop %v2255
  %v2352 = vrsqrt.pop %v2256
  %v2353 = vrsqrt.pop %v2257
  %v2354 = vrsqrt.pop %v2258
  %v2355 = vrsqrt.pop %v2259
  %v2356 = vrsqrt.pop %v2260
  %v2357 = vrsqrt.pop %v2261
  %v2358 = vrsqrt.pop %v2262
  %v2359 = vrsqrt.pop %v2263
  %v2360 = vrsqrt.pop %v2264
  %v2361 = vrsqrt.pop %v2265
  %v2362 = vrsqrt.pop %v2266
  %v2363 = vrsqrt.pop %v2267
  %v2364 = vrsqrt.pop %v2268
  %v2365 = vrsqrt.pop %v2269
  %v2366 = vrsqrt.pop %v2270
  %v2367 = vrsqrt.pop %v2271
  %v2368 = vrsqrt.pop %v2272
  %v2369 = vrsqrt.pop %v2273
  %v2370 = vrsqrt.pop %v2274
  %v2371 = vrsqrt.pop %v2275
  %v2372 = vrsqrt.pop %v2276
  %v2373 = vrsqrt.pop %v2277
  %v2374 = vrsqrt.pop %v2278
  %v2375 = vrsqrt.pop %v2279
  %v2376 = vrsqrt.pop %v2280
  %v2377 = vrsqrt.pop %v2281
  %v2378 = vrsqrt.pop %v2282
  %v2379 = vrsqrt.pop %v2283
  %v2380 = vrsqrt.pop %v2284
  %v2381 = vrsqrt.pop %v2285
  %v2382 = vrsqrt.pop %v2286
  %v2383 = vrsqrt.pop %v2287
  %v2384 = vrsqrt.pop %v2288
  %v2385 = vrsqrt.pop %v2289
  %v2386 = vrsqrt.pop %v2290
  %v2387 = vrsqrt.pop %v2291
  %v2388 = vrsqrt.pop %v2292
  %v2389 = vrsqrt.pop %v2293
  %v2390 = vrsqrt.pop %v2294
  %v2391 = vrsqrt.pop %v2295
  %v2392 = vrsqrt.pop %v2296
  %v2393 = vrsqrt.pop %v2297
  %v2394 = vrsqrt.pop %v2298
  %v2395 = vrsqrt.pop %v2299
  %v2396 = vrsqrt.pop %v2300
  %v2397 = vrsqrt.pop %v2301
  %v2398 = vrsqrt.pop %v2302
  %v2399 = vrsqrt.pop %v2303
  %v2400 = vld [vmem:[%s2] sm:$0xff]
  %v2401 = vld [vmem:[%s2 + $0x8] sm:$0xff]
  %v2402 = vld [vmem:[%s2 + $0x10] sm:$0xff]
  %v2403 = vld [vmem:[%s2 + $0x18] sm:$0xff]
  %v2404 = vld [vmem:[%s2 + $0x20] sm:$0xff]
  %v2405 = vld [vmem:[%s2 + $0x28] sm:$0xff]
  %v2406 = vld [vmem:[%s2 + $0x30] sm:$0xff]
  %v2407 = vld [vmem:[%s2 + $0x38] sm:$0xff]
  %v2408 = vld [vmem:[%s2 + $0x40] sm:$0xff]
  %v2409 = vld [vmem:[%s2 + $0x48] sm:$0xff]
  %v2410 = vld [vmem:[%s2 + $0x50] sm:$0xff]
  %v2411 = vld [vmem:[%s2 + $0x58] sm:$0xff]
  %v2412 = vld [vmem:[%s2 + $0x60] sm:$0xff]
  %v2413 = vld [vmem:[%s2 + $0x68] sm:$0xff]
  %v2414 = vld [vmem:[%s2 + $0x70] sm:$0xff]
  %v2415 = vld [vmem:[%s2 + $0x78] sm:$0xff]
  %v2416 = vld [vmem:[%s2 + $0x80] sm:$0xff]
  %v2417 = vld [vmem:[%s2 + $0x88] sm:$0xff]
  %v2418 = vld [vmem:[%s2 + $0x90] sm:$0xff]
  %v2419 = vld [vmem:[%s2 + $0x98] sm:$0xff]
  %v2420 = vld [vmem:[%s2 + $0xa0] sm:$0xff]
  %v2421 = vld [vmem:[%s2 + $0xa8] sm:$0xff]
  %v2422 = vld [vmem:[%s2 + $0xb0] sm:$0xff]
  %v2423 = vld [vmem:[%s2 + $0xb8] sm:$0xff]
  %v2424 = vld [vmem:[%s2 + $0xc0] sm:$0xff]
  %v2425 = vld [vmem:[%s2 + $0xc8] sm:$0xff]
  %v2426 = vld [vmem:[%s2 + $0xd0] sm:$0xff]
  %v2427 = vld [vmem:[%s2 + $0xd8] sm:$0xff]
  %v2428 = vld [vmem:[%s2 + $0xe0] sm:$0xff]
  %v2429 = vld [vmem:[%s2 + $0xe8] sm:$0xff]
  %v2430 = vld [vmem:[%s2 + $0xf0] sm:$0xff]
  %v2431 = vld [vmem:[%s2 + $0xf8] sm:$0xff]
  %v2432 = vld [vmem:[%s2 + $0x100] sm:$0xff]
  %v2433 = vld [vmem:[%s2 + $0x108] sm:$0xff]
  %v2434 = vld [vmem:[%s2 + $0x110] sm:$0xff]
  %v2435 = vld [vmem:[%s2 + $0x118] sm:$0xff]
  %v2436 = vld [vmem:[%s2 + $0x120] sm:$0xff]
  %v2437 = vld [vmem:[%s2 + $0x128] sm:$0xff]
  %v2438 = vld [vmem:[%s2 + $0x130] sm:$0xff]
  %v2439 = vld [vmem:[%s2 + $0x138] sm:$0xff]
  %v2440 = vld [vmem:[%s2 + $0x140] sm:$0xff]
  %v2441 = vld [vmem:[%s2 + $0x148] sm:$0xff]
  %v2442 = vld [vmem:[%s2 + $0x150] sm:$0xff]
  %v2443 = vld [vmem:[%s2 + $0x158] sm:$0xff]
  %v2444 = vld [vmem:[%s2 + $0x160] sm:$0xff]
  %v2445 = vld [vmem:[%s2 + $0x168] sm:$0xff]
  %v2446 = vld [vmem:[%s2 + $0x170] sm:$0xff]
  %v2447 = vld [vmem:[%s2 + $0x178] sm:$0xff]
  %v2448 = vld [vmem:[%s2 + $0x180] sm:$0xff]
  %v2449 = vld [vmem:[%s2 + $0x188] sm:$0xff]
  %v2450 = vld [vmem:[%s2 + $0x190] sm:$0xff]
  %v2451 = vld [vmem:[%s2 + $0x198] sm:$0xff]
  %v2452 = vld [vmem:[%s2 + $0x1a0] sm:$0xff]
  %v2453 = vld [vmem:[%s2 + $0x1a8] sm:$0xff]
  %v2454 = vld [vmem:[%s2 + $0x1b0] sm:$0xff]
  %v2455 = vld [vmem:[%s2 + $0x1b8] sm:$0xff]
  %v2456 = vld [vmem:[%s2 + $0x1c0] sm:$0xff]
  %v2457 = vld [vmem:[%s2 + $0x1c8] sm:$0xff]
  %v2458 = vld [vmem:[%s2 + $0x1d0] sm:$0xff]
  %v2459 = vld [vmem:[%s2 + $0x1d8] sm:$0xff]
  %v2460 = vld [vmem:[%s2 + $0x1e0] sm:$0xff]
  %v2461 = vld [vmem:[%s2 + $0x1e8] sm:$0xff]
  %v2462 = vld [vmem:[%s2 + $0x1f0] sm:$0xff]
  %v2463 = vld [vmem:[%s2 + $0x1f8] sm:$0xff]
  %v2464 = vld [vmem:[%s2 + $0x200] sm:$0xff]
  %v2465 = vld [vmem:[%s2 + $0x208] sm:$0xff]
  %v2466 = vld [vmem:[%s2 + $0x210] sm:$0xff]
  %v2467 = vld [vmem:[%s2 + $0x218] sm:$0xff]
  %v2468 = vld [vmem:[%s2 + $0x220] sm:$0xff]
  %v2469 = vld [vmem:[%s2 + $0x228] sm:$0xff]
  %v2470 = vld [vmem:[%s2 + $0x230] sm:$0xff]
  %v2471 = vld [vmem:[%s2 + $0x238] sm:$0xff]
  %v2472 = vld [vmem:[%s2 + $0x240] sm:$0xff]
  %v2473 = vld [vmem:[%s2 + $0x248] sm:$0xff]
  %v2474 = vld [vmem:[%s2 + $0x250] sm:$0xff]
  %v2475 = vld [vmem:[%s2 + $0x258] sm:$0xff]
  %v2476 = vld [vmem:[%s2 + $0x260] sm:$0xff]
  %v2477 = vld [vmem:[%s2 + $0x268] sm:$0xff]
  %v2478 = vld [vmem:[%s2 + $0x270] sm:$0xff]
  %v2479 = vld [vmem:[%s2 + $0x278] sm:$0xff]
  %v2480 = vld [vmem:[%s2 + $0x280] sm:$0xff]
  %v2481 = vld [vmem:[%s2 + $0x288] sm:$0xff]
  %v2482 = vld [vmem:[%s2 + $0x290] sm:$0xff]
  %v2483 = vld [vmem:[%s2 + $0x298] sm:$0xff]
  %v2484 = vld [vmem:[%s2 + $0x2a0] sm:$0xff]
  %v2485 = vld [vmem:[%s2 + $0x2a8] sm:$0xff]
  %v2486 = vld [vmem:[%s2 + $0x2b0] sm:$0xff]
  %v2487 = vld [vmem:[%s2 + $0x2b8] sm:$0xff]
  %v2488 = vld [vmem:[%s2 + $0x2c0] sm:$0xff]
  %v2489 = vld [vmem:[%s2 + $0x2c8] sm:$0xff]
  %v2490 = vld [vmem:[%s2 + $0x2d0] sm:$0xff]
  %v2491 = vld [vmem:[%s2 + $0x2d8] sm:$0xff]
  %v2492 = vld [vmem:[%s2 + $0x2e0] sm:$0xff]
  %v2493 = vld [vmem:[%s2 + $0x2e8] sm:$0xff]
  %v2494 = vld [vmem:[%s2 + $0x2f0] sm:$0xff]
  %v2495 = vld [vmem:[%s2 + $0x2f8] sm:$0xff]
  %v2496 = vmul.f32 %v2400, %v2304
  %v2497 = vmul.f32 %v2401, %v2305
  %v2498 = vmul.f32 %v2402, %v2306
  %v2499 = vmul.f32 %v2403, %v2307
  %v2500 = vmul.f32 %v2404, %v2308
  %v2501 = vmul.f32 %v2405, %v2309
  %v2502 = vmul.f32 %v2406, %v2310
  %v2503 = vmul.f32 %v2407, %v2311
  %v2504 = vmul.f32 %v2408, %v2312
  %v2505 = vmul.f32 %v2409, %v2313
  %v2506 = vmul.f32 %v2410, %v2314
  %v2507 = vmul.f32 %v2411, %v2315
  %v2508 = vmul.f32 %v2412, %v2316
  %v2509 = vmul.f32 %v2413, %v2317
  %v2510 = vmul.f32 %v2414, %v2318
  %v2511 = vmul.f32 %v2415, %v2319
  %v2512 = vmul.f32 %v2416, %v2320
  %v2513 = vmul.f32 %v2417, %v2321
  %v2514 = vmul.f32 %v2418, %v2322
  %v2515 = vmul.f32 %v2419, %v2323
  %v2516 = vmul.f32 %v2420, %v2324
  %v2517 = vmul.f32 %v2421, %v2325
  %v2518 = vmul.f32 %v2422, %v2326
  %v2519 = vmul.f32 %v2423, %v2327
  %v2520 = vmul.f32 %v2424, %v2328
  %v2521 = vmul.f32 %v2425, %v2329
  %v2522 = vmul.f32 %v2426, %v2330
  %v2523 = vmul.f32 %v2427, %v2331
  %v2524 = vmul.f32 %v2428, %v2332
  %v2525 = vmul.f32 %v2429, %v2333
  %v2526 = vmul.f32 %v2430, %v2334
  %v2527 = vmul.f32 %v2431, %v2335
  %v2528 = vmul.f32 %v2432, %v2336
  %v2529 = vmul.f32 %v2433, %v2337
  %v2530 = vmul.f32 %v2434, %v2338
  %v2531 = vmul.f32 %v2435, %v2339
  %v2532 = vmul.f32 %v2436, %v2340
  %v2533 = vmul.f32 %v2437, %v2341
  %v2534 = vmul.f32 %v2438, %v2342
  %v2535 = vmul.f32 %v2439, %v2343
  %v2536 = vmul.f32 %v2440, %v2344
  %v2537 = vmul.f32 %v2441, %v2345
  %v2538 = vmul.f32 %v2442, %v2346
  %v2539 = vmul.f32 %v2443, %v2347
  %v2540 = vmul.f32 %v2444, %v2348
  %v2541 = vmul.f32 %v2445, %v2349
  %v2542 = vmul.f32 %v2446, %v2350
  %v2543 = vmul.f32 %v2447, %v2351
  %v2544 = vmul.f32 %v2448, %v2352
  %v2545 = vmul.f32 %v2449, %v2353
  %v2546 = vmul.f32 %v2450, %v2354
  %v2547 = vmul.f32 %v2451, %v2355
  %v2548 = vmul.f32 %v2452, %v2356
  %v2549 = vmul.f32 %v2453, %v2357
  %v2550 = vmul.f32 %v2454, %v2358
  %v2551 = vmul.f32 %v2455, %v2359
  %v2552 = vmul.f32 %v2456, %v2360
  %v2553 = vmul.f32 %v2457, %v2361
  %v2554 = vmul.f32 %v2458, %v2362
  %v2555 = vmul.f32 %v2459, %v2363
  %v2556 = vmul.f32 %v2460, %v2364
  %v2557 = vmul.f32 %v2461, %v2365
  %v2558 = vmul.f32 %v2462, %v2366
  %v2559 = vmul.f32 %v2463, %v2367
  %v2560 = vmul.f32 %v2464, %v2368
  %v2561 = vmul.f32 %v2465, %v2369
  %v2562 = vmul.f32 %v2466, %v2370
  %v2563 = vmul.f32 %v2467, %v2371
  %v2564 = vmul.f32 %v2468, %v2372
  %v2565 = vmul.f32 %v2469, %v2373
  %v2566 = vmul.f32 %v2470, %v2374
  %v2567 = vmul.f32 %v2471, %v2375
  %v2568 = vmul.f32 %v2472, %v2376
  %v2569 = vmul.f32 %v2473, %v2377
  %v2570 = vmul.f32 %v2474, %v2378
  %v2571 = vmul.f32 %v2475, %v2379
  %v2572 = vmul.f32 %v2476, %v2380
  %v2573 = vmul.f32 %v2477, %v2381
  %v2574 = vmul.f32 %v2478, %v2382
  %v2575 = vmul.f32 %v2479, %v2383
  %v2576 = vmul.f32 %v2480, %v2384
  %v2577 = vmul.f32 %v2481, %v2385
  %v2578 = vmul.f32 %v2482, %v2386
  %v2579 = vmul.f32 %v2483, %v2387
  %v2580 = vmul.f32 %v2484, %v2388
  %v2581 = vmul.f32 %v2485, %v2389
  %v2582 = vmul.f32 %v2486, %v2390
  %v2583 = vmul.f32 %v2487, %v2391
  %v2584 = vmul.f32 %v2488, %v2392
  %v2585 = vmul.f32 %v2489, %v2393
  %v2586 = vmul.f32 %v2490, %v2394
  %v2587 = vmul.f32 %v2491, %v2395
  %v2588 = vmul.f32 %v2492, %v2396
  %v2589 = vmul.f32 %v2493, %v2397
  %v2590 = vmul.f32 %v2494, %v2398
  %v2591 = vmul.f32 %v2495, %v2399
  %v2592 = vmul.f32 %v1728, %v2496
  %v2593 = vmul.f32 %v1729, %v2497
  %v2594 = vmul.f32 %v1730, %v2498
  %v2595 = vmul.f32 %v1731, %v2499
  %v2596 = vmul.f32 %v1732, %v2500
  %v2597 = vmul.f32 %v1733, %v2501
  %v2598 = vmul.f32 %v1734, %v2502
  %v2599 = vmul.f32 %v1735, %v2503
  %v2600 = vmul.f32 %v1736, %v2504
  %v2601 = vmul.f32 %v1737, %v2505
  %v2602 = vmul.f32 %v1738, %v2506
  %v2603 = vmul.f32 %v1739, %v2507
  %v2604 = vmul.f32 %v1740, %v2508
  %v2605 = vmul.f32 %v1741, %v2509
  %v2606 = vmul.f32 %v1742, %v2510
  %v2607 = vmul.f32 %v1743, %v2511
  %v2608 = vmul.f32 %v1744, %v2512
  %v2609 = vmul.f32 %v1745, %v2513
  %v2610 = vmul.f32 %v1746, %v2514
  %v2611 = vmul.f32 %v1747, %v2515
  %v2612 = vmul.f32 %v1748, %v2516
  %v2613 = vmul.f32 %v1749, %v2517
  %v2614 = vmul.f32 %v1750, %v2518
  %v2615 = vmul.f32 %v1751, %v2519
  %v2616 = vmul.f32 %v1752, %v2520
  %v2617 = vmul.f32 %v1753, %v2521
  %v2618 = vmul.f32 %v1754, %v2522
  %v2619 = vmul.f32 %v1755, %v2523
  %v2620 = vmul.f32 %v1756, %v2524
  %v2621 = vmul.f32 %v1757, %v2525
  %v2622 = vmul.f32 %v1758, %v2526
  %v2623 = vmul.f32 %v1759, %v2527
  %v2624 = vmul.f32 %v1760, %v2528
  %v2625 = vmul.f32 %v1761, %v2529
  %v2626 = vmul.f32 %v1762, %v2530
  %v2627 = vmul.f32 %v1763, %v2531
  %v2628 = vmul.f32 %v1764, %v2532
  %v2629 = vmul.f32 %v1765, %v2533
  %v2630 = vmul.f32 %v1766, %v2534
  %v2631 = vmul.f32 %v1767, %v2535
  %v2632 = vmul.f32 %v1768, %v2536
  %v2633 = vmul.f32 %v1769, %v2537
  %v2634 = vmul.f32 %v1770, %v2538
  %v2635 = vmul.f32 %v1771, %v2539
  %v2636 = vmul.f32 %v1772, %v2540
  %v2637 = vmul.f32 %v1773, %v2541
  %v2638 = vmul.f32 %v1774, %v2542
  %v2639 = vmul.f32 %v1775, %v2543
  %v2640 = vmul.f32 %v1776, %v2544
  %v2641 = vmul.f32 %v1777, %v2545
  %v2642 = vmul.f32 %v1778, %v2546
  %v2643 = vmul.f32 %v1779, %v2547
  %v2644 = vmul.f32 %v1780, %v2548
  %v2645 = vmul.f32 %v1781, %v2549
  %v2646 = vmul.f32 %v1782, %v2550
  %v2647 = vmul.f32 %v1783, %v2551
  %v2648 = vmul.f32 %v1784, %v2552
  %v2649 = vmul.f32 %v1785, %v2553
  %v2650 = vmul.f32 %v1786, %v2554
  %v2651 = vmul.f32 %v1787, %v2555
  %v2652 = vmul.f32 %v1788, %v2556
  %v2653 = vmul.f32 %v1789, %v2557
  %v2654 = vmul.f32 %v1790, %v2558
  %v2655 = vmul.f32 %v1791, %v2559
  %v2656 = vmul.f32 %v1792, %v2560
  %v2657 = vmul.f32 %v1793, %v2561
  %v2658 = vmul.f32 %v1794, %v2562
  %v2659 = vmul.f32 %v1795, %v2563
  %v2660 = vmul.f32 %v1796, %v2564
  %v2661 = vmul.f32 %v1797, %v2565
  %v2662 = vmul.f32 %v1798, %v2566
  %v2663 = vmul.f32 %v1799, %v2567
  %v2664 = vmul.f32 %v1800, %v2568
  %v2665 = vmul.f32 %v1801, %v2569
  %v2666 = vmul.f32 %v1802, %v2570
  %v2667 = vmul.f32 %v1803, %v2571
  %v2668 = vmul.f32 %v1804, %v2572
  %v2669 = vmul.f32 %v1805, %v2573
  %v2670 = vmul.f32 %v1806, %v2574
  %v2671 = vmul.f32 %v1807, %v2575
  %v2672 = vmul.f32 %v1808, %v2576
  %v2673 = vmul.f32 %v1809, %v2577
  %v2674 = vmul.f32 %v1810, %v2578
  %v2675 = vmul.f32 %v1811, %v2579
  %v2676 = vmul.f32 %v1812, %v2580
  %v2677 = vmul.f32 %v1813, %v2581
  %v2678 = vmul.f32 %v1814, %v2582
  %v2679 = vmul.f32 %v1815, %v2583
  %v2680 = vmul.f32 %v1816, %v2584
  %v2681 = vmul.f32 %v1817, %v2585
  %v2682 = vmul.f32 %v1818, %v2586
  %v2683 = vmul.f32 %v1819, %v2587
  %v2684 = vmul.f32 %v1820, %v2588
  %v2685 = vmul.f32 %v1821, %v2589
  %v2686 = vmul.f32 %v1822, %v2590
  %v2687 = vmul.f32 %v1823, %v2591
  %2784 = vrot.lane.b32.xlu0 %v2592, 1
  %v2785 = vpop.permute.xlu0 %2784
  %2786 = vrot.lane.b32.xlu0 %v2593, 1
  %v2787 = vpop.permute.xlu0 %2786
  %2788 = vrot.lane.b32.xlu0 %v2594, 1
  %v2789 = vpop.permute.xlu0 %2788
  %2790 = vrot.lane.b32.xlu0 %v2595, 1
  %v2791 = vpop.permute.xlu0 %2790
  %2792 = vrot.lane.b32.xlu0 %v2596, 1
  %v2793 = vpop.permute.xlu0 %2792
  %2794 = vrot.lane.b32.xlu0 %v2597, 1
  %v2795 = vpop.permute.xlu0 %2794
  %2796 = vrot.lane.b32.xlu0 %v2598, 1
  %v2797 = vpop.permute.xlu0 %2796
  %2798 = vrot.lane.b32.xlu0 %v2599, 1
  %v2799 = vpop.permute.xlu0 %2798
  %2800 = vrot.lane.b32.xlu0 %v2600, 1
  %v2801 = vpop.permute.xlu0 %2800
  %2802 = vrot.lane.b32.xlu0 %v2601, 1
  %v2803 = vpop.permute.xlu0 %2802
  %2804 = vrot.lane.b32.xlu0 %v2602, 1
  %v2805 = vpop.permute.xlu0 %2804
  %2806 = vrot.lane.b32.xlu0 %v2603, 1
  %v2807 = vpop.permute.xlu0 %2806
  %2808 = vrot.lane.b32.xlu0 %v2604, 1
  %v2809 = vpop.permute.xlu0 %2808
  %2810 = vrot.lane.b32.xlu0 %v2605, 1
  %v2811 = vpop.permute.xlu0 %2810
  %2812 = vrot.lane.b32.xlu0 %v2606, 1
  %v2813 = vpop.permute.xlu0 %2812
  %2814 = vrot.lane.b32.xlu0 %v2607, 1
  %v2815 = vpop.permute.xlu0 %2814
  %2816 = vrot.lane.b32.xlu0 %v2608, 1
  %v2817 = vpop.permute.xlu0 %2816
  %2818 = vrot.lane.b32.xlu0 %v2609, 1
  %v2819 = vpop.permute.xlu0 %2818
  %2820 = vrot.lane.b32.xlu0 %v2610, 1
  %v2821 = vpop.permute.xlu0 %2820
  %2822 = vrot.lane.b32.xlu0 %v2611, 1
  %v2823 = vpop.permute.xlu0 %2822
  %2824 = vrot.lane.b32.xlu0 %v2612, 1
  %v2825 = vpop.permute.xlu0 %2824
  %2826 = vrot.lane.b32.xlu0 %v2613, 1
  %v2827 = vpop.permute.xlu0 %2826
  %2828 = vrot.lane.b32.xlu0 %v2614, 1
  %v2829 = vpop.permute.xlu0 %2828
  %2830 = vrot.lane.b32.xlu0 %v2615, 1
  %v2831 = vpop.permute.xlu0 %2830
  %2832 = vrot.lane.b32.xlu0 %v2616, 1
  %v2833 = vpop.permute.xlu0 %2832
  %2834 = vrot.lane.b32.xlu0 %v2617, 1
  %v2835 = vpop.permute.xlu0 %2834
  %2836 = vrot.lane.b32.xlu0 %v2618, 1
  %v2837 = vpop.permute.xlu0 %2836
  %2838 = vrot.lane.b32.xlu0 %v2619, 1
  %v2839 = vpop.permute.xlu0 %2838
  %2840 = vrot.lane.b32.xlu0 %v2620, 1
  %v2841 = vpop.permute.xlu0 %2840
  %2842 = vrot.lane.b32.xlu0 %v2621, 1
  %v2843 = vpop.permute.xlu0 %2842
  %2844 = vrot.lane.b32.xlu0 %v2622, 1
  %v2845 = vpop.permute.xlu0 %2844
  %2846 = vrot.lane.b32.xlu0 %v2623, 1
  %v2847 = vpop.permute.xlu0 %2846
  %2848 = vrot.lane.b32.xlu0 %v2624, 1
  %v2849 = vpop.permute.xlu0 %2848
  %2850 = vrot.lane.b32.xlu0 %v2625, 1
  %v2851 = vpop.permute.xlu0 %2850
  %2852 = vrot.lane.b32.xlu0 %v2626, 1
  %v2853 = vpop.permute.xlu0 %2852
  %2854 = vrot.lane.b32.xlu0 %v2627, 1
  %v2855 = vpop.permute.xlu0 %2854
  %2856 = vrot.lane.b32.xlu0 %v2628, 1
  %v2857 = vpop.permute.xlu0 %2856
  %2858 = vrot.lane.b32.xlu0 %v2629, 1
  %v2859 = vpop.permute.xlu0 %2858
  %2860 = vrot.lane.b32.xlu0 %v2630, 1
  %v2861 = vpop.permute.xlu0 %2860
  %2862 = vrot.lane.b32.xlu0 %v2631, 1
  %v2863 = vpop.permute.xlu0 %2862
  %2864 = vrot.lane.b32.xlu0 %v2632, 1
  %v2865 = vpop.permute.xlu0 %2864
  %2866 = vrot.lane.b32.xlu0 %v2633, 1
  %v2867 = vpop.permute.xlu0 %2866
  %2868 = vrot.lane.b32.xlu0 %v2634, 1
  %v2869 = vpop.permute.xlu0 %2868
  %2870 = vrot.lane.b32.xlu0 %v2635, 1
  %v2871 = vpop.permute.xlu0 %2870
  %2872 = vrot.lane.b32.xlu0 %v2636, 1
  %v2873 = vpop.permute.xlu0 %2872
  %2874 = vrot.lane.b32.xlu0 %v2637, 1
  %v2875 = vpop.permute.xlu0 %2874
  %2876 = vrot.lane.b32.xlu0 %v2638, 1
  %v2877 = vpop.permute.xlu0 %2876
  %2878 = vrot.lane.b32.xlu0 %v2639, 1
  %v2879 = vpop.permute.xlu0 %2878
  %2880 = vrot.lane.b32.xlu0 %v2640, 1
  %v2881 = vpop.permute.xlu0 %2880
  %2882 = vrot.lane.b32.xlu0 %v2641, 1
  %v2883 = vpop.permute.xlu0 %2882
  %2884 = vrot.lane.b32.xlu0 %v2642, 1
  %v2885 = vpop.permute.xlu0 %2884
  %2886 = vrot.lane.b32.xlu0 %v2643, 1
  %v2887 = vpop.permute.xlu0 %2886
  %2888 = vrot.lane.b32.xlu0 %v2644, 1
  %v2889 = vpop.permute.xlu0 %2888
  %2890 = vrot.lane.b32.xlu0 %v2645, 1
  %v2891 = vpop.permute.xlu0 %2890
  %2892 = vrot.lane.b32.xlu0 %v2646, 1
  %v2893 = vpop.permute.xlu0 %2892
  %2894 = vrot.lane.b32.xlu0 %v2647, 1
  %v2895 = vpop.permute.xlu0 %2894
  %2896 = vrot.lane.b32.xlu0 %v2648, 1
  %v2897 = vpop.permute.xlu0 %2896
  %2898 = vrot.lane.b32.xlu0 %v2649, 1
  %v2899 = vpop.permute.xlu0 %2898
  %2900 = vrot.lane.b32.xlu0 %v2650, 1
  %v2901 = vpop.permute.xlu0 %2900
  %2902 = vrot.lane.b32.xlu0 %v2651, 1
  %v2903 = vpop.permute.xlu0 %2902
  %2904 = vrot.lane.b32.xlu0 %v2652, 1
  %v2905 = vpop.permute.xlu0 %2904
  %2906 = vrot.lane.b32.xlu0 %v2653, 1
  %v2907 = vpop.permute.xlu0 %2906
  %2908 = vrot.lane.b32.xlu0 %v2654, 1
  %v2909 = vpop.permute.xlu0 %2908
  %2910 = vrot.lane.b32.xlu0 %v2655, 1
  %v2911 = vpop.permute.xlu0 %2910
  %2912 = vrot.lane.b32.xlu0 %v2656, 1
  %v2913 = vpop.permute.xlu0 %2912
  %2914 = vrot.lane.b32.xlu0 %v2657, 1
  %v2915 = vpop.permute.xlu0 %2914
  %2916 = vrot.lane.b32.xlu0 %v2658, 1
  %v2917 = vpop.permute.xlu0 %2916
  %2918 = vrot.lane.b32.xlu0 %v2659, 1
  %v2919 = vpop.permute.xlu0 %2918
  %2920 = vrot.lane.b32.xlu0 %v2660, 1
  %v2921 = vpop.permute.xlu0 %2920
  %2922 = vrot.lane.b32.xlu0 %v2661, 1
  %v2923 = vpop.permute.xlu0 %2922
  %2924 = vrot.lane.b32.xlu0 %v2662, 1
  %v2925 = vpop.permute.xlu0 %2924
  %2926 = vrot.lane.b32.xlu0 %v2663, 1
  %v2927 = vpop.permute.xlu0 %2926
  %2928 = vrot.lane.b32.xlu0 %v2664, 1
  %v2929 = vpop.permute.xlu0 %2928
  %2930 = vrot.lane.b32.xlu0 %v2665, 1
  %v2931 = vpop.permute.xlu0 %2930
  %2932 = vrot.lane.b32.xlu0 %v2666, 1
  %v2933 = vpop.permute.xlu0 %2932
  %2934 = vrot.lane.b32.xlu0 %v2667, 1
  %v2935 = vpop.permute.xlu0 %2934
  %2936 = vrot.lane.b32.xlu0 %v2668, 1
  %v2937 = vpop.permute.xlu0 %2936
  %2938 = vrot.lane.b32.xlu0 %v2669, 1
  %v2939 = vpop.permute.xlu0 %2938
  %2940 = vrot.lane.b32.xlu0 %v2670, 1
  %v2941 = vpop.permute.xlu0 %2940
  %2942 = vrot.lane.b32.xlu0 %v2671, 1
  %v2943 = vpop.permute.xlu0 %2942
  %2944 = vrot.lane.b32.xlu0 %v2672, 1
  %v2945 = vpop.permute.xlu0 %2944
  %2946 = vrot.lane.b32.xlu0 %v2673, 1
  %v2947 = vpop.permute.xlu0 %2946
  %2948 = vrot.lane.b32.xlu0 %v2674, 1
  %v2949 = vpop.permute.xlu0 %2948
  %2950 = vrot.lane.b32.xlu0 %v2675, 1
  %v2951 = vpop.permute.xlu0 %2950
  %2952 = vrot.lane.b32.xlu0 %v2676, 1
  %v2953 = vpop.permute.xlu0 %2952
  %2954 = vrot.lane.b32.xlu0 %v2677, 1
  %v2955 = vpop.permute.xlu0 %2954
  %2956 = vrot.lane.b32.xlu0 %v2678, 1
  %v2957 = vpop.permute.xlu0 %2956
  %2958 = vrot.lane.b32.xlu0 %v2679, 1
  %v2959 = vpop.permute.xlu0 %2958
  %2960 = vrot.lane.b32.xlu0 %v2680, 1
  %v2961 = vpop.permute.xlu0 %2960
  %2962 = vrot.lane.b32.xlu0 %v2681, 1
  %v2963 = vpop.permute.xlu0 %2962
  %2964 = vrot.lane.b32.xlu0 %v2682, 1
  %v2965 = vpop.permute.xlu0 %2964
  %2966 = vrot.lane.b32.xlu0 %v2683, 1
  %v2967 = vpop.permute.xlu0 %2966
  %2968 = vrot.lane.b32.xlu0 %v2684, 1
  %v2969 = vpop.permute.xlu0 %2968
  %2970 = vrot.lane.b32.xlu0 %v2685, 1
  %v2971 = vpop.permute.xlu0 %2970
  %2972 = vrot.lane.b32.xlu0 %v2686, 1
  %v2973 = vpop.permute.xlu0 %2972
  %2974 = vrot.lane.b32.xlu0 %v2687, 1
  %v2975 = vpop.permute.xlu0 %2974
  %v3072 = vsub.f32 %v2400, %v2785
  %v3073 = vsub.f32 %v2401, %v2787
  %v3074 = vsub.f32 %v2402, %v2789
  %v3075 = vsub.f32 %v2403, %v2791
  %v3076 = vsub.f32 %v2404, %v2793
  %v3077 = vsub.f32 %v2405, %v2795
  %v3078 = vsub.f32 %v2406, %v2797
  %v3079 = vsub.f32 %v2407, %v2799
  %v3080 = vsub.f32 %v2408, %v2801
  %v3081 = vsub.f32 %v2409, %v2803
  %v3082 = vsub.f32 %v2410, %v2805
  %v3083 = vsub.f32 %v2411, %v2807
  %v3084 = vsub.f32 %v2412, %v2809
  %v3085 = vsub.f32 %v2413, %v2811
  %v3086 = vsub.f32 %v2414, %v2813
  %v3087 = vsub.f32 %v2415, %v2815
  %v3088 = vsub.f32 %v2416, %v2817
  %v3089 = vsub.f32 %v2417, %v2819
  %v3090 = vsub.f32 %v2418, %v2821
  %v3091 = vsub.f32 %v2419, %v2823
  %v3092 = vsub.f32 %v2420, %v2825
  %v3093 = vsub.f32 %v2421, %v2827
  %v3094 = vsub.f32 %v2422, %v2829
  %v3095 = vsub.f32 %v2423, %v2831
  %v3096 = vsub.f32 %v2424, %v2833
  %v3097 = vsub.f32 %v2425, %v2835
  %v3098 = vsub.f32 %v2426, %v2837
  %v3099 = vsub.f32 %v2427, %v2839
  %v3100 = vsub.f32 %v2428, %v2841
  %v3101 = vsub.f32 %v2429, %v2843
  %v3102 = vsub.f32 %v2430, %v2845
  %v3103 = vsub.f32 %v2431, %v2847
  %v3104 = vsub.f32 %v2432, %v2849
  %v3105 = vsub.f32 %v2433, %v2851
  %v3106 = vsub.f32 %v2434, %v2853
  %v3107 = vsub.f32 %v2435, %v2855
  %v3108 = vsub.f32 %v2436, %v2857
  %v3109 = vsub.f32 %v2437, %v2859
  %v3110 = vsub.f32 %v2438, %v2861
  %v3111 = vsub.f32 %v2439, %v2863
  %v3112 = vsub.f32 %v2440, %v2865
  %v3113 = vsub.f32 %v2441, %v2867
  %v3114 = vsub.f32 %v2442, %v2869
  %v3115 = vsub.f32 %v2443, %v2871
  %v3116 = vsub.f32 %v2444, %v2873
  %v3117 = vsub.f32 %v2445, %v2875
  %v3118 = vsub.f32 %v2446, %v2877
  %v3119 = vsub.f32 %v2447, %v2879
  %v3120 = vsub.f32 %v2448, %v2881
  %v3121 = vsub.f32 %v2449, %v2883
  %v3122 = vsub.f32 %v2450, %v2885
  %v3123 = vsub.f32 %v2451, %v2887
  %v3124 = vsub.f32 %v2452, %v2889
  %v3125 = vsub.f32 %v2453, %v2891
  %v3126 = vsub.f32 %v2454, %v2893
  %v3127 = vsub.f32 %v2455, %v2895
  %v3128 = vsub.f32 %v2456, %v2897
  %v3129 = vsub.f32 %v2457, %v2899
  %v3130 = vsub.f32 %v2458, %v2901
  %v3131 = vsub.f32 %v2459, %v2903
  %v3132 = vsub.f32 %v2460, %v2905
  %v3133 = vsub.f32 %v2461, %v2907
  %v3134 = vsub.f32 %v2462, %v2909
  %v3135 = vsub.f32 %v2463, %v2911
  %v3136 = vsub.f32 %v2464, %v2913
  %v3137 = vsub.f32 %v2465, %v2915
  %v3138 = vsub.f32 %v2466, %v2917
  %v3139 = vsub.f32 %v2467, %v2919
  %v3140 = vsub.f32 %v2468, %v2921
  %v3141 = vsub.f32 %v2469, %v2923
  %v3142 = vsub.f32 %v2470, %v2925
  %v3143 = vsub.f32 %v2471, %v2927
  %v3144 = vsub.f32 %v2472, %v2929
  %v3145 = vsub.f32 %v2473, %v2931
  %v3146 = vsub.f32 %v2474, %v2933
  %v3147 = vsub.f32 %v2475, %v2935
  %v3148 = vsub.f32 %v2476, %v2937
  %v3149 = vsub.f32 %v2477, %v2939
  %v3150 = vsub.f32 %v2478, %v2941
  %v3151 = vsub.f32 %v2479, %v2943
  %v3152 = vsub.f32 %v2480, %v2945
  %v3153 = vsub.f32 %v2481, %v2947
  %v3154 = vsub.f32 %v2482, %v2949
  %v3155 = vsub.f32 %v2483, %v2951
  %v3156 = vsub.f32 %v2484, %v2953
  %v3157 = vsub.f32 %v2485, %v2955
  %v3158 = vsub.f32 %v2486, %v2957
  %v3159 = vsub.f32 %v2487, %v2959
  %v3160 = vsub.f32 %v2488, %v2961
  %v3161 = vsub.f32 %v2489, %v2963
  %v3162 = vsub.f32 %v2490, %v2965
  %v3163 = vsub.f32 %v2491, %v2967
  %v3164 = vsub.f32 %v2492, %v2969
  %v3165 = vsub.f32 %v2493, %v2971
  %v3166 = vsub.f32 %v2494, %v2973
  %v3167 = vsub.f32 %v2495, %v2975
  %3169 = vset.pattern.permute.xlu0 0
  %3170 = vperm.xlu0 %3169, %v2496
  %v3171 = vpop.permute.xlu0 %3170
  %3174 = vset.pattern.permute.xlu0 0
  %3175 = vperm.xlu0 %3174, %v2497
  %v3176 = vpop.permute.xlu0 %3175
  %3179 = vset.pattern.permute.xlu0 0
  %3180 = vperm.xlu0 %3179, %v2498
  %v3181 = vpop.permute.xlu0 %3180
  %3184 = vset.pattern.permute.xlu0 0
  %3185 = vperm.xlu0 %3184, %v2499
  %v3186 = vpop.permute.xlu0 %3185
  %3189 = vset.pattern.permute.xlu0 0
  %3190 = vperm.xlu0 %3189, %v2500
  %v3191 = vpop.permute.xlu0 %3190
  %3194 = vset.pattern.permute.xlu0 0
  %3195 = vperm.xlu0 %3194, %v2501
  %v3196 = vpop.permute.xlu0 %3195
  %3199 = vset.pattern.permute.xlu0 0
  %3200 = vperm.xlu0 %3199, %v2502
  %v3201 = vpop.permute.xlu0 %3200
  %3204 = vset.pattern.permute.xlu0 0
  %3205 = vperm.xlu0 %3204, %v2503
  %v3206 = vpop.permute.xlu0 %3205
  %3209 = vset.pattern.permute.xlu0 0
  %3210 = vperm.xlu0 %3209, %v2504
  %v3211 = vpop.permute.xlu0 %3210
  %3214 = vset.pattern.permute.xlu0 0
  %3215 = vperm.xlu0 %3214, %v2505
  %v3216 = vpop.permute.xlu0 %3215
  %3219 = vset.pattern.permute.xlu0 0
  %3220 = vperm.xlu0 %3219, %v2506
  %v3221 = vpop.permute.xlu0 %3220
  %3224 = vset.pattern.permute.xlu0 0
  %3225 = vperm.xlu0 %3224, %v2507
  %v3226 = vpop.permute.xlu0 %3225
  %3229 = vset.pattern.permute.xlu0 0
  %3230 = vperm.xlu0 %3229, %v2508
  %v3231 = vpop.permute.xlu0 %3230
  %3234 = vset.pattern.permute.xlu0 0
  %3235 = vperm.xlu0 %3234, %v2509
  %v3236 = vpop.permute.xlu0 %3235
  %3239 = vset.pattern.permute.xlu0 0
  %3240 = vperm.xlu0 %3239, %v2510
  %v3241 = vpop.permute.xlu0 %3240
  %3244 = vset.pattern.permute.xlu0 0
  %3245 = vperm.xlu0 %3244, %v2511
  %v3246 = vpop.permute.xlu0 %3245
  %3249 = vset.pattern.permute.xlu0 0
  %3250 = vperm.xlu0 %3249, %v2512
  %v3251 = vpop.permute.xlu0 %3250
  %3254 = vset.pattern.permute.xlu0 0
  %3255 = vperm.xlu0 %3254, %v2513
  %v3256 = vpop.permute.xlu0 %3255
  %3259 = vset.pattern.permute.xlu0 0
  %3260 = vperm.xlu0 %3259, %v2514
  %v3261 = vpop.permute.xlu0 %3260
  %3264 = vset.pattern.permute.xlu0 0
  %3265 = vperm.xlu0 %3264, %v2515
  %v3266 = vpop.permute.xlu0 %3265
  %3269 = vset.pattern.permute.xlu0 0
  %3270 = vperm.xlu0 %3269, %v2516
  %v3271 = vpop.permute.xlu0 %3270
  %3274 = vset.pattern.permute.xlu0 0
  %3275 = vperm.xlu0 %3274, %v2517
  %v3276 = vpop.permute.xlu0 %3275
  %3279 = vset.pattern.permute.xlu0 0
  %3280 = vperm.xlu0 %3279, %v2518
  %v3281 = vpop.permute.xlu0 %3280
  %3284 = vset.pattern.permute.xlu0 0
  %3285 = vperm.xlu0 %3284, %v2519
  %v3286 = vpop.permute.xlu0 %3285
  %3289 = vset.pattern.permute.xlu0 0
  %3290 = vperm.xlu0 %3289, %v2520
  %v3291 = vpop.permute.xlu0 %3290
  %3294 = vset.pattern.permute.xlu0 0
  %3295 = vperm.xlu0 %3294, %v2521
  %v3296 = vpop.permute.xlu0 %3295
  %3299 = vset.pattern.permute.xlu0 0
  %3300 = vperm.xlu0 %3299, %v2522
  %v3301 = vpop.permute.xlu0 %3300
  %3304 = vset.pattern.permute.xlu0 0
  %3305 = vperm.xlu0 %3304, %v2523
  %v3306 = vpop.permute.xlu0 %3305
  %3309 = vset.pattern.permute.xlu0 0
  %3310 = vperm.xlu0 %3309, %v2524
  %v3311 = vpop.permute.xlu0 %3310
  %3314 = vset.pattern.permute.xlu0 0
  %3315 = vperm.xlu0 %3314, %v2525
  %v3316 = vpop.permute.xlu0 %3315
  %3319 = vset.pattern.permute.xlu0 0
  %3320 = vperm.xlu0 %3319, %v2526
  %v3321 = vpop.permute.xlu0 %3320
  %3324 = vset.pattern.permute.xlu0 0
  %3325 = vperm.xlu0 %3324, %v2527
  %v3326 = vpop.permute.xlu0 %3325
  %3329 = vset.pattern.permute.xlu0 0
  %3330 = vperm.xlu0 %3329, %v2528
  %v3331 = vpop.permute.xlu0 %3330
  %3334 = vset.pattern.permute.xlu0 0
  %3335 = vperm.xlu0 %3334, %v2529
  %v3336 = vpop.permute.xlu0 %3335
  %3339 = vset.pattern.permute.xlu0 0
  %3340 = vperm.xlu0 %3339, %v2530
  %v3341 = vpop.permute.xlu0 %3340
  %3344 = vset.pattern.permute.xlu0 0
  %3345 = vperm.xlu0 %3344, %v2531
  %v3346 = vpop.permute.xlu0 %3345
  %3349 = vset.pattern.permute.xlu0 0
  %3350 = vperm.xlu0 %3349, %v2532
  %v3351 = vpop.permute.xlu0 %3350
  %3354 = vset.pattern.permute.xlu0 0
  %3355 = vperm.xlu0 %3354, %v2533
  %v3356 = vpop.permute.xlu0 %3355
  %3359 = vset.pattern.permute.xlu0 0
  %3360 = vperm.xlu0 %3359, %v2534
  %v3361 = vpop.permute.xlu0 %3360
  %3364 = vset.pattern.permute.xlu0 0
  %3365 = vperm.xlu0 %3364, %v2535
  %v3366 = vpop.permute.xlu0 %3365
  %3369 = vset.pattern.permute.xlu0 0
  %3370 = vperm.xlu0 %3369, %v2536
  %v3371 = vpop.permute.xlu0 %3370
  %3374 = vset.pattern.permute.xlu0 0
  %3375 = vperm.xlu0 %3374, %v2537
  %v3376 = vpop.permute.xlu0 %3375
  %3379 = vset.pattern.permute.xlu0 0
  %3380 = vperm.xlu0 %3379, %v2538
  %v3381 = vpop.permute.xlu0 %3380
  %3384 = vset.pattern.permute.xlu0 0
  %3385 = vperm.xlu0 %3384, %v2539
  %v3386 = vpop.permute.xlu0 %3385
  %3389 = vset.pattern.permute.xlu0 0
  %3390 = vperm.xlu0 %3389, %v2540
  %v3391 = vpop.permute.xlu0 %3390
  %3394 = vset.pattern.permute.xlu0 0
  %3395 = vperm.xlu0 %3394, %v2541
  %v3396 = vpop.permute.xlu0 %3395
  %3399 = vset.pattern.permute.xlu0 0
  %3400 = vperm.xlu0 %3399, %v2542
  %v3401 = vpop.permute.xlu0 %3400
  %3404 = vset.pattern.permute.xlu0 0
  %3405 = vperm.xlu0 %3404, %v2543
  %v3406 = vpop.permute.xlu0 %3405
  %3409 = vset.pattern.permute.xlu0 0
  %3410 = vperm.xlu0 %3409, %v2544
  %v3411 = vpop.permute.xlu0 %3410
  %3414 = vset.pattern.permute.xlu0 0
  %3415 = vperm.xlu0 %3414, %v2545
  %v3416 = vpop.permute.xlu0 %3415
  %3419 = vset.pattern.permute.xlu0 0
  %3420 = vperm.xlu0 %3419, %v2546
  %v3421 = vpop.permute.xlu0 %3420
  %3424 = vset.pattern.permute.xlu0 0
  %3425 = vperm.xlu0 %3424, %v2547
  %v3426 = vpop.permute.xlu0 %3425
  %3429 = vset.pattern.permute.xlu0 0
  %3430 = vperm.xlu0 %3429, %v2548
  %v3431 = vpop.permute.xlu0 %3430
  %3434 = vset.pattern.permute.xlu0 0
  %3435 = vperm.xlu0 %3434, %v2549
  %v3436 = vpop.permute.xlu0 %3435
  %3439 = vset.pattern.permute.xlu0 0
  %3440 = vperm.xlu0 %3439, %v2550
  %v3441 = vpop.permute.xlu0 %3440
  %3444 = vset.pattern.permute.xlu0 0
  %3445 = vperm.xlu0 %3444, %v2551
  %v3446 = vpop.permute.xlu0 %3445
  %3449 = vset.pattern.permute.xlu0 0
  %3450 = vperm.xlu0 %3449, %v2552
  %v3451 = vpop.permute.xlu0 %3450
  %3454 = vset.pattern.permute.xlu0 0
  %3455 = vperm.xlu0 %3454, %v2553
  %v3456 = vpop.permute.xlu0 %3455
  %3459 = vset.pattern.permute.xlu0 0
  %3460 = vperm.xlu0 %3459, %v2554
  %v3461 = vpop.permute.xlu0 %3460
  %3464 = vset.pattern.permute.xlu0 0
  %3465 = vperm.xlu0 %3464, %v2555
  %v3466 = vpop.permute.xlu0 %3465
  %3469 = vset.pattern.permute.xlu0 0
  %3470 = vperm.xlu0 %3469, %v2556
  %v3471 = vpop.permute.xlu0 %3470
  %3474 = vset.pattern.permute.xlu0 0
  %3475 = vperm.xlu0 %3474, %v2557
  %v3476 = vpop.permute.xlu0 %3475
  %3479 = vset.pattern.permute.xlu0 0
  %3480 = vperm.xlu0 %3479, %v2558
  %v3481 = vpop.permute.xlu0 %3480
  %3484 = vset.pattern.permute.xlu0 0
  %3485 = vperm.xlu0 %3484, %v2559
  %v3486 = vpop.permute.xlu0 %3485
  %3489 = vset.pattern.permute.xlu0 0
  %3490 = vperm.xlu0 %3489, %v2560
  %v3491 = vpop.permute.xlu0 %3490
  %3494 = vset.pattern.permute.xlu0 0
  %3495 = vperm.xlu0 %3494, %v2561
  %v3496 = vpop.permute.xlu0 %3495
  %3499 = vset.pattern.permute.xlu0 0
  %3500 = vperm.xlu0 %3499, %v2562
  %v3501 = vpop.permute.xlu0 %3500
  %3504 = vset.pattern.permute.xlu0 0
  %3505 = vperm.xlu0 %3504, %v2563
  %v3506 = vpop.permute.xlu0 %3505
  %3509 = vset.pattern.permute.xlu0 0
  %3510 = vperm.xlu0 %3509, %v2564
  %v3511 = vpop.permute.xlu0 %3510
  %3514 = vset.pattern.permute.xlu0 0
  %3515 = vperm.xlu0 %3514, %v2565
  %v3516 = vpop.permute.xlu0 %3515
  %3519 = vset.pattern.permute.xlu0 0
  %3520 = vperm.xlu0 %3519, %v2566
  %v3521 = vpop.permute.xlu0 %3520
  %3524 = vset.pattern.permute.xlu0 0
  %3525 = vperm.xlu0 %3524, %v2567
  %v3526 = vpop.permute.xlu0 %3525
  %3529 = vset.pattern.permute.xlu0 0
  %3530 = vperm.xlu0 %3529, %v2568
  %v3531 = vpop.permute.xlu0 %3530
  %3534 = vset.pattern.permute.xlu0 0
  %3535 = vperm.xlu0 %3534, %v2569
  %v3536 = vpop.permute.xlu0 %3535
  %3539 = vset.pattern.permute.xlu0 0
  %3540 = vperm.xlu0 %3539, %v2570
  %v3541 = vpop.permute.xlu0 %3540
  %3544 = vset.pattern.permute.xlu0 0
  %3545 = vperm.xlu0 %3544, %v2571
  %v3546 = vpop.permute.xlu0 %3545
  %3549 = vset.pattern.permute.xlu0 0
  %3550 = vperm.xlu0 %3549, %v2572
  %v3551 = vpop.permute.xlu0 %3550
  %3554 = vset.pattern.permute.xlu0 0
  %3555 = vperm.xlu0 %3554, %v2573
  %v3556 = vpop.permute.xlu0 %3555
  %3559 = vset.pattern.permute.xlu0 0
  %3560 = vperm.xlu0 %3559, %v2574
  %v3561 = vpop.permute.xlu0 %3560
  %3564 = vset.pattern.permute.xlu0 0
  %3565 = vperm.xlu0 %3564, %v2575
  %v3566 = vpop.permute.xlu0 %3565
  %3569 = vset.pattern.permute.xlu0 0
  %3570 = vperm.xlu0 %3569, %v2576
  %v3571 = vpop.permute.xlu0 %3570
  %3574 = vset.pattern.permute.xlu0 0
  %3575 = vperm.xlu0 %3574, %v2577
  %v3576 = vpop.permute.xlu0 %3575
  %3579 = vset.pattern.permute.xlu0 0
  %3580 = vperm.xlu0 %3579, %v2578
  %v3581 = vpop.permute.xlu0 %3580
  %3584 = vset.pattern.permute.xlu0 0
  %3585 = vperm.xlu0 %3584, %v2579
  %v3586 = vpop.permute.xlu0 %3585
  %3589 = vset.pattern.permute.xlu0 0
  %3590 = vperm.xlu0 %3589, %v2580
  %v3591 = vpop.permute.xlu0 %3590
  %3594 = vset.pattern.permute.xlu0 0
  %3595 = vperm.xlu0 %3594, %v2581
  %v3596 = vpop.permute.xlu0 %3595
  %3599 = vset.pattern.permute.xlu0 0
  %3600 = vperm.xlu0 %3599, %v2582
  %v3601 = vpop.permute.xlu0 %3600
  %3604 = vset.pattern.permute.xlu0 0
  %3605 = vperm.xlu0 %3604, %v2583
  %v3606 = vpop.permute.xlu0 %3605
  %3609 = vset.pattern.permute.xlu0 0
  %3610 = vperm.xlu0 %3609, %v2584
  %v3611 = vpop.permute.xlu0 %3610
  %3614 = vset.pattern.permute.xlu0 0
  %3615 = vperm.xlu0 %3614, %v2585
  %v3616 = vpop.permute.xlu0 %3615
  %3619 = vset.pattern.permute.xlu0 0
  %3620 = vperm.xlu0 %3619, %v2586
  %v3621 = vpop.permute.xlu0 %3620
  %3624 = vset.pattern.permute.xlu0 0
  %3625 = vperm.xlu0 %3624, %v2587
  %v3626 = vpop.permute.xlu0 %3625
  %3629 = vset.pattern.permute.xlu0 0
  %3630 = vperm.xlu0 %3629, %v2588
  %v3631 = vpop.permute.xlu0 %3630
  %3634 = vset.pattern.permute.xlu0 0
  %3635 = vperm.xlu0 %3634, %v2589
  %v3636 = vpop.permute.xlu0 %3635
  %3639 = vset.pattern.permute.xlu0 0
  %3640 = vperm.xlu0 %3639, %v2590
  %v3641 = vpop.permute.xlu0 %3640
  %3644 = vset.pattern.permute.xlu0 0
  %3645 = vperm.xlu0 %3644, %v2591
  %v3646 = vpop.permute.xlu0 %3645
  %v3648 = vmul.f32 %v482, %v3171
  %v3649 = vmul.f32 %v484, %v3171
  %v3650 = vmul.f32 %v486, %v3176
  %v3651 = vmul.f32 %v488, %v3176
  %v3652 = vmul.f32 %v492, %v3181
  %v3653 = vmul.f32 %v494, %v3181
  %v3654 = vmul.f32 %v496, %v3186
  %v3655 = vmul.f32 %v498, %v3186
  %v3656 = vmul.f32 %v502, %v3191
  %v3657 = vmul.f32 %v504, %v3191
  %v3658 = vmul.f32 %v506, %v3196
  %v3659 = vmul.f32 %v508, %v3196
  %v3660 = vmul.f32 %v512, %v3201
  %v3661 = vmul.f32 %v514, %v3201
  %v3662 = vmul.f32 %v516, %v3206
  %v3663 = vmul.f32 %v518, %v3206
  %v3664 = vmul.f32 %v522, %v3211
  %v3665 = vmul.f32 %v524, %v3211
  %v3666 = vmul.f32 %v526, %v3216
  %v3667 = vmul.f32 %v528, %v3216
  %v3668 = vmul.f32 %v532, %v3221
  %v3669 = vmul.f32 %v534, %v3221
  %v3670 = vmul.f32 %v536, %v3226
  %v3671 = vmul.f32 %v538, %v3226
  %v3672 = vmul.f32 %v542, %v3231
  %v3673 = vmul.f32 %v544, %v3231
  %v3674 = vmul.f32 %v546, %v3236
  %v3675 = vmul.f32 %v548, %v3236
  %v3676 = vmul.f32 %v552, %v3241
  %v3677 = vmul.f32 %v554, %v3241
  %v3678 = vmul.f32 %v556, %v3246
  %v3679 = vmul.f32 %v558, %v3246
  %v3680 = vmul.f32 %v562, %v3251
  %v3681 = vmul.f32 %v564, %v3251
  %v3682 = vmul.f32 %v566, %v3256
  %v3683 = vmul.f32 %v568, %v3256
  %v3684 = vmul.f32 %v572, %v3261
  %v3685 = vmul.f32 %v574, %v3261
  %v3686 = vmul.f32 %v576, %v3266
  %v3687 = vmul.f32 %v578, %v3266
  %v3688 = vmul.f32 %v582, %v3271
  %v3689 = vmul.f32 %v584, %v3271
  %v3690 = vmul.f32 %v586, %v3276
  %v3691 = vmul.f32 %v588, %v3276
  %v3692 = vmul.f32 %v592, %v3281
  %v3693 = vmul.f32 %v594, %v3281
  %v3694 = vmul.f32 %v596, %v3286
  %v3695 = vmul.f32 %v598, %v3286
  %v3696 = vmul.f32 %v602, %v3291
  %v3697 = vmul.f32 %v604, %v3291
  %v3698 = vmul.f32 %v606, %v3296
  %v3699 = vmul.f32 %v608, %v3296
  %v3700 = vmul.f32 %v612, %v3301
  %v3701 = vmul.f32 %v614, %v3301
  %v3702 = vmul.f32 %v616, %v3306
  %v3703 = vmul.f32 %v618, %v3306
  %v3704 = vmul.f32 %v622, %v3311
  %v3705 = vmul.f32 %v624, %v3311
  %v3706 = vmul.f32 %v626, %v3316
  %v3707 = vmul.f32 %v628, %v3316
  %v3708 = vmul.f32 %v632, %v3321
  %v3709 = vmul.f32 %v634, %v3321
  %v3710 = vmul.f32 %v636, %v3326
  %v3711 = vmul.f32 %v638, %v3326
  %v3712 = vmul.f32 %v642, %v3331
  %v3713 = vmul.f32 %v644, %v3331
  %v3714 = vmul.f32 %v646, %v3336
  %v3715 = vmul.f32 %v648, %v3336
  %v3716 = vmul.f32 %v652, %v3341
  %v3717 = vmul.f32 %v654, %v3341
  %v3718 = vmul.f32 %v656, %v3346
  %v3719 = vmul.f32 %v658, %v3346
  %v3720 = vmul.f32 %v662, %v3351
  %v3721 = vmul.f32 %v664, %v3351
  %v3722 = vmul.f32 %v666, %v3356
  %v3723 = vmul.f32 %v668, %v3356
  %v3724 = vmul.f32 %v672, %v3361
  %v3725 = vmul.f32 %v674, %v3361
  %v3726 = vmul.f32 %v676, %v3366
  %v3727 = vmul.f32 %v678, %v3366
  %v3728 = vmul.f32 %v682, %v3371
  %v3729 = vmul.f32 %v684, %v3371
  %v3730 = vmul.f32 %v686, %v3376
  %v3731 = vmul.f32 %v688, %v3376
  %v3732 = vmul.f32 %v692, %v3381
  %v3733 = vmul.f32 %v694, %v3381
  %v3734 = vmul.f32 %v696, %v3386
  %v3735 = vmul.f32 %v698, %v3386
  %v3736 = vmul.f32 %v702, %v3391
  %v3737 = vmul.f32 %v704, %v3391
  %v3738 = vmul.f32 %v706, %v3396
  %v3739 = vmul.f32 %v708, %v3396
  %v3740 = vmul.f32 %v712, %v3401
  %v3741 = vmul.f32 %v714, %v3401
  %v3742 = vmul.f32 %v716, %v3406
  %v3743 = vmul.f32 %v718, %v3406
  %v3744 = vmul.f32 %v722, %v3411
  %v3745 = vmul.f32 %v724, %v3411
  %v3746 = vmul.f32 %v726, %v3416
  %v3747 = vmul.f32 %v728, %v3416
  %v3748 = vmul.f32 %v732, %v3421
  %v3749 = vmul.f32 %v734, %v3421
  %v3750 = vmul.f32 %v736, %v3426
  %v3751 = vmul.f32 %v738, %v3426
  %v3752 = vmul.f32 %v742, %v3431
  %v3753 = vmul.f32 %v744, %v3431
  %v3754 = vmul.f32 %v746, %v3436
  %v3755 = vmul.f32 %v748, %v3436
  %v3756 = vmul.f32 %v752, %v3441
  %v3757 = vmul.f32 %v754, %v3441
  %v3758 = vmul.f32 %v756, %v3446
  %v3759 = vmul.f32 %v758, %v3446
  %v3760 = vmul.f32 %v762, %v3451
  %v3761 = vmul.f32 %v764, %v3451
  %v3762 = vmul.f32 %v766, %v3456
  %v3763 = vmul.f32 %v768, %v3456
  %v3764 = vmul.f32 %v772, %v3461
  %v3765 = vmul.f32 %v774, %v3461
  %v3766 = vmul.f32 %v776, %v3466
  %v3767 = vmul.f32 %v778, %v3466
  %v3768 = vmul.f32 %v782, %v3471
  %v3769 = vmul.f32 %v784, %v3471
  %v3770 = vmul.f32 %v786, %v3476
  %v3771 = vmul.f32 %v788, %v3476
  %v3772 = vmul.f32 %v792, %v3481
  %v3773 = vmul.f32 %v794, %v3481
  %v3774 = vmul.f32 %v796, %v3486
  %v3775 = vmul.f32 %v798, %v3486
  %v3776 = vmul.f32 %v802, %v3491
  %v3777 = vmul.f32 %v804, %v3491
  %v3778 = vmul.f32 %v806, %v3496
  %v3779 = vmul.f32 %v808, %v3496
  %v3780 = vmul.f32 %v812, %v3501
  %v3781 = vmul.f32 %v814, %v3501
  %v3782 = vmul.f32 %v816, %v3506
  %v3783 = vmul.f32 %v818, %v3506
  %v3784 = vmul.f32 %v822, %v3511
  %v3785 = vmul.f32 %v824, %v3511
  %v3786 = vmul.f32 %v826, %v3516
  %v3787 = vmul.f32 %v828, %v3516
  %v3788 = vmul.f32 %v832, %v3521
  %v3789 = vmul.f32 %v834, %v3521
  %v3790 = vmul.f32 %v836, %v3526
  %v3791 = vmul.f32 %v838, %v3526
  %v3792 = vmul.f32 %v842, %v3531
  %v3793 = vmul.f32 %v844, %v3531
  %v3794 = vmul.f32 %v846, %v3536
  %v3795 = vmul.f32 %v848, %v3536
  %v3796 = vmul.f32 %v852, %v3541
  %v3797 = vmul.f32 %v854, %v3541
  %v3798 = vmul.f32 %v856, %v3546
  %v3799 = vmul.f32 %v858, %v3546
  %v3800 = vmul.f32 %v862, %v3551
  %v3801 = vmul.f32 %v864, %v3551
  %v3802 = vmul.f32 %v866, %v3556
  %v3803 = vmul.f32 %v868, %v3556
  %v3804 = vmul.f32 %v872, %v3561
  %v3805 = vmul.f32 %v874, %v3561
  %v3806 = vmul.f32 %v876, %v3566
  %v3807 = vmul.f32 %v878, %v3566
  %v3808 = vmul.f32 %v882, %v3571
  %v3809 = vmul.f32 %v884, %v3571
  %v3810 = vmul.f32 %v886, %v3576
  %v3811 = vmul.f32 %v888, %v3576
  %v3812 = vmul.f32 %v892, %v3581
  %v3813 = vmul.f32 %v894, %v3581
  %v3814 = vmul.f32 %v896, %v3586
  %v3815 = vmul.f32 %v898, %v3586
  %v3816 = vmul.f32 %v902, %v3591
  %v3817 = vmul.f32 %v904, %v3591
  %v3818 = vmul.f32 %v906, %v3596
  %v3819 = vmul.f32 %v908, %v3596
  %v3820 = vmul.f32 %v912, %v3601
  %v3821 = vmul.f32 %v914, %v3601
  %v3822 = vmul.f32 %v916, %v3606
  %v3823 = vmul.f32 %v918, %v3606
  %v3824 = vmul.f32 %v922, %v3611
  %v3825 = vmul.f32 %v924, %v3611
  %v3826 = vmul.f32 %v926, %v3616
  %v3827 = vmul.f32 %v928, %v3616
  %v3828 = vmul.f32 %v932, %v3621
  %v3829 = vmul.f32 %v934, %v3621
  %v3830 = vmul.f32 %v936, %v3626
  %v3831 = vmul.f32 %v938, %v3626
  %v3832 = vmul.f32 %v942, %v3631
  %v3833 = vmul.f32 %v944, %v3631
  %v3834 = vmul.f32 %v946, %v3636
  %v3835 = vmul.f32 %v948, %v3636
  %v3836 = vmul.f32 %v952, %v3641
  %v3837 = vmul.f32 %v954, %v3641
  %v3838 = vmul.f32 %v956, %v3646
  %v3839 = vmul.f32 %v958, %v3646
  %3841 = vset.pattern.permute.xlu0 1
  %3842 = vperm.xlu0 %3841, %v3072
  %v3843 = vpop.permute.xlu0 %3842
  %3846 = vset.pattern.permute.xlu0 1
  %3847 = vperm.xlu0 %3846, %v3073
  %v3848 = vpop.permute.xlu0 %3847
  %3851 = vset.pattern.permute.xlu0 1
  %3852 = vperm.xlu0 %3851, %v3074
  %v3853 = vpop.permute.xlu0 %3852
  %3856 = vset.pattern.permute.xlu0 1
  %3857 = vperm.xlu0 %3856, %v3075
  %v3858 = vpop.permute.xlu0 %3857
  %3861 = vset.pattern.permute.xlu0 1
  %3862 = vperm.xlu0 %3861, %v3076
  %v3863 = vpop.permute.xlu0 %3862
  %3866 = vset.pattern.permute.xlu0 1
  %3867 = vperm.xlu0 %3866, %v3077
  %v3868 = vpop.permute.xlu0 %3867
  %3871 = vset.pattern.permute.xlu0 1
  %3872 = vperm.xlu0 %3871, %v3078
  %v3873 = vpop.permute.xlu0 %3872
  %3876 = vset.pattern.permute.xlu0 1
  %3877 = vperm.xlu0 %3876, %v3079
  %v3878 = vpop.permute.xlu0 %3877
  %3881 = vset.pattern.permute.xlu0 1
  %3882 = vperm.xlu0 %3881, %v3080
  %v3883 = vpop.permute.xlu0 %3882
  %3886 = vset.pattern.permute.xlu0 1
  %3887 = vperm.xlu0 %3886, %v3081
  %v3888 = vpop.permute.xlu0 %3887
  %3891 = vset.pattern.permute.xlu0 1
  %3892 = vperm.xlu0 %3891, %v3082
  %v3893 = vpop.permute.xlu0 %3892
  %3896 = vset.pattern.permute.xlu0 1
  %3897 = vperm.xlu0 %3896, %v3083
  %v3898 = vpop.permute.xlu0 %3897
  %3901 = vset.pattern.permute.xlu0 1
  %3902 = vperm.xlu0 %3901, %v3084
  %v3903 = vpop.permute.xlu0 %3902
  %3906 = vset.pattern.permute.xlu0 1
  %3907 = vperm.xlu0 %3906, %v3085
  %v3908 = vpop.permute.xlu0 %3907
  %3911 = vset.pattern.permute.xlu0 1
  %3912 = vperm.xlu0 %3911, %v3086
  %v3913 = vpop.permute.xlu0 %3912
  %3916 = vset.pattern.permute.xlu0 1
  %3917 = vperm.xlu0 %3916, %v3087
  %v3918 = vpop.permute.xlu0 %3917
  %3921 = vset.pattern.permute.xlu0 1
  %3922 = vperm.xlu0 %3921, %v3088
  %v3923 = vpop.permute.xlu0 %3922
  %3926 = vset.pattern.permute.xlu0 1
  %3927 = vperm.xlu0 %3926, %v3089
  %v3928 = vpop.permute.xlu0 %3927
  %3931 = vset.pattern.permute.xlu0 1
  %3932 = vperm.xlu0 %3931, %v3090
  %v3933 = vpop.permute.xlu0 %3932
  %3936 = vset.pattern.permute.xlu0 1
  %3937 = vperm.xlu0 %3936, %v3091
  %v3938 = vpop.permute.xlu0 %3937
  %3941 = vset.pattern.permute.xlu0 1
  %3942 = vperm.xlu0 %3941, %v3092
  %v3943 = vpop.permute.xlu0 %3942
  %3946 = vset.pattern.permute.xlu0 1
  %3947 = vperm.xlu0 %3946, %v3093
  %v3948 = vpop.permute.xlu0 %3947
  %3951 = vset.pattern.permute.xlu0 1
  %3952 = vperm.xlu0 %3951, %v3094
  %v3953 = vpop.permute.xlu0 %3952
  %3956 = vset.pattern.permute.xlu0 1
  %3957 = vperm.xlu0 %3956, %v3095
  %v3958 = vpop.permute.xlu0 %3957
  %3961 = vset.pattern.permute.xlu0 1
  %3962 = vperm.xlu0 %3961, %v3096
  %v3963 = vpop.permute.xlu0 %3962
  %3966 = vset.pattern.permute.xlu0 1
  %3967 = vperm.xlu0 %3966, %v3097
  %v3968 = vpop.permute.xlu0 %3967
  %3971 = vset.pattern.permute.xlu0 1
  %3972 = vperm.xlu0 %3971, %v3098
  %v3973 = vpop.permute.xlu0 %3972
  %3976 = vset.pattern.permute.xlu0 1
  %3977 = vperm.xlu0 %3976, %v3099
  %v3978 = vpop.permute.xlu0 %3977
  %3981 = vset.pattern.permute.xlu0 1
  %3982 = vperm.xlu0 %3981, %v3100
  %v3983 = vpop.permute.xlu0 %3982
  %3986 = vset.pattern.permute.xlu0 1
  %3987 = vperm.xlu0 %3986, %v3101
  %v3988 = vpop.permute.xlu0 %3987
  %3991 = vset.pattern.permute.xlu0 1
  %3992 = vperm.xlu0 %3991, %v3102
  %v3993 = vpop.permute.xlu0 %3992
  %3996 = vset.pattern.permute.xlu0 1
  %3997 = vperm.xlu0 %3996, %v3103
  %v3998 = vpop.permute.xlu0 %3997
  %4001 = vset.pattern.permute.xlu0 1
  %4002 = vperm.xlu0 %4001, %v3104
  %v4003 = vpop.permute.xlu0 %4002
  %4006 = vset.pattern.permute.xlu0 1
  %4007 = vperm.xlu0 %4006, %v3105
  %v4008 = vpop.permute.xlu0 %4007
  %4011 = vset.pattern.permute.xlu0 1
  %4012 = vperm.xlu0 %4011, %v3106
  %v4013 = vpop.permute.xlu0 %4012
  %4016 = vset.pattern.permute.xlu0 1
  %4017 = vperm.xlu0 %4016, %v3107
  %v4018 = vpop.permute.xlu0 %4017
  %4021 = vset.pattern.permute.xlu0 1
  %4022 = vperm.xlu0 %4021, %v3108
  %v4023 = vpop.permute.xlu0 %4022
  %4026 = vset.pattern.permute.xlu0 1
  %4027 = vperm.xlu0 %4026, %v3109
  %v4028 = vpop.permute.xlu0 %4027
  %4031 = vset.pattern.permute.xlu0 1
  %4032 = vperm.xlu0 %4031, %v3110
  %v4033 = vpop.permute.xlu0 %4032
  %4036 = vset.pattern.permute.xlu0 1
  %4037 = vperm.xlu0 %4036, %v3111
  %v4038 = vpop.permute.xlu0 %4037
  %4041 = vset.pattern.permute.xlu0 1
  %4042 = vperm.xlu0 %4041, %v3112
  %v4043 = vpop.permute.xlu0 %4042
  %4046 = vset.pattern.permute.xlu0 1
  %4047 = vperm.xlu0 %4046, %v3113
  %v4048 = vpop.permute.xlu0 %4047
  %4051 = vset.pattern.permute.xlu0 1
  %4052 = vperm.xlu0 %4051, %v3114
  %v4053 = vpop.permute.xlu0 %4052
  %4056 = vset.pattern.permute.xlu0 1
  %4057 = vperm.xlu0 %4056, %v3115
  %v4058 = vpop.permute.xlu0 %4057
  %4061 = vset.pattern.permute.xlu0 1
  %4062 = vperm.xlu0 %4061, %v3116
  %v4063 = vpop.permute.xlu0 %4062
  %4066 = vset.pattern.permute.xlu0 1
  %4067 = vperm.xlu0 %4066, %v3117
  %v4068 = vpop.permute.xlu0 %4067
  %4071 = vset.pattern.permute.xlu0 1
  %4072 = vperm.xlu0 %4071, %v3118
  %v4073 = vpop.permute.xlu0 %4072
  %4076 = vset.pattern.permute.xlu0 1
  %4077 = vperm.xlu0 %4076, %v3119
  %v4078 = vpop.permute.xlu0 %4077
  %4081 = vset.pattern.permute.xlu0 1
  %4082 = vperm.xlu0 %4081, %v3120
  %v4083 = vpop.permute.xlu0 %4082
  %4086 = vset.pattern.permute.xlu0 1
  %4087 = vperm.xlu0 %4086, %v3121
  %v4088 = vpop.permute.xlu0 %4087
  %4091 = vset.pattern.permute.xlu0 1
  %4092 = vperm.xlu0 %4091, %v3122
  %v4093 = vpop.permute.xlu0 %4092
  %4096 = vset.pattern.permute.xlu0 1
  %4097 = vperm.xlu0 %4096, %v3123
  %v4098 = vpop.permute.xlu0 %4097
  %4101 = vset.pattern.permute.xlu0 1
  %4102 = vperm.xlu0 %4101, %v3124
  %v4103 = vpop.permute.xlu0 %4102
  %4106 = vset.pattern.permute.xlu0 1
  %4107 = vperm.xlu0 %4106, %v3125
  %v4108 = vpop.permute.xlu0 %4107
  %4111 = vset.pattern.permute.xlu0 1
  %4112 = vperm.xlu0 %4111, %v3126
  %v4113 = vpop.permute.xlu0 %4112
  %4116 = vset.pattern.permute.xlu0 1
  %4117 = vperm.xlu0 %4116, %v3127
  %v4118 = vpop.permute.xlu0 %4117
  %4121 = vset.pattern.permute.xlu0 1
  %4122 = vperm.xlu0 %4121, %v3128
  %v4123 = vpop.permute.xlu0 %4122
  %4126 = vset.pattern.permute.xlu0 1
  %4127 = vperm.xlu0 %4126, %v3129
  %v4128 = vpop.permute.xlu0 %4127
  %4131 = vset.pattern.permute.xlu0 1
  %4132 = vperm.xlu0 %4131, %v3130
  %v4133 = vpop.permute.xlu0 %4132
  %4136 = vset.pattern.permute.xlu0 1
  %4137 = vperm.xlu0 %4136, %v3131
  %v4138 = vpop.permute.xlu0 %4137
  %4141 = vset.pattern.permute.xlu0 1
  %4142 = vperm.xlu0 %4141, %v3132
  %v4143 = vpop.permute.xlu0 %4142
  %4146 = vset.pattern.permute.xlu0 1
  %4147 = vperm.xlu0 %4146, %v3133
  %v4148 = vpop.permute.xlu0 %4147
  %4151 = vset.pattern.permute.xlu0 1
  %4152 = vperm.xlu0 %4151, %v3134
  %v4153 = vpop.permute.xlu0 %4152
  %4156 = vset.pattern.permute.xlu0 1
  %4157 = vperm.xlu0 %4156, %v3135
  %v4158 = vpop.permute.xlu0 %4157
  %4161 = vset.pattern.permute.xlu0 1
  %4162 = vperm.xlu0 %4161, %v3136
  %v4163 = vpop.permute.xlu0 %4162
  %4166 = vset.pattern.permute.xlu0 1
  %4167 = vperm.xlu0 %4166, %v3137
  %v4168 = vpop.permute.xlu0 %4167
  %4171 = vset.pattern.permute.xlu0 1
  %4172 = vperm.xlu0 %4171, %v3138
  %v4173 = vpop.permute.xlu0 %4172
  %4176 = vset.pattern.permute.xlu0 1
  %4177 = vperm.xlu0 %4176, %v3139
  %v4178 = vpop.permute.xlu0 %4177
  %4181 = vset.pattern.permute.xlu0 1
  %4182 = vperm.xlu0 %4181, %v3140
  %v4183 = vpop.permute.xlu0 %4182
  %4186 = vset.pattern.permute.xlu0 1
  %4187 = vperm.xlu0 %4186, %v3141
  %v4188 = vpop.permute.xlu0 %4187
  %4191 = vset.pattern.permute.xlu0 1
  %4192 = vperm.xlu0 %4191, %v3142
  %v4193 = vpop.permute.xlu0 %4192
  %4196 = vset.pattern.permute.xlu0 1
  %4197 = vperm.xlu0 %4196, %v3143
  %v4198 = vpop.permute.xlu0 %4197
  %4201 = vset.pattern.permute.xlu0 1
  %4202 = vperm.xlu0 %4201, %v3144
  %v4203 = vpop.permute.xlu0 %4202
  %4206 = vset.pattern.permute.xlu0 1
  %4207 = vperm.xlu0 %4206, %v3145
  %v4208 = vpop.permute.xlu0 %4207
  %4211 = vset.pattern.permute.xlu0 1
  %4212 = vperm.xlu0 %4211, %v3146
  %v4213 = vpop.permute.xlu0 %4212
  %4216 = vset.pattern.permute.xlu0 1
  %4217 = vperm.xlu0 %4216, %v3147
  %v4218 = vpop.permute.xlu0 %4217
  %4221 = vset.pattern.permute.xlu0 1
  %4222 = vperm.xlu0 %4221, %v3148
  %v4223 = vpop.permute.xlu0 %4222
  %4226 = vset.pattern.permute.xlu0 1
  %4227 = vperm.xlu0 %4226, %v3149
  %v4228 = vpop.permute.xlu0 %4227
  %4231 = vset.pattern.permute.xlu0 1
  %4232 = vperm.xlu0 %4231, %v3150
  %v4233 = vpop.permute.xlu0 %4232
  %4236 = vset.pattern.permute.xlu0 1
  %4237 = vperm.xlu0 %4236, %v3151
  %v4238 = vpop.permute.xlu0 %4237
  %4241 = vset.pattern.permute.xlu0 1
  %4242 = vperm.xlu0 %4241, %v3152
  %v4243 = vpop.permute.xlu0 %4242
  %4246 = vset.pattern.permute.xlu0 1
  %4247 = vperm.xlu0 %4246, %v3153
  %v4248 = vpop.permute.xlu0 %4247
  %4251 = vset.pattern.permute.xlu0 1
  %4252 = vperm.xlu0 %4251, %v3154
  %v4253 = vpop.permute.xlu0 %4252
  %4256 = vset.pattern.permute.xlu0 1
  %4257 = vperm.xlu0 %4256, %v3155
  %v4258 = vpop.permute.xlu0 %4257
  %4261 = vset.pattern.permute.xlu0 1
  %4262 = vperm.xlu0 %4261, %v3156
  %v4263 = vpop.permute.xlu0 %4262
  %4266 = vset.pattern.permute.xlu0 1
  %4267 = vperm.xlu0 %4266, %v3157
  %v4268 = vpop.permute.xlu0 %4267
  %4271 = vset.pattern.permute.xlu0 1
  %4272 = vperm.xlu0 %4271, %v3158
  %v4273 = vpop.permute.xlu0 %4272
  %4276 = vset.pattern.permute.xlu0 1
  %4277 = vperm.xlu0 %4276, %v3159
  %v4278 = vpop.permute.xlu0 %4277
  %4281 = vset.pattern.permute.xlu0 1
  %4282 = vperm.xlu0 %4281, %v3160
  %v4283 = vpop.permute.xlu0 %4282
  %4286 = vset.pattern.permute.xlu0 1
  %4287 = vperm.xlu0 %4286, %v3161
  %v4288 = vpop.permute.xlu0 %4287
  %4291 = vset.pattern.permute.xlu0 1
  %4292 = vperm.xlu0 %4291, %v3162
  %v4293 = vpop.permute.xlu0 %4292
  %4296 = vset.pattern.permute.xlu0 1
  %4297 = vperm.xlu0 %4296, %v3163
  %v4298 = vpop.permute.xlu0 %4297
  %4301 = vset.pattern.permute.xlu0 1
  %4302 = vperm.xlu0 %4301, %v3164
  %v4303 = vpop.permute.xlu0 %4302
  %4306 = vset.pattern.permute.xlu0 1
  %4307 = vperm.xlu0 %4306, %v3165
  %v4308 = vpop.permute.xlu0 %4307
  %4311 = vset.pattern.permute.xlu0 1
  %4312 = vperm.xlu0 %4311, %v3166
  %v4313 = vpop.permute.xlu0 %4312
  %4316 = vset.pattern.permute.xlu0 1
  %4317 = vperm.xlu0 %4316, %v3167
  %v4318 = vpop.permute.xlu0 %4317
  %v4320 = vadd.f32 %v3648, %v3843
  %v4321 = vadd.f32 %v3649, %v3843
  %v4322 = vadd.f32 %v3650, %v3848
  %v4323 = vadd.f32 %v3651, %v3848
  %v4324 = vadd.f32 %v3652, %v3853
  %v4325 = vadd.f32 %v3653, %v3853
  %v4326 = vadd.f32 %v3654, %v3858
  %v4327 = vadd.f32 %v3655, %v3858
  %v4328 = vadd.f32 %v3656, %v3863
  %v4329 = vadd.f32 %v3657, %v3863
  %v4330 = vadd.f32 %v3658, %v3868
  %v4331 = vadd.f32 %v3659, %v3868
  %v4332 = vadd.f32 %v3660, %v3873
  %v4333 = vadd.f32 %v3661, %v3873
  %v4334 = vadd.f32 %v3662, %v3878
  %v4335 = vadd.f32 %v3663, %v3878
  %v4336 = vadd.f32 %v3664, %v3883
  %v4337 = vadd.f32 %v3665, %v3883
  %v4338 = vadd.f32 %v3666, %v3888
  %v4339 = vadd.f32 %v3667, %v3888
  %v4340 = vadd.f32 %v3668, %v3893
  %v4341 = vadd.f32 %v3669, %v3893
  %v4342 = vadd.f32 %v3670, %v3898
  %v4343 = vadd.f32 %v3671, %v3898
  %v4344 = vadd.f32 %v3672, %v3903
  %v4345 = vadd.f32 %v3673, %v3903
  %v4346 = vadd.f32 %v3674, %v3908
  %v4347 = vadd.f32 %v3675, %v3908
  %v4348 = vadd.f32 %v3676, %v3913
  %v4349 = vadd.f32 %v3677, %v3913
  %v4350 = vadd.f32 %v3678, %v3918
  %v4351 = vadd.f32 %v3679, %v3918
  %v4352 = vadd.f32 %v3680, %v3923
  %v4353 = vadd.f32 %v3681, %v3923
  %v4354 = vadd.f32 %v3682, %v3928
  %v4355 = vadd.f32 %v3683, %v3928
  %v4356 = vadd.f32 %v3684, %v3933
  %v4357 = vadd.f32 %v3685, %v3933
  %v4358 = vadd.f32 %v3686, %v3938
  %v4359 = vadd.f32 %v3687, %v3938
  %v4360 = vadd.f32 %v3688, %v3943
  %v4361 = vadd.f32 %v3689, %v3943
  %v4362 = vadd.f32 %v3690, %v3948
  %v4363 = vadd.f32 %v3691, %v3948
  %v4364 = vadd.f32 %v3692, %v3953
  %v4365 = vadd.f32 %v3693, %v3953
  %v4366 = vadd.f32 %v3694, %v3958
  %v4367 = vadd.f32 %v3695, %v3958
  %v4368 = vadd.f32 %v3696, %v3963
  %v4369 = vadd.f32 %v3697, %v3963
  %v4370 = vadd.f32 %v3698, %v3968
  %v4371 = vadd.f32 %v3699, %v3968
  %v4372 = vadd.f32 %v3700, %v3973
  %v4373 = vadd.f32 %v3701, %v3973
  %v4374 = vadd.f32 %v3702, %v3978
  %v4375 = vadd.f32 %v3703, %v3978
  %v4376 = vadd.f32 %v3704, %v3983
  %v4377 = vadd.f32 %v3705, %v3983
  %v4378 = vadd.f32 %v3706, %v3988
  %v4379 = vadd.f32 %v3707, %v3988
  %v4380 = vadd.f32 %v3708, %v3993
  %v4381 = vadd.f32 %v3709, %v3993
  %v4382 = vadd.f32 %v3710, %v3998
  %v4383 = vadd.f32 %v3711, %v3998
  %v4384 = vadd.f32 %v3712, %v4003
  %v4385 = vadd.f32 %v3713, %v4003
  %v4386 = vadd.f32 %v3714, %v4008
  %v4387 = vadd.f32 %v3715, %v4008
  %v4388 = vadd.f32 %v3716, %v4013
  %v4389 = vadd.f32 %v3717, %v4013
  %v4390 = vadd.f32 %v3718, %v4018
  %v4391 = vadd.f32 %v3719, %v4018
  %v4392 = vadd.f32 %v3720, %v4023
  %v4393 = vadd.f32 %v3721, %v4023
  %v4394 = vadd.f32 %v3722, %v4028
  %v4395 = vadd.f32 %v3723, %v4028
  %v4396 = vadd.f32 %v3724, %v4033
  %v4397 = vadd.f32 %v3725, %v4033
  %v4398 = vadd.f32 %v3726, %v4038
  %v4399 = vadd.f32 %v3727, %v4038
  %v4400 = vadd.f32 %v3728, %v4043
  %v4401 = vadd.f32 %v3729, %v4043
  %v4402 = vadd.f32 %v3730, %v4048
  %v4403 = vadd.f32 %v3731, %v4048
  %v4404 = vadd.f32 %v3732, %v4053
  %v4405 = vadd.f32 %v3733, %v4053
  %v4406 = vadd.f32 %v3734, %v4058
  %v4407 = vadd.f32 %v3735, %v4058
  %v4408 = vadd.f32 %v3736, %v4063
  %v4409 = vadd.f32 %v3737, %v4063
  %v4410 = vadd.f32 %v3738, %v4068
  %v4411 = vadd.f32 %v3739, %v4068
  %v4412 = vadd.f32 %v3740, %v4073
  %v4413 = vadd.f32 %v3741, %v4073
  %v4414 = vadd.f32 %v3742, %v4078
  %v4415 = vadd.f32 %v3743, %v4078
  %v4416 = vadd.f32 %v3744, %v4083
  %v4417 = vadd.f32 %v3745, %v4083
  %v4418 = vadd.f32 %v3746, %v4088
  %v4419 = vadd.f32 %v3747, %v4088
  %v4420 = vadd.f32 %v3748, %v4093
  %v4421 = vadd.f32 %v3749, %v4093
  %v4422 = vadd.f32 %v3750, %v4098
  %v4423 = vadd.f32 %v3751, %v4098
  %v4424 = vadd.f32 %v3752, %v4103
  %v4425 = vadd.f32 %v3753, %v4103
  %v4426 = vadd.f32 %v3754, %v4108
  %v4427 = vadd.f32 %v3755, %v4108
  %v4428 = vadd.f32 %v3756, %v4113
  %v4429 = vadd.f32 %v3757, %v4113
  %v4430 = vadd.f32 %v3758, %v4118
  %v4431 = vadd.f32 %v3759, %v4118
  %v4432 = vadd.f32 %v3760, %v4123
  %v4433 = vadd.f32 %v3761, %v4123
  %v4434 = vadd.f32 %v3762, %v4128
  %v4435 = vadd.f32 %v3763, %v4128
  %v4436 = vadd.f32 %v3764, %v4133
  %v4437 = vadd.f32 %v3765, %v4133
  %v4438 = vadd.f32 %v3766, %v4138
  %v4439 = vadd.f32 %v3767, %v4138
  %v4440 = vadd.f32 %v3768, %v4143
  %v4441 = vadd.f32 %v3769, %v4143
  %v4442 = vadd.f32 %v3770, %v4148
  %v4443 = vadd.f32 %v3771, %v4148
  %v4444 = vadd.f32 %v3772, %v4153
  %v4445 = vadd.f32 %v3773, %v4153
  %v4446 = vadd.f32 %v3774, %v4158
  %v4447 = vadd.f32 %v3775, %v4158
  %v4448 = vadd.f32 %v3776, %v4163
  %v4449 = vadd.f32 %v3777, %v4163
  %v4450 = vadd.f32 %v3778, %v4168
  %v4451 = vadd.f32 %v3779, %v4168
  %v4452 = vadd.f32 %v3780, %v4173
  %v4453 = vadd.f32 %v3781, %v4173
  %v4454 = vadd.f32 %v3782, %v4178
  %v4455 = vadd.f32 %v3783, %v4178
  %v4456 = vadd.f32 %v3784, %v4183
  %v4457 = vadd.f32 %v3785, %v4183
  %v4458 = vadd.f32 %v3786, %v4188
  %v4459 = vadd.f32 %v3787, %v4188
  %v4460 = vadd.f32 %v3788, %v4193
  %v4461 = vadd.f32 %v3789, %v4193
  %v4462 = vadd.f32 %v3790, %v4198
  %v4463 = vadd.f32 %v3791, %v4198
  %v4464 = vadd.f32 %v3792, %v4203
  %v4465 = vadd.f32 %v3793, %v4203
  %v4466 = vadd.f32 %v3794, %v4208
  %v4467 = vadd.f32 %v3795, %v4208
  %v4468 = vadd.f32 %v3796, %v4213
  %v4469 = vadd.f32 %v3797, %v4213
  %v4470 = vadd.f32 %v3798, %v4218
  %v4471 = vadd.f32 %v3799, %v4218
  %v4472 = vadd.f32 %v3800, %v4223
  %v4473 = vadd.f32 %v3801, %v4223
  %v4474 = vadd.f32 %v3802, %v4228
  %v4475 = vadd.f32 %v3803, %v4228
  %v4476 = vadd.f32 %v3804, %v4233
  %v4477 = vadd.f32 %v3805, %v4233
  %v4478 = vadd.f32 %v3806, %v4238
  %v4479 = vadd.f32 %v3807, %v4238
  %v4480 = vadd.f32 %v3808, %v4243
  %v4481 = vadd.f32 %v3809, %v4243
  %v4482 = vadd.f32 %v3810, %v4248
  %v4483 = vadd.f32 %v3811, %v4248
  %v4484 = vadd.f32 %v3812, %v4253
  %v4485 = vadd.f32 %v3813, %v4253
  %v4486 = vadd.f32 %v3814, %v4258
  %v4487 = vadd.f32 %v3815, %v4258
  %v4488 = vadd.f32 %v3816, %v4263
  %v4489 = vadd.f32 %v3817, %v4263
  %v4490 = vadd.f32 %v3818, %v4268
  %v4491 = vadd.f32 %v3819, %v4268
  %v4492 = vadd.f32 %v3820, %v4273
  %v4493 = vadd.f32 %v3821, %v4273
  %v4494 = vadd.f32 %v3822, %v4278
  %v4495 = vadd.f32 %v3823, %v4278
  %v4496 = vadd.f32 %v3824, %v4283
  %v4497 = vadd.f32 %v3825, %v4283
  %v4498 = vadd.f32 %v3826, %v4288
  %v4499 = vadd.f32 %v3827, %v4288
  %v4500 = vadd.f32 %v3828, %v4293
  %v4501 = vadd.f32 %v3829, %v4293
  %v4502 = vadd.f32 %v3830, %v4298
  %v4503 = vadd.f32 %v3831, %v4298
  %v4504 = vadd.f32 %v3832, %v4303
  %v4505 = vadd.f32 %v3833, %v4303
  %v4506 = vadd.f32 %v3834, %v4308
  %v4507 = vadd.f32 %v3835, %v4308
  %v4508 = vadd.f32 %v3836, %v4313
  %v4509 = vadd.f32 %v3837, %v4313
  %v4510 = vadd.f32 %v3838, %v4318
  %v4511 = vadd.f32 %v3839, %v4318
  %4512 = vst [vmem:[%s3] sm:$0xff] %v4320
  %4513 = vst [vmem:[%s3 + $0x8] sm:$0xff] %v4321
  %4514 = vst [vmem:[%s3 + $0x10] sm:$0xff] %v4322
  %4515 = vst [vmem:[%s3 + $0x18] sm:$0xff] %v4323
  %4516 = vst [vmem:[%s3 + $0x20] sm:$0xff] %v4324
  %4517 = vst [vmem:[%s3 + $0x28] sm:$0xff] %v4325
  %4518 = vst [vmem:[%s3 + $0x30] sm:$0xff] %v4326
  %4519 = vst [vmem:[%s3 + $0x38] sm:$0xff] %v4327
  %4520 = vst [vmem:[%s3 + $0x40] sm:$0xff] %v4328
  %4521 = vst [vmem:[%s3 + $0x48] sm:$0xff] %v4329
  %4522 = vst [vmem:[%s3 + $0x50] sm:$0xff] %v4330
  %4523 = vst [vmem:[%s3 + $0x58] sm:$0xff] %v4331
  %4524 = vst [vmem:[%s3 + $0x60] sm:$0xff] %v4332
  %4525 = vst [vmem:[%s3 + $0x68] sm:$0xff] %v4333
  %4526 = vst [vmem:[%s3 + $0x70] sm:$0xff] %v4334
  %4527 = vst [vmem:[%s3 + $0x78] sm:$0xff] %v4335
  %4528 = vst [vmem:[%s3 + $0x80] sm:$0xff] %v4336
  %4529 = vst [vmem:[%s3 + $0x88] sm:$0xff] %v4337
  %4530 = vst [vmem:[%s3 + $0x90] sm:$0xff] %v4338
  %4531 = vst [vmem:[%s3 + $0x98] sm:$0xff] %v4339
  %4532 = vst [vmem:[%s3 + $0xa0] sm:$0xff] %v4340
  %4533 = vst [vmem:[%s3 + $0xa8] sm:$0xff] %v4341
  %4534 = vst [vmem:[%s3 + $0xb0] sm:$0xff] %v4342
  %4535 = vst [vmem:[%s3 + $0xb8] sm:$0xff] %v4343
  %4536 = vst [vmem:[%s3 + $0xc0] sm:$0xff] %v4344
  %4537 = vst [vmem:[%s3 + $0xc8] sm:$0xff] %v4345
  %4538 = vst [vmem:[%s3 + $0xd0] sm:$0xff] %v4346
  %4539 = vst [vmem:[%s3 + $0xd8] sm:$0xff] %v4347
  %4540 = vst [vmem:[%s3 + $0xe0] sm:$0xff] %v4348
  %4541 = vst [vmem:[%s3 + $0xe8] sm:$0xff] %v4349
  %4542 = vst [vmem:[%s3 + $0xf0] sm:$0xff] %v4350
  %4543 = vst [vmem:[%s3 + $0xf8] sm:$0xff] %v4351
  %4544 = vst [vmem:[%s3 + $0x100] sm:$0xff] %v4352
  %4545 = vst [vmem:[%s3 + $0x108] sm:$0xff] %v4353
  %4546 = vst [vmem:[%s3 + $0x110] sm:$0xff] %v4354
  %4547 = vst [vmem:[%s3 + $0x118] sm:$0xff] %v4355
  %4548 = vst [vmem:[%s3 + $0x120] sm:$0xff] %v4356
  %4549 = vst [vmem:[%s3 + $0x128] sm:$0xff] %v4357
  %4550 = vst [vmem:[%s3 + $0x130] sm:$0xff] %v4358
  %4551 = vst [vmem:[%s3 + $0x138] sm:$0xff] %v4359
  %4552 = vst [vmem:[%s3 + $0x140] sm:$0xff] %v4360
  %4553 = vst [vmem:[%s3 + $0x148] sm:$0xff] %v4361
  %4554 = vst [vmem:[%s3 + $0x150] sm:$0xff] %v4362
  %4555 = vst [vmem:[%s3 + $0x158] sm:$0xff] %v4363
  %4556 = vst [vmem:[%s3 + $0x160] sm:$0xff] %v4364
  %4557 = vst [vmem:[%s3 + $0x168] sm:$0xff] %v4365
  %4558 = vst [vmem:[%s3 + $0x170] sm:$0xff] %v4366
  %4559 = vst [vmem:[%s3 + $0x178] sm:$0xff] %v4367
  %4560 = vst [vmem:[%s3 + $0x180] sm:$0xff] %v4368
  %4561 = vst [vmem:[%s3 + $0x188] sm:$0xff] %v4369
  %4562 = vst [vmem:[%s3 + $0x190] sm:$0xff] %v4370
  %4563 = vst [vmem:[%s3 + $0x198] sm:$0xff] %v4371
  %4564 = vst [vmem:[%s3 + $0x1a0] sm:$0xff] %v4372
  %4565 = vst [vmem:[%s3 + $0x1a8] sm:$0xff] %v4373
  %4566 = vst [vmem:[%s3 + $0x1b0] sm:$0xff] %v4374
  %4567 = vst [vmem:[%s3 + $0x1b8] sm:$0xff] %v4375
  %4568 = vst [vmem:[%s3 + $0x1c0] sm:$0xff] %v4376
  %4569 = vst [vmem:[%s3 + $0x1c8] sm:$0xff] %v4377
  %4570 = vst [vmem:[%s3 + $0x1d0] sm:$0xff] %v4378
  %4571 = vst [vmem:[%s3 + $0x1d8] sm:$0xff] %v4379
  %4572 = vst [vmem:[%s3 + $0x1e0] sm:$0xff] %v4380
  %4573 = vst [vmem:[%s3 + $0x1e8] sm:$0xff] %v4381
  %4574 = vst [vmem:[%s3 + $0x1f0] sm:$0xff] %v4382
  %4575 = vst [vmem:[%s3 + $0x1f8] sm:$0xff] %v4383
  %4576 = vst [vmem:[%s3 + $0x200] sm:$0xff] %v4384
  %4577 = vst [vmem:[%s3 + $0x208] sm:$0xff] %v4385
  %4578 = vst [vmem:[%s3 + $0x210] sm:$0xff] %v4386
  %4579 = vst [vmem:[%s3 + $0x218] sm:$0xff] %v4387
  %4580 = vst [vmem:[%s3 + $0x220] sm:$0xff] %v4388
  %4581 = vst [vmem:[%s3 + $0x228] sm:$0xff] %v4389
  %4582 = vst [vmem:[%s3 + $0x230] sm:$0xff] %v4390
  %4583 = vst [vmem:[%s3 + $0x238] sm:$0xff] %v4391
  %4584 = vst [vmem:[%s3 + $0x240] sm:$0xff] %v4392
  %4585 = vst [vmem:[%s3 + $0x248] sm:$0xff] %v4393
  %4586 = vst [vmem:[%s3 + $0x250] sm:$0xff] %v4394
  %4587 = vst [vmem:[%s3 + $0x258] sm:$0xff] %v4395
  %4588 = vst [vmem:[%s3 + $0x260] sm:$0xff] %v4396
  %4589 = vst [vmem:[%s3 + $0x268] sm:$0xff] %v4397
  %4590 = vst [vmem:[%s3 + $0x270] sm:$0xff] %v4398
  %4591 = vst [vmem:[%s3 + $0x278] sm:$0xff] %v4399
  %4592 = vst [vmem:[%s3 + $0x280] sm:$0xff] %v4400
  %4593 = vst [vmem:[%s3 + $0x288] sm:$0xff] %v4401
  %4594 = vst [vmem:[%s3 + $0x290] sm:$0xff] %v4402
  %4595 = vst [vmem:[%s3 + $0x298] sm:$0xff] %v4403
  %4596 = vst [vmem:[%s3 + $0x2a0] sm:$0xff] %v4404
  %4597 = vst [vmem:[%s3 + $0x2a8] sm:$0xff] %v4405
  %4598 = vst [vmem:[%s3 + $0x2b0] sm:$0xff] %v4406
  %4599 = vst [vmem:[%s3 + $0x2b8] sm:$0xff] %v4407
  %4600 = vst [vmem:[%s3 + $0x2c0] sm:$0xff] %v4408
  %4601 = vst [vmem:[%s3 + $0x2c8] sm:$0xff] %v4409
  %4602 = vst [vmem:[%s3 + $0x2d0] sm:$0xff] %v4410
  %4603 = vst [vmem:[%s3 + $0x2d8] sm:$0xff] %v4411
  %4604 = vst [vmem:[%s3 + $0x2e0] sm:$0xff] %v4412
  %4605 = vst [vmem:[%s3 + $0x2e8] sm:$0xff] %v4413
  %4606 = vst [vmem:[%s3 + $0x2f0] sm:$0xff] %v4414
  %4607 = vst [vmem:[%s3 + $0x2f8] sm:$0xff] %v4415
  %4608 = vst [vmem:[%s3 + $0x300] sm:$0xff] %v4416
  %4609 = vst [vmem:[%s3 + $0x308] sm:$0xff] %v4417
  %4610 = vst [vmem:[%s3 + $0x310] sm:$0xff] %v4418
  %4611 = vst [vmem:[%s3 + $0x318] sm:$0xff] %v4419
  %4612 = vst [vmem:[%s3 + $0x320] sm:$0xff] %v4420
  %4613 = vst [vmem:[%s3 + $0x328] sm:$0xff] %v4421
  %4614 = vst [vmem:[%s3 + $0x330] sm:$0xff] %v4422
  %4615 = vst [vmem:[%s3 + $0x338] sm:$0xff] %v4423
  %4616 = vst [vmem:[%s3 + $0x340] sm:$0xff] %v4424
  %4617 = vst [vmem:[%s3 + $0x348] sm:$0xff] %v4425
  %4618 = vst [vmem:[%s3 + $0x350] sm:$0xff] %v4426
  %4619 = vst [vmem:[%s3 + $0x358] sm:$0xff] %v4427
  %4620 = vst [vmem:[%s3 + $0x360] sm:$0xff] %v4428
  %4621 = vst [vmem:[%s3 + $0x368] sm:$0xff] %v4429
  %4622 = vst [vmem:[%s3 + $0x370] sm:$0xff] %v4430
  %4623 = vst [vmem:[%s3 + $0x378] sm:$0xff] %v4431
  %4624 = vst [vmem:[%s3 + $0x380] sm:$0xff] %v4432
  %4625 = vst [vmem:[%s3 + $0x388] sm:$0xff] %v4433
  %4626 = vst [vmem:[%s3 + $0x390] sm:$0xff] %v4434
  %4627 = vst [vmem:[%s3 + $0x398] sm:$0xff] %v4435
  %4628 = vst [vmem:[%s3 + $0x3a0] sm:$0xff] %v4436
  %4629 = vst [vmem:[%s3 + $0x3a8] sm:$0xff] %v4437
  %4630 = vst [vmem:[%s3 + $0x3b0] sm:$0xff] %v4438
  %4631 = vst [vmem:[%s3 + $0x3b8] sm:$0xff] %v4439
  %4632 = vst [vmem:[%s3 + $0x3c0] sm:$0xff] %v4440
  %4633 = vst [vmem:[%s3 + $0x3c8] sm:$0xff] %v4441
  %4634 = vst [vmem:[%s3 + $0x3d0] sm:$0xff] %v4442
  %4635 = vst [vmem:[%s3 + $0x3d8] sm:$0xff] %v4443
  %4636 = vst [vmem:[%s3 + $0x3e0] sm:$0xff] %v4444
  %4637 = vst [vmem:[%s3 + $0x3e8] sm:$0xff] %v4445
  %4638 = vst [vmem:[%s3 + $0x3f0] sm:$0xff] %v4446
  %4639 = vst [vmem:[%s3 + $0x3f8] sm:$0xff] %v4447
  %4640 = vst [vmem:[%s3 + $0x400] sm:$0xff] %v4448
  %4641 = vst [vmem:[%s3 + $0x408] sm:$0xff] %v4449
  %4642 = vst [vmem:[%s3 + $0x410] sm:$0xff] %v4450
  %4643 = vst [vmem:[%s3 + $0x418] sm:$0xff] %v4451
  %4644 = vst [vmem:[%s3 + $0x420] sm:$0xff] %v4452
  %4645 = vst [vmem:[%s3 + $0x428] sm:$0xff] %v4453
  %4646 = vst [vmem:[%s3 + $0x430] sm:$0xff] %v4454
  %4647 = vst [vmem:[%s3 + $0x438] sm:$0xff] %v4455
  %4648 = vst [vmem:[%s3 + $0x440] sm:$0xff] %v4456
  %4649 = vst [vmem:[%s3 + $0x448] sm:$0xff] %v4457
  %4650 = vst [vmem:[%s3 + $0x450] sm:$0xff] %v4458
  %4651 = vst [vmem:[%s3 + $0x458] sm:$0xff] %v4459
  %4652 = vst [vmem:[%s3 + $0x460] sm:$0xff] %v4460
  %4653 = vst [vmem:[%s3 + $0x468] sm:$0xff] %v4461
  %4654 = vst [vmem:[%s3 + $0x470] sm:$0xff] %v4462
  %4655 = vst [vmem:[%s3 + $0x478] sm:$0xff] %v4463
  %4656 = vst [vmem:[%s3 + $0x480] sm:$0xff] %v4464
  %4657 = vst [vmem:[%s3 + $0x488] sm:$0xff] %v4465
  %4658 = vst [vmem:[%s3 + $0x490] sm:$0xff] %v4466
  %4659 = vst [vmem:[%s3 + $0x498] sm:$0xff] %v4467
  %4660 = vst [vmem:[%s3 + $0x4a0] sm:$0xff] %v4468
  %4661 = vst [vmem:[%s3 + $0x4a8] sm:$0xff] %v4469
  %4662 = vst [vmem:[%s3 + $0x4b0] sm:$0xff] %v4470
  %4663 = vst [vmem:[%s3 + $0x4b8] sm:$0xff] %v4471
  %4664 = vst [vmem:[%s3 + $0x4c0] sm:$0xff] %v4472
  %4665 = vst [vmem:[%s3 + $0x4c8] sm:$0xff] %v4473
  %4666 = vst [vmem:[%s3 + $0x4d0] sm:$0xff] %v4474
  %4667 = vst [vmem:[%s3 + $0x4d8] sm:$0xff] %v4475
  %4668 = vst [vmem:[%s3 + $0x4e0] sm:$0xff] %v4476
  %4669 = vst [vmem:[%s3 + $0x4e8] sm:$0xff] %v4477
  %4670 = vst [vmem:[%s3 + $0x4f0] sm:$0xff] %v4478
  %4671 = vst [vmem:[%s3 + $0x4f8] sm:$0xff] %v4479
  %4672 = vst [vmem:[%s3 + $0x500] sm:$0xff] %v4480
  %4673 = vst [vmem:[%s3 + $0x508] sm:$0xff] %v4481
  %4674 = vst [vmem:[%s3 + $0x510] sm:$0xff] %v4482
  %4675 = vst [vmem:[%s3 + $0x518] sm:$0xff] %v4483
  %4676 = vst [vmem:[%s3 + $0x520] sm:$0xff] %v4484
  %4677 = vst [vmem:[%s3 + $0x528] sm:$0xff] %v4485
  %4678 = vst [vmem:[%s3 + $0x530] sm:$0xff] %v4486
  %4679 = vst [vmem:[%s3 + $0x538] sm:$0xff] %v4487
  %4680 = vst [vmem:[%s3 + $0x540] sm:$0xff] %v4488
  %4681 = vst [vmem:[%s3 + $0x548] sm:$0xff] %v4489
  %4682 = vst [vmem:[%s3 + $0x550] sm:$0xff] %v4490
  %4683 = vst [vmem:[%s3 + $0x558] sm:$0xff] %v4491
  %4684 = vst [vmem:[%s3 + $0x560] sm:$0xff] %v4492
  %4685 = vst [vmem:[%s3 + $0x568] sm:$0xff] %v4493
  %4686 = vst [vmem:[%s3 + $0x570] sm:$0xff] %v4494
  %4687 = vst [vmem:[%s3 + $0x578] sm:$0xff] %v4495
  %4688 = vst [vmem:[%s3 + $0x580] sm:$0xff] %v4496
  %4689 = vst [vmem:[%s3 + $0x588] sm:$0xff] %v4497
  %4690 = vst [vmem:[%s3 + $0x590] sm:$0xff] %v4498
  %4691 = vst [vmem:[%s3 + $0x598] sm:$0xff] %v4499
  %4692 = vst [vmem:[%s3 + $0x5a0] sm:$0xff] %v4500
  %4693 = vst [vmem:[%s3 + $0x5a8] sm:$0xff] %v4501
  %4694 = vst [vmem:[%s3 + $0x5b0] sm:$0xff] %v4502
  %4695 = vst [vmem:[%s3 + $0x5b8] sm:$0xff] %v4503
  %4696 = vst [vmem:[%s3 + $0x5c0] sm:$0xff] %v4504
  %4697 = vst [vmem:[%s3 + $0x5c8] sm:$0xff] %v4505
  %4698 = vst [vmem:[%s3 + $0x5d0] sm:$0xff] %v4506
  %4699 = vst [vmem:[%s3 + $0x5d8] sm:$0xff] %v4507
  %4700 = vst [vmem:[%s3 + $0x5e0] sm:$0xff] %v4508
  %4701 = vst [vmem:[%s3 + $0x5e8] sm:$0xff] %v4509
  %4702 = vst [vmem:[%s3 + $0x5f0] sm:$0xff] %v4510
  %4703 = vst [vmem:[%s3 + $0x5f8] sm:$0xff] %v4511
  // Predicated region
  $region14: #{conv2d_1x1_batchnorm.1} parent=0 // pred_check
    _
  $region15: #{conv2d_1x1_batchnorm.1} parent=0 // pred_check_branch
    %4705 = sbr.rel (0) target = $region17
  $region16: #{conv2d_1x1_batchnorm.1} parent=0 // pred_region
    _
  $region17: #{conv2d_1x1_batchnorm.1} parent=0 // pred_fallthru
    _
  // Predicated region
  $region18: #{conv2d_1x1_batchnorm.1} parent=0 // pred_check
    _
  $region19: #{conv2d_1x1_batchnorm.1} parent=0 // pred_check_branch
    %4707 = sbr.rel (0) target = $region21
  $region20: #{conv2d_1x1_batchnorm.1} parent=0 // pred_region
    _
  $region21: #{conv2d_1x1_batchnorm.1} parent=0 // pred_fallthru
    _

</llo_original>
